<compile_context>
chip_gen: v5e
topology: v5e:2x2
jax: 0.10.0
libtpu: 0.0.40
codegen_flags: <defaults>
</compile_context>

<pallas_src>
import functools

import jax
import jax.numpy as jnp
import numpy as np
from jax import lax
from jax.experimental import pallas as pl
from jax.experimental.pallas import tpu as pltpu

LANES = 128
_EPS = 1e-5
_VMEM_LIMIT = 32 * 1024 * 1024  # conservative across v5e/v6e/v7x; tiles below stay far under it


def _round_up(x, m):
    return (x + m - 1) // m * m


def _row_tile(h):
    # 8-row tiles (sublane multiple); realistic H is a multiple of 8, otherwise full image.
    return 8 if h % 8 == 0 else h


# ---------------------------------------------------------------------------
# Kernel 1: fused [previous-layer BN affine + ReLU] -> zero-halo pad (VMEM scratch)
#           -> 3x3 conv as ONE big-K MXU matmul (+ bias) -> per-tile BN partial stats.
# ---------------------------------------------------------------------------
def conv3x3_fused_kernel(x_main_ref, x_top_ref, x_bot_ref, scale_ref, shift_ref,
                         w_ref, b_ref, y_ref, sum_ref, ssq_ref, xp_scratch,
                         *, apply_input_bn_relu):
    r = pl.program_id(1)
    n_rows = pl.num_programs(1)
    th, w_sp, cpin = x_main_ref.shape[1], x_main_ref.shape[2], x_main_ref.shape[3]
    tc = y_ref.shape[3]

    def activate(x):
        # BN affine + ReLU of the *previous* layer, applied on the tile in VMEM (bf16 out).
        if apply_input_bn_relu:
            xf = x.astype(jnp.float32) * scale_ref[...] + shift_ref[...]
            return jnp.maximum(xf, 0.0).astype(jnp.bfloat16)
        return x

    # Zero-filled halo tile (== Conv2d zero padding); interior = activated input rows.
    xp_scratch[...] = jnp.zeros(xp_scratch.shape, xp_scratch.dtype)
    xp_scratch[1:th + 1, 1:w_sp + 1, :] = activate(x_main_ref[...])[0]

    @pl.when(r > 0)
    def _():  # halo row above this row-tile (stays zero at the image border)
        xp_scratch[0:1, 1:w_sp + 1, :] = activate(x_top_ref[...])[0]

    @pl.when(r < n_rows - 1)
    def _():  # halo row below this row-tile
        xp_scratch[th + 1:th + 2, 1:w_sp + 1, :] = activate(x_bot_ref[...])[0]

    # im2col: concatenate the 9 shifted windows channel-wise -> single K=9*Cin matmul.
    slabs = [xp_scratch[dy:dy + th, dx:dx + w_sp, :]
             for dy in range(3) for dx in range(3)]
    patch = jnp.concatenate(slabs, axis=-1).reshape(th * w_sp, 9 * cpin)
    acc = jnp.dot(patch, w_ref[...], preferred_element_type=jnp.float32)   # (th*w, tc) f32
    acc = acc + b_ref[...]

    y_ref[...] = acc.reshape(1, th, w_sp, tc).astype(y_ref.dtype)
    # Partial stats for this (batch, row-tile): reduced outside -> grid stays fully parallel.
    sum_ref[...] = jnp.sum(acc, axis=0, keepdims=True).reshape(1, 1, tc)
    ssq_ref[...] = jnp.sum(acc * acc, axis=0, keepdims=True).reshape(1, 1, tc)


# ---------------------------------------------------------------------------
# Kernel 2: BN affine + ReLU for the final layer only (lane-dense, output aliased in-place).
# ---------------------------------------------------------------------------
def bn_relu_kernel(y_ref, scale_ref, shift_ref, o_ref):
    yf = y_ref[...].astype(jnp.float32)
    o_ref[...] = jnp.maximum(yf * scale_ref[...] + shift_ref[...], 0.0).astype(o_ref.dtype)


# ---------------------------------------------------------------------------
# Wrappers
# ---------------------------------------------------------------------------
def _conv_layer(x, scale_in, shift_in, w_flat, b_row, *, apply_input_bn_relu):
    """x: (N,H,W,Cpin) bf16; w_flat: (9*Cpin, Cpout) bf16 -> (y bf16, psum f32, pssq f32)."""
    n, h, w_sp, cpin = x.shape
    cpout = w_flat.shape[1]
    th = _row_tile(h)
    n_rows = h // th
    tc = 256 if cpout % 256 == 0 else 128
    n_cout = cpout // tc

    kernel = functools.partial(conv3x3_fused_kernel,
                               apply_input_bn_relu=apply_input_bn_relu)

    grid_spec = pltpu.PrefetchScalarGridSpec(
        num_scalar_prefetch=0,
        grid=(n, n_rows, n_cout),          # cout innermost: x blocks stay VMEM-resident
        in_specs=[
            # main row tile + 1-row halos above/below (clamped; zeroed in-kernel at borders)
            pl.BlockSpec((1, th, w_sp, cpin), lambda b, r, c: (b, r, 0, 0)),
            pl.BlockSpec((1, 1, w_sp, cpin),
                         lambda b, r, c: (b, jnp.maximum(r * th - 1, 0), 0, 0)),
            pl.BlockSpec((1, 1, w_sp, cpin),
                         lambda b, r, c: (b, jnp.minimum(r * th + th, h - 1), 0, 0)),
            pl.BlockSpec((1, cpin), lambda b, r, c: (0, 0)),        # input BN scale
            pl.BlockSpec((1, cpin), lambda b, r, c: (0, 0)),        # input BN shift
            pl.BlockSpec((9 * cpin, tc), lambda b, r, c: (0, c)),   # weights (cout tile)
            pl.BlockSpec((1, tc), lambda b, r, c: (0, c)),          # bias   (cout tile)
        ],
        out_specs=[
            pl.BlockSpec((1, th, w_sp, tc), lambda b, r, c: (b, r, 0, c)),
            pl.BlockSpec((1, 1, tc), lambda b, r, c: (b * n_rows + r, 0, c)),
            pl.BlockSpec((1, 1, tc), lambda b, r, c: (b * n_rows + r, 0, c)),
        ],
        scratch_shapes=[pltpu.VMEM((th + 2, w_sp + 2, cpin), jnp.bfloat16)],
    )
    return pl.pallas_call(
        kernel,
        out_shape=(
            jax.ShapeDtypeStruct((n, h, w_sp, cpout), jnp.bfloat16),
            jax.ShapeDtypeStruct((n * n_rows, 1, cpout), jnp.float32),
            jax.ShapeDtypeStruct((n * n_rows, 1, cpout), jnp.float32),
        ),
        grid_spec=grid_spec,
        compiler_params=pltpu.CompilerParams(
            dimension_semantics=("parallel", "parallel", "parallel"),
            vmem_limit_bytes=_VMEM_LIMIT),
    )(x, x, x, scale_in, shift_in, w_flat, b_row)


def _bn_relu(y, scale_row, shift_row):
    n, h, w_sp, cp = y.shape
    th = _row_tile(h)
    n_rows = h // th
    grid_spec = pltpu.PrefetchScalarGridSpec(
        num_scalar_prefetch=0,
        grid=(n, n_rows),
        in_specs=[
            pl.BlockSpec((1, th, w_sp, cp), lambda b, r: (b, r, 0, 0)),
            pl.BlockSpec((1, cp), lambda b, r: (0, 0)),
            pl.BlockSpec((1, cp), lambda b, r: (0, 0)),
        ],
        out_specs=pl.BlockSpec((1, th, w_sp, cp), lambda b, r: (b, r, 0, 0)),
    )
    return pl.pallas_call(
        bn_relu_kernel,
        out_shape=jax.ShapeDtypeStruct((n, h, w_sp, cp), jnp.bfloat16),
        grid_spec=grid_spec,
        input_output_aliases={0: 0},          # in-place: reuse y's HBM buffer
        compiler_params=pltpu.CompilerParams(
            dimension_semantics=("parallel", "parallel"),
            vmem_limit_bytes=_VMEM_LIMIT),
    )(y, scale_row, shift_row)


def _bn_scale_shift(psum, pssq, gamma_p, beta_p, count, eps):
    s = jnp.sum(psum, axis=0)[0]          # (Cp,)
    ss = jnp.sum(pssq, axis=0)[0]
    mean = s / count
    var = ss / count - mean * mean        # biased variance (PyTorch BN training normalization)
    # TODO(synk): E[x^2]-E[x]^2 is cancellation-prone for large activation means; switch to a
    # two-pass / Welford accumulation if that regime matters. Clamp keeps rsqrt finite here.
    var = jnp.maximum(var, 0.0)
    scale = gamma_p * lax.rsqrt(var + eps)
    shift = beta_p - mean * scale
    cp = scale.shape[0]
    return scale.reshape(1, cp), shift.reshape(1, cp)


def _prep_layer(w_hwio, b, gamma, beta, cpin, cpout):
    """Zero-pad channels to lane multiples, flatten weights to (9*Cpin, Cpout) bf16."""
    kh, kw, cin, cout = w_hwio.shape
    w_pad = jnp.zeros((kh, kw, cpin, cpout), jnp.float32)
    w_pad = w_pad.at[:, :, :cin, :cout].set(w_hwio.astype(jnp.float32))
    w_flat = w_pad.reshape(kh * kw * cpin, cpout).astype(jnp.bfloat16)
    b_row = jnp.zeros((1, cpout), jnp.float32).at[0, :cout].set(b)
    g_pad = jnp.zeros((cpout,), jnp.float32).at[:cout].set(gamma)   # 0 in padded lanes
    be_pad = jnp.zeros((cpout,), jnp.float32).at[:cout].set(beta)
    return w_flat, b_row, g_pad, be_pad


@jax.jit
def conv_block(x_nchw, params):
    """PyTorch ConvBlock.forward (training-mode BN). (N,Cin,H,W) f32 -> (N,Cout,H,W) f32."""
    x = jnp.transpose(x_nchw, (0, 2, 3, 1)).astype(jnp.float32)     # NCHW -> NHWC
    n, h, w_sp, cin = x.shape
    cout = params["w1"].shape[-1]
    cp_in = _round_up(cin, LANES)
    cp_out = _round_up(cout, LANES)

    # Lane-dense bf16 activations (padded channels are exactly zero everywhere).
    x_p = jnp.zeros((n, h, w_sp, cp_in), jnp.bfloat16).at[..., :cin].set(
        x.astype(jnp.bfloat16))

    w1, b1, g1, be1 = _prep_layer(params["w1"], params["b1"], params["g1"], params["be1"],
                                  cp_in, cp_out)
    w2, b2, g2, be2 = _prep_layer(params["w2"], params["b2"], params["g2"], params["be2"],
                                  cp_out, cp_out)

    count = float(n * h * w_sp)
    id_scale = jnp.ones((1, cp_in), jnp.float32)
    id_shift = jnp.zeros((1, cp_in), jnp.float32)

    # Layer 1: conv + batch stats (raw input, no fused BN/ReLU on the load).
    y1, s1, q1 = _conv_layer(x_p, id_scale, id_shift, w1, b1, apply_input_bn_relu=False)
    sc1, sh1 = _bn_scale_shift(s1, q1, g1, be1, count, _EPS)

    # Layer 2: BN1+ReLU fused into the conv-2 input load; conv + batch stats.
    y2, s2, q2 = _conv_layer(y1, sc1, sh1, w2, b2, apply_input_bn_relu=True)
    sc2, sh2 = _bn_scale_shift(s2, q2, g2, be2, count, _EPS)

    out = _bn_relu(y2, sc2, sh2)                   # final BN2 + ReLU (aliased, lane-dense)
    out = out[..., :cout].astype(jnp.float32)      # drop lane padding
    return jnp.transpose(out, (0, 3, 1, 2))        # NHWC -> NCHW


# ---------------------------------------------------------------------------
# Pure-JAX f32 reference (same math) for correctness checking.
# ---------------------------------------------------------------------------
def _ref_conv_block(x_nchw, params, eps=_EPS):
    x = jnp.transpose(x_nchw, (0, 2, 3, 1)).astype(jnp.float32)

    def step(x, w, b, g, be):
        y = lax.conv_general_dilated(
            x, w, window_strides=(1, 1), padding=((1, 1), (1, 1)),
            dimension_numbers=("NHWC", "HWIO", "NHWC")) + b
        mean = jnp.mean(y, axis=(0, 1, 2))
        var = jnp.mean(jnp.square(y), axis=(0, 1, 2)) - mean * mean
        y = (y - mean) / jnp.sqrt(var + eps) * g + be
        return jnp.maximum(y, 0.0)

    h = step(x, params["w1"], params["b1"], params["g1"], params["be1"])
    h = step(h, params["w2"], params["b2"], params["g2"], params["be2"])
    return jnp.transpose(h, (0, 3, 1, 2))


def _make_params(key, cin, cout):
    ks = jax.random.split(key, 4)
    # Conv weights kept directly in HWIO; deterministic init.
    return {
        "w1": jax.random.normal(ks[0], (3, 3, cin, cout), jnp.float32) * 0.1,
        "b1": jax.random.normal(ks[1], (cout,), jnp.float32) * 0.1,
        "g1": jnp.ones((cout,), jnp.float32),
        "be1": jnp.zeros((cout,), jnp.float32),
        "w2": jax.random.normal(ks[2], (3, 3, cout, cout), jnp.float32) * 0.1,
        "b2": jax.random.normal(ks[3], (cout,), jnp.float32) * 0.1,
        "g2": jnp.ones((cout,), jnp.float32),
        "be2": jnp.zeros((cout,), jnp.float32),
    }


if __name__ == "__main__":
    key = jax.random.PRNGKey(0)
    kx, kp = jax.random.split(key)

    N, CIN, COUT, H, W = 2, 4, 8, 16, 16
    x = jax.random.normal(kx, (N, CIN, H, W), jnp.float32)
    params = _make_params(kp, CIN, COUT)

    out = jax.block_until_ready(conv_block(x, params))
    ref = jax.block_until_ready(_ref_conv_block(x, params))

    assert out.shape == (N, COUT, H, W), out.shape
    # bf16 activation/weight storage -> relaxed tolerance vs the f32 reference.
    np.testing.assert_allclose(np.asarray(out), np.asarray(ref), atol=5e-2, rtol=5e-2)

    print("KERNEL_OK")
</pallas_src>

<mosaic_0001>
module attributes {stable_mosaic.version = 11 : i64} {
  func.func @conv3x3_fused_kernel(%arg0: i32, %arg1: i32, %arg2: i32, %arg3: memref<1x8x16x128xbf16, #tpu.memory_space<vmem>>, %arg4: memref<1x1x16x128xbf16, #tpu.memory_space<vmem>>, %arg5: memref<1x1x16x128xbf16, #tpu.memory_space<vmem>>, %arg6: memref<1x128xf32, #tpu.memory_space<vmem>>, %arg7: memref<1x128xf32, #tpu.memory_space<vmem>>, %arg8: memref<1152x128xbf16, #tpu.memory_space<vmem>>, %arg9: memref<1x128xf32, #tpu.memory_space<vmem>>, %arg10: memref<1x8x16x128xbf16, #tpu.memory_space<vmem>>, %arg11: memref<1x1x128xf32, #tpu.memory_space<vmem>>, %arg12: memref<1x1x128xf32, #tpu.memory_space<vmem>>, %arg13: memref<10x18x128xbf16, #tpu.memory_space<vmem>>) attributes {dimension_semantics = [#tpu.dimension_semantics<parallel>, #tpu.dimension_semantics<parallel>, #tpu.dimension_semantics<parallel>], iteration_bounds = array<i64: 2, 2, 1>, scalar_prefetch = 0 : i64, scratch_operands = 1 : i64, tpu.core_type = #tpu.core_type<tc>, window_params = [{transform_indices = @transform_0, window_bounds = array<i64: 1, 8, 16, 128>}, {transform_indices = @transform_1, window_bounds = array<i64: 1, 1, 16, 128>}, {transform_indices = @transform_2, window_bounds = array<i64: 1, 1, 16, 128>}, {pipeline_mode = #tpu.pipeline_mode<synchronous>, transform_indices = @transform_3, window_bounds = array<i64: 1, 128>}, {pipeline_mode = #tpu.pipeline_mode<synchronous>, transform_indices = @transform_4, window_bounds = array<i64: 1, 128>}, {transform_indices = @transform_5, window_bounds = array<i64: 1152, 128>}, {transform_indices = @transform_6, window_bounds = array<i64: 1, 128>}, {transform_indices = @transform_7, window_bounds = array<i64: 1, 8, 16, 128>}, {transform_indices = @transform_8, window_bounds = array<i64: 1, 1, 128>}, {transform_indices = @transform_9, window_bounds = array<i64: 1, 1, 128>}]} {
    %cst = arith.constant 0.000000e+00 : bf16
    %0 = vector.broadcast %cst : bf16 to vector<10x18x128xbf16>
    %c0 = arith.constant 0 : index
    %c0_0 = arith.constant 0 : index
    %c0_1 = arith.constant 0 : index
    %1 = vector.load %arg13[%c0, %c0_0, %c0_1] : memref<10x18x128xbf16, #tpu.memory_space<vmem>>, vector<10x18x128xbf16>
    tpu.vector_store %arg13[%c0, %c0_0, %c0_1], %0 {strides = array<i32>} : memref<10x18x128xbf16, #tpu.memory_space<vmem>>, vector<10x18x128xbf16>,
    %c0_2 = arith.constant 0 : index
    %c0_3 = arith.constant 0 : index
    %c0_4 = arith.constant 0 : index
    %c0_5 = arith.constant 0 : index
    %2 = vector.load %arg3[%c0_2, %c0_3, %c0_4, %c0_5] : memref<1x8x16x128xbf16, #tpu.memory_space<vmem>>, vector<1x8x16x128xbf16>
    %3 = vector.shape_cast %2 : vector<1x8x16x128xbf16> to vector<8x16x128xbf16>
    %c1 = arith.constant 1 : index
    %c1_6 = arith.constant 1 : index
    %c0_7 = arith.constant 0 : index
    %4 = vector.load %arg13[%c1, %c1_6, %c0_7] : memref<10x18x128xbf16, #tpu.memory_space<vmem>>, vector<8x16x128xbf16>
    tpu.vector_store %arg13[%c1, %c1_6, %c0_7], %3 {strides = array<i32>} : memref<10x18x128xbf16, #tpu.memory_space<vmem>>, vector<8x16x128xbf16>,
    %c0_i32 = arith.constant 0 : i32
    %5 = arith.cmpi sgt, %arg1, %c0_i32 : i32
    %6 = arith.extui %5 : i1 to i32
    %c0_i32_8 = arith.constant 0 : i32
    %7 = arith.cmpi ne, %6, %c0_i32_8 : i32
    scf.if %7 {
      %c0_53 = arith.constant 0 : index
      %c0_54 = arith.constant 0 : index
      %c0_55 = arith.constant 0 : index
      %c0_56 = arith.constant 0 : index
      %39 = vector.load %arg4[%c0_53, %c0_54, %c0_55, %c0_56] : memref<1x1x16x128xbf16, #tpu.memory_space<vmem>>, vector<1x1x16x128xbf16>
      %40 = vector.shape_cast %39 : vector<1x1x16x128xbf16> to vector<1x16x128xbf16>
      %c0_57 = arith.constant 0 : index
      %c1_58 = arith.constant 1 : index
      %c0_59 = arith.constant 0 : index
      %41 = vector.load %arg13[%c0_57, %c1_58, %c0_59] : memref<10x18x128xbf16, #tpu.memory_space<vmem>>, vector<1x16x128xbf16>
      tpu.vector_store %arg13[%c0_57, %c1_58, %c0_59], %40 {strides = array<i32>} : memref<10x18x128xbf16, #tpu.memory_space<vmem>>, vector<1x16x128xbf16>,
    } else {
    }
    %c1_i32 = arith.constant 1 : i32
    %8 = arith.cmpi slt, %arg1, %c1_i32 : i32
    %9 = arith.extui %8 : i1 to i32
    %c0_i32_9 = arith.constant 0 : i32
    %10 = arith.cmpi ne, %9, %c0_i32_9 : i32
    scf.if %10 {
      %c0_53 = arith.constant 0 : index
      %c0_54 = arith.constant 0 : index
      %c0_55 = arith.constant 0 : index
      %c0_56 = arith.constant 0 : index
      %39 = vector.load %arg5[%c0_53, %c0_54, %c0_55, %c0_56] : memref<1x1x16x128xbf16, #tpu.memory_space<vmem>>, vector<1x1x16x128xbf16>
      %40 = vector.shape_cast %39 : vector<1x1x16x128xbf16> to vector<1x16x128xbf16>
      %c9 = arith.constant 9 : index
      %c1_57 = arith.constant 1 : index
      %c0_58 = arith.constant 0 : index
      %41 = vector.load %arg13[%c9, %c1_57, %c0_58] : memref<10x18x128xbf16, #tpu.memory_space<vmem>>, vector<1x16x128xbf16>
      tpu.vector_store %arg13[%c9, %c1_57, %c0_58], %40 {strides = array<i32>} : memref<10x18x128xbf16, #tpu.memory_space<vmem>>, vector<1x16x128xbf16>,
    } else {
    }
    %c0_10 = arith.constant 0 : index
    %c0_11 = arith.constant 0 : index
    %c0_12 = arith.constant 0 : index
    %11 = vector.load %arg13[%c0_10, %c0_11, %c0_12] : memref<10x18x128xbf16, #tpu.memory_space<vmem>>, vector<8x16x128xbf16>
    %c0_13 = arith.constant 0 : index
    %c1_14 = arith.constant 1 : index
    %c0_15 = arith.constant 0 : index
    %12 = vector.load %arg13[%c0_13, %c1_14, %c0_15] : memref<10x18x128xbf16, #tpu.memory_space<vmem>>, vector<8x16x128xbf16>
    %c0_16 = arith.constant 0 : index
    %c2 = arith.constant 2 : index
    %c0_17 = arith.constant 0 : index
    %13 = vector.load %arg13[%c0_16, %c2, %c0_17] : memref<10x18x128xbf16, #tpu.memory_space<vmem>>, vector<8x16x128xbf16>
    %c1_18 = arith.constant 1 : index
    %c0_19 = arith.constant 0 : index
    %c0_20 = arith.constant 0 : index
    %14 = vector.load %arg13[%c1_18, %c0_19, %c0_20] : memref<10x18x128xbf16, #tpu.memory_space<vmem>>, vector<8x16x128xbf16>
    %c1_21 = arith.constant 1 : index
    %c1_22 = arith.constant 1 : index
    %c0_23 = arith.constant 0 : index
    %15 = vector.load %arg13[%c1_21, %c1_22, %c0_23] : memref<10x18x128xbf16, #tpu.memory_space<vmem>>, vector<8x16x128xbf16>
    %c1_24 = arith.constant 1 : index
    %c2_25 = arith.constant 2 : index
    %c0_26 = arith.constant 0 : index
    %16 = vector.load %arg13[%c1_24, %c2_25, %c0_26] : memref<10x18x128xbf16, #tpu.memory_space<vmem>>, vector<8x16x128xbf16>
    %c2_27 = arith.constant 2 : index
    %c0_28 = arith.constant 0 : index
    %c0_29 = arith.constant 0 : index
    %17 = vector.load %arg13[%c2_27, %c0_28, %c0_29] : memref<10x18x128xbf16, #tpu.memory_space<vmem>>, vector<8x16x128xbf16>
    %c2_30 = arith.constant 2 : index
    %c1_31 = arith.constant 1 : index
    %c0_32 = arith.constant 0 : index
    %18 = vector.load %arg13[%c2_30, %c1_31, %c0_32] : memref<10x18x128xbf16, #tpu.memory_space<vmem>>, vector<8x16x128xbf16>
    %c2_33 = arith.constant 2 : index
    %c2_34 = arith.constant 2 : index
    %c0_35 = arith.constant 0 : index
    %19 = vector.load %arg13[%c2_33, %c2_34, %c0_35] : memref<10x18x128xbf16, #tpu.memory_space<vmem>>, vector<8x16x128xbf16>
    %20 = tpu.concatenate %11, %12, %13, %14, %15, %16, %17, %18, %19 in 2 : vector<8x16x128xbf16>, vector<8x16x128xbf16>, vector<8x16x128xbf16>, vector<8x16x128xbf16>, vector<8x16x128xbf16>, vector<8x16x128xbf16>, vector<8x16x128xbf16>, vector<8x16x128xbf16>, vector<8x16x128xbf16> -> vector<8x16x1152xbf16>
    %21 = vector.shape_cast %20 : vector<8x16x1152xbf16> to vector<128x1152xbf16>
    %c0_36 = arith.constant 0 : index
    %c0_37 = arith.constant 0 : index
    %22 = vector.load %arg8[%c0_36, %c0_37] : memref<1152x128xbf16, #tpu.memory_space<vmem>>, vector<1152x128xbf16>
    %cst_38 = arith.constant dense<0.000000e+00> : vector<128x128xf32>
    %23 = tpu.matmul %21, %22, %cst_38 {dimension_numbers = #tpu.dot_dimension_numbers<[1], [0], [0], [1], [0, 0, 1, 1], [], []>} : vector<128x1152xbf16>, vector<1152x128xbf16>, vector<128x128xf32> -> vector<128x128xf32>
    %c0_39 = arith.constant 0 : index
    %c0_40 = arith.constant 0 : index
    %24 = vector.load %arg9[%c0_39, %c0_40] : memref<1x128xf32, #tpu.memory_space<vmem>>, vector<1x128xf32>
    %25 = vector.broadcast %24 : vector<1x128xf32> to vector<128x128xf32>
    %26 = arith.addf %23, %25 : vector<128x128xf32>
    %27 = vector.shape_cast %26 : vector<128x128xf32> to vector<1x8x16x128xf32>
    %28 = arith.truncf %27 : vector<1x8x16x128xf32> to vector<1x8x16x128xbf16>
    %c0_41 = arith.constant 0 : index
    %c0_42 = arith.constant 0 : index
    %c0_43 = arith.constant 0 : index
    %c0_44 = arith.constant 0 : index
    %29 = vector.load %arg10[%c0_41, %c0_42, %c0_43, %c0_44] : memref<1x8x16x128xbf16, #tpu.memory_space<vmem>>, vector<1x8x16x128xbf16>
    tpu.vector_store %arg10[%c0_41, %c0_42, %c0_43, %c0_44], %28 {strides = array<i32>} : memref<1x8x16x128xbf16, #tpu.memory_space<vmem>>, vector<1x8x16x128xbf16>,
    %cst_45 = arith.constant dense<0.000000e+00> : vector<128xf32>
    %30 = vector.multi_reduction <add>, %26, %cst_45 [0] : vector<128x128xf32> to vector<128xf32>
    %31 = vector.shape_cast %30 : vector<128xf32> to vector<1x128xf32>
    %32 = vector.shape_cast %31 : vector<1x128xf32> to vector<1x1x128xf32>
    %c0_46 = arith.constant 0 : index
    %c0_47 = arith.constant 0 : index
    %c0_48 = arith.constant 0 : index
    %33 = vector.load %arg11[%c0_46, %c0_47, %c0_48] : memref<1x1x128xf32, #tpu.memory_space<vmem>>, vector<1x1x128xf32>
    tpu.vector_store %arg11[%c0_46, %c0_47, %c0_48], %32 {strides = array<i32>} : memref<1x1x128xf32, #tpu.memory_space<vmem>>, vector<1x1x128xf32>,
    %34 = arith.mulf %26, %26 : vector<128x128xf32>
    %cst_49 = arith.constant dense<0.000000e+00> : vector<128xf32>
    %35 = vector.multi_reduction <add>, %34, %cst_49 [0] : vector<128x128xf32> to vector<128xf32>
    %36 = vector.shape_cast %35 : vector<128xf32> to vector<1x128xf32>
    %37 = vector.shape_cast %36 : vector<1x128xf32> to vector<1x1x128xf32>
    %c0_50 = arith.constant 0 : index
    %c0_51 = arith.constant 0 : index
    %c0_52 = arith.constant 0 : index
    %38 = vector.load %arg12[%c0_50, %c0_51, %c0_52] : memref<1x1x128xf32, #tpu.memory_space<vmem>>, vector<1x1x128xf32>
    tpu.vector_store %arg12[%c0_50, %c0_51, %c0_52], %37 {strides = array<i32>} : memref<1x1x128xf32, #tpu.memory_space<vmem>>, vector<1x1x128xf32>,
    return
  }
  func.func @transform_0(%arg0: i32, %arg1: i32, %arg2: i32) -> (i32, i32, i32, i32) {
    %c0_i32 = arith.constant 0 : i32
    %c0_i32_0 = arith.constant 0 : i32
    %c0_i32_1 = arith.constant 0 : i32
    return %arg0, %arg1, %c0_i32, %c0_i32_0 : i32, i32, i32, i32
  }
  func.func @transform_1(%arg0: i32, %arg1: i32, %arg2: i32) -> (i32, i32, i32, i32) {
    %c8_i32 = arith.constant 8 : i32
    %0 = arith.muli %arg1, %c8_i32 : i32
    %c1_i32 = arith.constant 1 : i32
    %1 = arith.subi %0, %c1_i32 : i32
    %c0_i32 = arith.constant 0 : i32
    %2 = arith.maxsi %1, %c0_i32 : i32
    %c0_i32_0 = arith.constant 0 : i32
    %c0_i32_1 = arith.constant 0 : i32
    %c0_i32_2 = arith.constant 0 : i32
    return %arg0, %2, %c0_i32_0, %c0_i32_1 : i32, i32, i32, i32
  }
  func.func @transform_2(%arg0: i32, %arg1: i32, %arg2: i32) -> (i32, i32, i32, i32) {
    %c8_i32 = arith.constant 8 : i32
    %0 = arith.muli %arg1, %c8_i32 : i32
    %c8_i32_0 = arith.constant 8 : i32
    %1 = arith.addi %0, %c8_i32_0 : i32
    %c15_i32 = arith.constant 15 : i32
    %2 = arith.minsi %1, %c15_i32 : i32
    %c0_i32 = arith.constant 0 : i32
    %c0_i32_1 = arith.constant 0 : i32
    %c0_i32_2 = arith.constant 0 : i32
    return %arg0, %2, %c0_i32, %c0_i32_1 : i32, i32, i32, i32
  }
  func.func @transform_3(%arg0: i32, %arg1: i32, %arg2: i32) -> (i32, i32) {
    %c0_i32 = arith.constant 0 : i32
    %c0_i32_0 = arith.constant 0 : i32
    %c0_i32_1 = arith.constant 0 : i32
    return %c0_i32, %c0_i32_0 : i32, i32
  }
  func.func @transform_4(%arg0: i32, %arg1: i32, %arg2: i32) -> (i32, i32) {
    %c0_i32 = arith.constant 0 : i32
    %c0_i32_0 = arith.constant 0 : i32
    %c0_i32_1 = arith.constant 0 : i32
    return %c0_i32, %c0_i32_0 : i32, i32
  }
  func.func @transform_5(%arg0: i32, %arg1: i32, %arg2: i32) -> (i32, i32) {
    %c0_i32 = arith.constant 0 : i32
    %c0_i32_0 = arith.constant 0 : i32
    return %c0_i32, %arg2 : i32, i32
  }
  func.func @transform_6(%arg0: i32, %arg1: i32, %arg2: i32) -> (i32, i32) {
    %c0_i32 = arith.constant 0 : i32
    %c0_i32_0 = arith.constant 0 : i32
    return %c0_i32, %arg2 : i32, i32
  }
  func.func @transform_7(%arg0: i32, %arg1: i32, %arg2: i32) -> (i32, i32, i32, i32) {
    %c0_i32 = arith.constant 0 : i32
    %c0_i32_0 = arith.constant 0 : i32
    return %arg0, %arg1, %c0_i32, %arg2 : i32, i32, i32, i32
  }
  func.func @transform_8(%arg0: i32, %arg1: i32, %arg2: i32) -> (i32, i32, i32) {
    %c2_i32 = arith.constant 2 : i32
    %0 = arith.muli %arg0, %c2_i32 : i32
    %1 = arith.addi %0, %arg1 : i32
    %c0_i32 = arith.constant 0 : i32
    %c0_i32_0 = arith.constant 0 : i32
    return %1, %c0_i32, %arg2 : i32, i32, i32
  }
  func.func @transform_9(%arg0: i32, %arg1: i32, %arg2: i32) -> (i32, i32, i32) {
    %c2_i32 = arith.constant 2 : i32
    %0 = arith.muli %arg0, %c2_i32 : i32
    %1 = arith.addi %0, %arg1 : i32
    %c0_i32 = arith.constant 0 : i32
    %c0_i32_0 = arith.constant 0 : i32
    return %1, %c0_i32, %arg2 : i32, i32, i32
  }
}

module attributes {stable_mosaic.version = 11 : i64} {
  func.func @bn_relu_kernel(%arg0: i32, %arg1: i32, %arg2: memref<1x8x16x128xbf16, #tpu.memory_space<vmem>>, %arg3: memref<1x128xf32, #tpu.memory_space<vmem>>, %arg4: memref<1x128xf32, #tpu.memory_space<vmem>>, %arg5: memref<1x8x16x128xbf16, #tpu.memory_space<vmem>>) attributes {dimension_semantics = [#tpu.dimension_semantics<parallel>, #tpu.dimension_semantics<parallel>], iteration_bounds = array<i64: 2, 2>, scalar_prefetch = 0 : i64, scratch_operands = 0 : i64, tpu.core_type = #tpu.core_type<tc>, window_params = [{transform_indices = @transform_0, window_bounds = array<i64: 1, 8, 16, 128>}, {pipeline_mode = #tpu.pipeline_mode<synchronous>, transform_indices = @transform_1, window_bounds = array<i64: 1, 128>}, {pipeline_mode = #tpu.pipeline_mode<synchronous>, transform_indices = @transform_2, window_bounds = array<i64: 1, 128>}, {transform_indices = @transform_3, window_bounds = array<i64: 1, 8, 16, 128>}]} {
    %c0 = arith.constant 0 : index
    %c0_0 = arith.constant 0 : index
    %c0_1 = arith.constant 0 : index
    %c0_2 = arith.constant 0 : index
    %0 = vector.load %arg2[%c0, %c0_0, %c0_1, %c0_2] : memref<1x8x16x128xbf16, #tpu.memory_space<vmem>>, vector<1x8x16x128xbf16>
    %1 = arith.extf %0 : vector<1x8x16x128xbf16> to vector<1x8x16x128xf32>
    %c0_3 = arith.constant 0 : index
    %c0_4 = arith.constant 0 : index
    %2 = vector.load %arg3[%c0_3, %c0_4] : memref<1x128xf32, #tpu.memory_space<vmem>>, vector<1x128xf32>
    %3 = vector.shape_cast %2 : vector<1x128xf32> to vector<1x1x1x128xf32>
    %4 = vector.broadcast %3 : vector<1x1x1x128xf32> to vector<1x8x16x128xf32>
    %5 = arith.mulf %1, %4 : vector<1x8x16x128xf32>
    %c0_5 = arith.constant 0 : index
    %c0_6 = arith.constant 0 : index
    %6 = vector.load %arg4[%c0_5, %c0_6] : memref<1x128xf32, #tpu.memory_space<vmem>>, vector<1x128xf32>
    %7 = vector.shape_cast %6 : vector<1x128xf32> to vector<1x1x1x128xf32>
    %8 = vector.broadcast %7 : vector<1x1x1x128xf32> to vector<1x8x16x128xf32>
    %9 = arith.addf %5, %8 : vector<1x8x16x128xf32>
    %cst = arith.constant 0.000000e+00 : f32
    %10 = vector.broadcast %cst : f32 to vector<1x8x16x128xf32>
    %11 = arith.maximumf %9, %10 : vector<1x8x16x128xf32>
    %12 = arith.truncf %11 : vector<1x8x16x128xf32> to vector<1x8x16x128xbf16>
    %c0_7 = arith.constant 0 : index
    %c0_8 = arith.constant 0 : index
    %c0_9 = arith.constant 0 : index
    %c0_10 = arith.constant 0 : index
    %13 = vector.load %arg5[%c0_7, %c0_8, %c0_9, %c0_10] : memref<1x8x16x128xbf16, #tpu.memory_space<vmem>>, vector<1x8x16x128xbf16>
    tpu.vector_store %arg5[%c0_7, %c0_8, %c0_9, %c0_10], %12 {strides = array<i32>} : memref<1x8x16x128xbf16, #tpu.memory_space<vmem>>, vector<1x8x16x128xbf16>,
    return
  }
  func.func @transform_0(%arg0: i32, %arg1: i32) -> (i32, i32, i32, i32) {
    %c0_i32 = arith.constant 0 : i32
    %c0_i32_0 = arith.constant 0 : i32
    %c0_i32_1 = arith.constant 0 : i32
    return %arg0, %arg1, %c0_i32, %c0_i32_0 : i32, i32, i32, i32
  }
  func.func @transform_1(%arg0: i32, %arg1: i32) -> (i32, i32) {
    %c0_i32 = arith.constant 0 : i32
    %c0_i32_0 = arith.constant 0 : i32
    %c0_i32_1 = arith.constant 0 : i32
    return %c0_i32, %c0_i32_0 : i32, i32
  }
  func.func @transform_2(%arg0: i32, %arg1: i32) -> (i32, i32) {
    %c0_i32 = arith.constant 0 : i32
    %c0_i32_0 = arith.constant 0 : i32
    %c0_i32_1 = arith.constant 0 : i32
    return %c0_i32, %c0_i32_0 : i32, i32
  }
  func.func @transform_3(%arg0: i32, %arg1: i32) -> (i32, i32, i32, i32) {
    %c0_i32 = arith.constant 0 : i32
    %c0_i32_0 = arith.constant 0 : i32
    %c0_i32_1 = arith.constant 0 : i32
    return %arg0, %arg1, %c0_i32, %c0_i32_0 : i32, i32, i32, i32
  }
}

module attributes {stable_mosaic.version = 11 : i64} {
  func.func @conv3x3_fused_kernel(%arg0: i32, %arg1: i32, %arg2: i32, %arg3: memref<1x8x16x128xbf16, #tpu.memory_space<vmem>>, %arg4: memref<1x1x16x128xbf16, #tpu.memory_space<vmem>>, %arg5: memref<1x1x16x128xbf16, #tpu.memory_space<vmem>>, %arg6: memref<1x128xf32, #tpu.memory_space<vmem>>, %arg7: memref<1x128xf32, #tpu.memory_space<vmem>>, %arg8: memref<1152x128xbf16, #tpu.memory_space<vmem>>, %arg9: memref<1x128xf32, #tpu.memory_space<vmem>>, %arg10: memref<1x8x16x128xbf16, #tpu.memory_space<vmem>>, %arg11: memref<1x1x128xf32, #tpu.memory_space<vmem>>, %arg12: memref<1x1x128xf32, #tpu.memory_space<vmem>>, %arg13: memref<10x18x128xbf16, #tpu.memory_space<vmem>>) attributes {dimension_semantics = [#tpu.dimension_semantics<parallel>, #tpu.dimension_semantics<parallel>, #tpu.dimension_semantics<parallel>], iteration_bounds = array<i64: 2, 2, 1>, scalar_prefetch = 0 : i64, scratch_operands = 1 : i64, tpu.core_type = #tpu.core_type<tc>, window_params = [{transform_indices = @transform_0, window_bounds = array<i64: 1, 8, 16, 128>}, {transform_indices = @transform_1, window_bounds = array<i64: 1, 1, 16, 128>}, {transform_indices = @transform_2, window_bounds = array<i64: 1, 1, 16, 128>}, {pipeline_mode = #tpu.pipeline_mode<synchronous>, transform_indices = @transform_3, window_bounds = array<i64: 1, 128>}, {pipeline_mode = #tpu.pipeline_mode<synchronous>, transform_indices = @transform_4, window_bounds = array<i64: 1, 128>}, {transform_indices = @transform_5, window_bounds = array<i64: 1152, 128>}, {transform_indices = @transform_6, window_bounds = array<i64: 1, 128>}, {transform_indices = @transform_7, window_bounds = array<i64: 1, 8, 16, 128>}, {transform_indices = @transform_8, window_bounds = array<i64: 1, 1, 128>}, {transform_indices = @transform_9, window_bounds = array<i64: 1, 1, 128>}]} {
    %cst = arith.constant 0.000000e+00 : bf16
    %0 = vector.broadcast %cst : bf16 to vector<10x18x128xbf16>
    %c0 = arith.constant 0 : index
    %c0_0 = arith.constant 0 : index
    %c0_1 = arith.constant 0 : index
    %1 = vector.load %arg13[%c0, %c0_0, %c0_1] : memref<10x18x128xbf16, #tpu.memory_space<vmem>>, vector<10x18x128xbf16>
    tpu.vector_store %arg13[%c0, %c0_0, %c0_1], %0 {strides = array<i32>} : memref<10x18x128xbf16, #tpu.memory_space<vmem>>, vector<10x18x128xbf16>,
    %c0_2 = arith.constant 0 : index
    %c0_3 = arith.constant 0 : index
    %c0_4 = arith.constant 0 : index
    %c0_5 = arith.constant 0 : index
    %2 = vector.load %arg3[%c0_2, %c0_3, %c0_4, %c0_5] : memref<1x8x16x128xbf16, #tpu.memory_space<vmem>>, vector<1x8x16x128xbf16>
    %3 = arith.extf %2 : vector<1x8x16x128xbf16> to vector<1x8x16x128xf32>
    %c0_6 = arith.constant 0 : index
    %c0_7 = arith.constant 0 : index
    %4 = vector.load %arg6[%c0_6, %c0_7] : memref<1x128xf32, #tpu.memory_space<vmem>>, vector<1x128xf32>
    %5 = vector.shape_cast %4 : vector<1x128xf32> to vector<1x1x1x128xf32>
    %6 = vector.broadcast %5 : vector<1x1x1x128xf32> to vector<1x8x16x128xf32>
    %7 = arith.mulf %3, %6 : vector<1x8x16x128xf32>
    %c0_8 = arith.constant 0 : index
    %c0_9 = arith.constant 0 : index
    %8 = vector.load %arg7[%c0_8, %c0_9] : memref<1x128xf32, #tpu.memory_space<vmem>>, vector<1x128xf32>
    %9 = vector.shape_cast %8 : vector<1x128xf32> to vector<1x1x1x128xf32>
    %10 = vector.broadcast %9 : vector<1x1x1x128xf32> to vector<1x8x16x128xf32>
    %11 = arith.addf %7, %10 : vector<1x8x16x128xf32>
    %cst_10 = arith.constant 0.000000e+00 : f32
    %12 = vector.broadcast %cst_10 : f32 to vector<1x8x16x128xf32>
    %13 = arith.maximumf %11, %12 : vector<1x8x16x128xf32>
    %14 = arith.truncf %13 : vector<1x8x16x128xf32> to vector<1x8x16x128xbf16>
    %15 = vector.shape_cast %14 : vector<1x8x16x128xbf16> to vector<8x16x128xbf16>
    %c1 = arith.constant 1 : index
    %c1_11 = arith.constant 1 : index
    %c0_12 = arith.constant 0 : index
    %16 = vector.load %arg13[%c1, %c1_11, %c0_12] : memref<10x18x128xbf16, #tpu.memory_space<vmem>>, vector<8x16x128xbf16>
    tpu.vector_store %arg13[%c1, %c1_11, %c0_12], %15 {strides = array<i32>} : memref<10x18x128xbf16, #tpu.memory_space<vmem>>, vector<8x16x128xbf16>,
    %c0_i32 = arith.constant 0 : i32
    %17 = arith.cmpi sgt, %arg1, %c0_i32 : i32
    %18 = arith.extui %17 : i1 to i32
    %c0_i32_13 = arith.constant 0 : i32
    %19 = arith.cmpi ne, %18, %c0_i32_13 : i32
    scf.if %19 {
      %c0_58 = arith.constant 0 : index
      %c0_59 = arith.constant 0 : index
      %c0_60 = arith.constant 0 : index
      %c0_61 = arith.constant 0 : index
      %51 = vector.load %arg4[%c0_58, %c0_59, %c0_60, %c0_61] : memref<1x1x16x128xbf16, #tpu.memory_space<vmem>>, vector<1x1x16x128xbf16>
      %52 = arith.extf %51 : vector<1x1x16x128xbf16> to vector<1x1x16x128xf32>
      %c0_62 = arith.constant 0 : index
      %c0_63 = arith.constant 0 : index
      %53 = vector.load %arg6[%c0_62, %c0_63] : memref<1x128xf32, #tpu.memory_space<vmem>>, vector<1x128xf32>
      %54 = vector.shape_cast %53 : vector<1x128xf32> to vector<1x1x1x128xf32>
      %55 = vector.broadcast %54 : vector<1x1x1x128xf32> to vector<1x1x16x128xf32>
      %56 = arith.mulf %52, %55 : vector<1x1x16x128xf32>
      %c0_64 = arith.constant 0 : index
      %c0_65 = arith.constant 0 : index
      %57 = vector.load %arg7[%c0_64, %c0_65] : memref<1x128xf32, #tpu.memory_space<vmem>>, vector<1x128xf32>
      %58 = vector.shape_cast %57 : vector<1x128xf32> to vector<1x1x1x128xf32>
      %59 = vector.broadcast %58 : vector<1x1x1x128xf32> to vector<1x1x16x128xf32>
      %60 = arith.addf %56, %59 : vector<1x1x16x128xf32>
      %cst_66 = arith.constant 0.000000e+00 : f32
      %61 = vector.broadcast %cst_66 : f32 to vector<1x1x16x128xf32>
      %62 = arith.maximumf %60, %61 : vector<1x1x16x128xf32>
      %63 = arith.truncf %62 : vector<1x1x16x128xf32> to vector<1x1x16x128xbf16>
      %64 = vector.shape_cast %63 : vector<1x1x16x128xbf16> to vector<1x16x128xbf16>
      %c0_67 = arith.constant 0 : index
      %c1_68 = arith.constant 1 : index
      %c0_69 = arith.constant 0 : index
      %65 = vector.load %arg13[%c0_67, %c1_68, %c0_69] : memref<10x18x128xbf16, #tpu.memory_space<vmem>>, vector<1x16x128xbf16>
      tpu.vector_store %arg13[%c0_67, %c1_68, %c0_69], %64 {strides = array<i32>} : memref<10x18x128xbf16, #tpu.memory_space<vmem>>, vector<1x16x128xbf16>,
    } else {
    }
    %c1_i32 = arith.constant 1 : i32
    %20 = arith.cmpi slt, %arg1, %c1_i32 : i32
    %21 = arith.extui %20 : i1 to i32
    %c0_i32_14 = arith.constant 0 : i32
    %22 = arith.cmpi ne, %21, %c0_i32_14 : i32
    scf.if %22 {
      %c0_58 = arith.constant 0 : index
      %c0_59 = arith.constant 0 : index
      %c0_60 = arith.constant 0 : index
      %c0_61 = arith.constant 0 : index
      %51 = vector.load %arg5[%c0_58, %c0_59, %c0_60, %c0_61] : memref<1x1x16x128xbf16, #tpu.memory_space<vmem>>, vector<1x1x16x128xbf16>
      %52 = arith.extf %51 : vector<1x1x16x128xbf16> to vector<1x1x16x128xf32>
      %c0_62 = arith.constant 0 : index
      %c0_63 = arith.constant 0 : index
      %53 = vector.load %arg6[%c0_62, %c0_63] : memref<1x128xf32, #tpu.memory_space<vmem>>, vector<1x128xf32>
      %54 = vector.shape_cast %53 : vector<1x128xf32> to vector<1x1x1x128xf32>
      %55 = vector.broadcast %54 : vector<1x1x1x128xf32> to vector<1x1x16x128xf32>
      %56 = arith.mulf %52, %55 : vector<1x1x16x128xf32>
      %c0_64 = arith.constant 0 : index
      %c0_65 = arith.constant 0 : index
      %57 = vector.load %arg7[%c0_64, %c0_65] : memref<1x128xf32, #tpu.memory_space<vmem>>, vector<1x128xf32>
      %58 = vector.shape_cast %57 : vector<1x128xf32> to vector<1x1x1x128xf32>
      %59 = vector.broadcast %58 : vector<1x1x1x128xf32> to vector<1x1x16x128xf32>
      %60 = arith.addf %56, %59 : vector<1x1x16x128xf32>
      %cst_66 = arith.constant 0.000000e+00 : f32
      %61 = vector.broadcast %cst_66 : f32 to vector<1x1x16x128xf32>
      %62 = arith.maximumf %60, %61 : vector<1x1x16x128xf32>
      %63 = arith.truncf %62 : vector<1x1x16x128xf32> to vector<1x1x16x128xbf16>
      %64 = vector.shape_cast %63 : vector<1x1x16x128xbf16> to vector<1x16x128xbf16>
      %c9 = arith.constant 9 : index
      %c1_67 = arith.constant 1 : index
      %c0_68 = arith.constant 0 : index
      %65 = vector.load %arg13[%c9, %c1_67, %c0_68] : memref<10x18x128xbf16, #tpu.memory_space<vmem>>, vector<1x16x128xbf16>
      tpu.vector_store %arg13[%c9, %c1_67, %c0_68], %64 {strides = array<i32>} : memref<10x18x128xbf16, #tpu.memory_space<vmem>>, vector<1x16x128xbf16>,
    } else {
    }
    %c0_15 = arith.constant 0 : index
    %c0_16 = arith.constant 0 : index
    %c0_17 = arith.constant 0 : index
    %23 = vector.load %arg13[%c0_15, %c0_16, %c0_17] : memref<10x18x128xbf16, #tpu.memory_space<vmem>>, vector<8x16x128xbf16>
    %c0_18 = arith.constant 0 : index
    %c1_19 = arith.constant 1 : index
    %c0_20 = arith.constant 0 : index
    %24 = vector.load %arg13[%c0_18, %c1_19, %c0_20] : memref<10x18x128xbf16, #tpu.memory_space<vmem>>, vector<8x16x128xbf16>
    %c0_21 = arith.constant 0 : index
    %c2 = arith.constant 2 : index
    %c0_22 = arith.constant 0 : index
    %25 = vector.load %arg13[%c0_21, %c2, %c0_22] : memref<10x18x128xbf16, #tpu.memory_space<vmem>>, vector<8x16x128xbf16>
    %c1_23 = arith.constant 1 : index
    %c0_24 = arith.constant 0 : index
    %c0_25 = arith.constant 0 : index
    %26 = vector.load %arg13[%c1_23, %c0_24, %c0_25] : memref<10x18x128xbf16, #tpu.memory_space<vmem>>, vector<8x16x128xbf16>
    %c1_26 = arith.constant 1 : index
    %c1_27 = arith.constant 1 : index
    %c0_28 = arith.constant 0 : index
    %27 = vector.load %arg13[%c1_26, %c1_27, %c0_28] : memref<10x18x128xbf16, #tpu.memory_space<vmem>>, vector<8x16x128xbf16>
    %c1_29 = arith.constant 1 : index
    %c2_30 = arith.constant 2 : index
    %c0_31 = arith.constant 0 : index
    %28 = vector.load %arg13[%c1_29, %c2_30, %c0_31] : memref<10x18x128xbf16, #tpu.memory_space<vmem>>, vector<8x16x128xbf16>
    %c2_32 = arith.constant 2 : index
    %c0_33 = arith.constant 0 : index
    %c0_34 = arith.constant 0 : index
    %29 = vector.load %arg13[%c2_32, %c0_33, %c0_34] : memref<10x18x128xbf16, #tpu.memory_space<vmem>>, vector<8x16x128xbf16>
    %c2_35 = arith.constant 2 : index
    %c1_36 = arith.constant 1 : index
    %c0_37 = arith.constant 0 : index
    %30 = vector.load %arg13[%c2_35, %c1_36, %c0_37] : memref<10x18x128xbf16, #tpu.memory_space<vmem>>, vector<8x16x128xbf16>
    %c2_38 = arith.constant 2 : index
    %c2_39 = arith.constant 2 : index
    %c0_40 = arith.constant 0 : index
    %31 = vector.load %arg13[%c2_38, %c2_39, %c0_40] : memref<10x18x128xbf16, #tpu.memory_space<vmem>>, vector<8x16x128xbf16>
    %32 = tpu.concatenate %23, %24, %25, %26, %27, %28, %29, %30, %31 in 2 : vector<8x16x128xbf16>, vector<8x16x128xbf16>, vector<8x16x128xbf16>, vector<8x16x128xbf16>, vector<8x16x128xbf16>, vector<8x16x128xbf16>, vector<8x16x128xbf16>, vector<8x16x128xbf16>, vector<8x16x128xbf16> -> vector<8x16x1152xbf16>
    %33 = vector.shape_cast %32 : vector<8x16x1152xbf16> to vector<128x1152xbf16>
    %c0_41 = arith.constant 0 : index
    %c0_42 = arith.constant 0 : index
    %34 = vector.load %arg8[%c0_41, %c0_42] : memref<1152x128xbf16, #tpu.memory_space<vmem>>, vector<1152x128xbf16>
    %cst_43 = arith.constant dense<0.000000e+00> : vector<128x128xf32>
    %35 = tpu.matmul %33, %34, %cst_43 {dimension_numbers = #tpu.dot_dimension_numbers<[1], [0], [0], [1], [0, 0, 1, 1], [], []>} : vector<128x1152xbf16>, vector<1152x128xbf16>, vector<128x128xf32> -> vector<128x128xf32>
    %c0_44 = arith.constant 0 : index
    %c0_45 = arith.constant 0 : index
    %36 = vector.load %arg9[%c0_44, %c0_45] : memref<1x128xf32, #tpu.memory_space<vmem>>, vector<1x128xf32>
    %37 = vector.broadcast %36 : vector<1x128xf32> to vector<128x128xf32>
    %38 = arith.addf %35, %37 : vector<128x128xf32>
    %39 = vector.shape_cast %38 : vector<128x128xf32> to vector<1x8x16x128xf32>
    %40 = arith.truncf %39 : vector<1x8x16x128xf32> to vector<1x8x16x128xbf16>
    %c0_46 = arith.constant 0 : index
    %c0_47 = arith.constant 0 : index
    %c0_48 = arith.constant 0 : index
    %c0_49 = arith.constant 0 : index
    %41 = vector.load %arg10[%c0_46, %c0_47, %c0_48, %c0_49] : memref<1x8x16x128xbf16, #tpu.memory_space<vmem>>, vector<1x8x16x128xbf16>
    tpu.vector_store %arg10[%c0_46, %c0_47, %c0_48, %c0_49], %40 {strides = array<i32>} : memref<1x8x16x128xbf16, #tpu.memory_space<vmem>>, vector<1x8x16x128xbf16>,
    %cst_50 = arith.constant dense<0.000000e+00> : vector<128xf32>
    %42 = vector.multi_reduction <add>, %38, %cst_50 [0] : vector<128x128xf32> to vector<128xf32>
    %43 = vector.shape_cast %42 : vector<128xf32> to vector<1x128xf32>
    %44 = vector.shape_cast %43 : vector<1x128xf32> to vector<1x1x128xf32>
    %c0_51 = arith.constant 0 : index
    %c0_52 = arith.constant 0 : index
    %c0_53 = arith.constant 0 : index
    %45 = vector.load %arg11[%c0_51, %c0_52, %c0_53] : memref<1x1x128xf32, #tpu.memory_space<vmem>>, vector<1x1x128xf32>
    tpu.vector_store %arg11[%c0_51, %c0_52, %c0_53], %44 {strides = array<i32>} : memref<1x1x128xf32, #tpu.memory_space<vmem>>, vector<1x1x128xf32>,
    %46 = arith.mulf %38, %38 : vector<128x128xf32>
    %cst_54 = arith.constant dense<0.000000e+00> : vector<128xf32>
    %47 = vector.multi_reduction <add>, %46, %cst_54 [0] : vector<128x128xf32> to vector<128xf32>
    %48 = vector.shape_cast %47 : vector<128xf32> to vector<1x128xf32>
    %49 = vector.shape_cast %48 : vector<1x128xf32> to vector<1x1x128xf32>
    %c0_55 = arith.constant 0 : index
    %c0_56 = arith.constant 0 : index
    %c0_57 = arith.constant 0 : index
    %50 = vector.load %arg12[%c0_55, %c0_56, %c0_57] : memref<1x1x128xf32, #tpu.memory_space<vmem>>, vector<1x1x128xf32>
    tpu.vector_store %arg12[%c0_55, %c0_56, %c0_57], %49 {strides = array<i32>} : memref<1x1x128xf32, #tpu.memory_space<vmem>>, vector<1x1x128xf32>,
    return
  }
  func.func @transform_0(%arg0: i32, %arg1: i32, %arg2: i32) -> (i32, i32, i32, i32) {
    %c0_i32 = arith.constant 0 : i32
    %c0_i32_0 = arith.constant 0 : i32
    %c0_i32_1 = arith.constant 0 : i32
    return %arg0, %arg1, %c0_i32, %c0_i32_0 : i32, i32, i32, i32
  }
  func.func @transform_1(%arg0: i32, %arg1: i32, %arg2: i32) -> (i32, i32, i32, i32) {
    %c8_i32 = arith.constant 8 : i32
    %0 = arith.muli %arg1, %c8_i32 : i32
    %c1_i32 = arith.constant 1 : i32
    %1 = arith.subi %0, %c1_i32 : i32
    %c0_i32 = arith.constant 0 : i32
    %2 = arith.maxsi %1, %c0_i32 : i32
    %c0_i32_0 = arith.constant 0 : i32
    %c0_i32_1 = arith.constant 0 : i32
    %c0_i32_2 = arith.constant 0 : i32
    return %arg0, %2, %c0_i32_0, %c0_i32_1 : i32, i32, i32, i32
  }
  func.func @transform_2(%arg0: i32, %arg1: i32, %arg2: i32) -> (i32, i32, i32, i32) {
    %c8_i32 = arith.constant 8 : i32
    %0 = arith.muli %arg1, %c8_i32 : i32
    %c8_i32_0 = arith.constant 8 : i32
    %1 = arith.addi %0, %c8_i32_0 : i32
    %c15_i32 = arith.constant 15 : i32
    %2 = arith.minsi %1, %c15_i32 : i32
    %c0_i32 = arith.constant 0 : i32
    %c0_i32_1 = arith.constant 0 : i32
    %c0_i32_2 = arith.constant 0 : i32
    return %arg0, %2, %c0_i32, %c0_i32_1 : i32, i32, i32, i32
  }
  func.func @transform_3(%arg0: i32, %arg1: i32, %arg2: i32) -> (i32, i32) {
    %c0_i32 = arith.constant 0 : i32
    %c0_i32_0 = arith.constant 0 : i32
    %c0_i32_1 = arith.constant 0 : i32
    return %c0_i32, %c0_i32_0 : i32, i32
  }
  func.func @transform_4(%arg0: i32, %arg1: i32, %arg2: i32) -> (i32, i32) {
    %c0_i32 = arith.constant 0 : i32
    %c0_i32_0 = arith.constant 0 : i32
    %c0_i32_1 = arith.constant 0 : i32
    return %c0_i32, %c0_i32_0 : i32, i32
  }
  func.func @transform_5(%arg0: i32, %arg1: i32, %arg2: i32) -> (i32, i32) {
    %c0_i32 = arith.constant 0 : i32
    %c0_i32_0 = arith.constant 0 : i32
    return %c0_i32, %arg2 : i32, i32
  }
  func.func @transform_6(%arg0: i32, %arg1: i32, %arg2: i32) -> (i32, i32) {
    %c0_i32 = arith.constant 0 : i32
    %c0_i32_0 = arith.constant 0 : i32
    return %c0_i32, %arg2 : i32, i32
  }
  func.func @transform_7(%arg0: i32, %arg1: i32, %arg2: i32) -> (i32, i32, i32, i32) {
    %c0_i32 = arith.constant 0 : i32
    %c0_i32_0 = arith.constant 0 : i32
    return %arg0, %arg1, %c0_i32, %arg2 : i32, i32, i32, i32
  }
  func.func @transform_8(%arg0: i32, %arg1: i32, %arg2: i32) -> (i32, i32, i32) {
    %c2_i32 = arith.constant 2 : i32
    %0 = arith.muli %arg0, %c2_i32 : i32
    %1 = arith.addi %0, %arg1 : i32
    %c0_i32 = arith.constant 0 : i32
    %c0_i32_0 = arith.constant 0 : i32
    return %1, %c0_i32, %arg2 : i32, i32, i32
  }
  func.func @transform_9(%arg0: i32, %arg1: i32, %arg2: i32) -> (i32, i32, i32) {
    %c2_i32 = arith.constant 2 : i32
    %0 = arith.muli %arg0, %c2_i32 : i32
    %1 = arith.addi %0, %arg1 : i32
    %c0_i32 = arith.constant 0 : i32
    %c0_i32_0 = arith.constant 0 : i32
    return %1, %c0_i32, %arg2 : i32, i32, i32
  }
}

</mosaic_0001>

<llo_original>
// kernel: conv_block.5
$region0: #{conv_block.5}
  #allocation0 [shape = 'u32[]', space=smem, size = 0x4, offset = 0x4, fixed_abs, tag = 'smem constant byte address 0x4 - core index']
  #allocation1 [shape = 'u32[72,128]{1,0:T(1,128)}', space=vmem, size = 0x9000, scoped, tag = 'internal scratch']
  %s0 = inlined_call_operand.vmem [shape: bf16[2,16,16,128], index: 0, kind: input, shape index: {}, may-alias: {0,3}]
  %s1 = inlined_call_operand.vmem [shape: f32[1,128], index: 1, kind: input, shape index: {}]
  %s2 = inlined_call_operand.vmem [shape: f32[1,128], index: 2, kind: input, shape index: {}]
  %s3 = inlined_call_operand.vmem [shape: bf16[2,16,16,128], index: 3, kind: output, shape index: {}, may-alias: {0,3}]
  %s4 = sld [smem:[#allocation0]]
  $region45: #{conv_block.5} parent=0
    _
  %s6 = ssub.s32 1, %s4
  %s7 = scalar_select 0, %s6, %s4
  loop: start=0, step=1, limit=6
  $region2: #{conv_block.5} parent=0 // loop_pre_header
    _
  $region3: #{conv_block.5} parent=0 // loop_header
    %s9 = sphi 0, %s13
    %p10 = scmp.ge.s32.totalorder %s9, 6
    %s16 = sphi 0, %s28
    %s17 = sphi 0, %s24
    %s18 = sphi 0, %s16
    %s19 = sphi 0, %s17
    %s20 = sphi 0, %s18
    %s21 = sphi 0, %s19
    %s33 = sphi 0, %s35
    %s36 = sphi 0, %s33
    %s37 = sphi 0, %s36
    %s53 = sphi 0, %s37
    %s57 = sphi 0, %s57
    %s59 = sphi 0, %s57
    %s60 = sphi 0, %s59
    %s74 = sphi 0, %s60
    %s78 = sphi 0, %s78
    %s80 = sphi 0, %s78
    %s81 = sphi 0, %s80
    %s95 = sphi 0, %s81
    %s103 = sphi 0, %s105
    %s106 = sphi 0, %s103
    %s107 = sphi 0, %s106
    %s123 = sphi 0, %s107
  $region4: #{conv_block.5} parent=0 // loop_header_branch
    %12 = sbr.rel (%p10) target = $region8
  $region5: #{conv_block.5} parent=0 // loop_body
    %s14 = ssub.s32 %s9, 1
    %s15 = ssub.s32 %s9, 2
    %s22 = sadd.s32 1, %s17
    %p23 = scmp.ge.s32.totalorder %s22, 2
    %s24 = scalar_select %p23, 0, %s22
    %s25 = sadd.s32 1, %s16
    %s26 = scalar_select %p23, %s25, %s16
    %p27 = scmp.ge.s32.totalorder %s26, 2
    %s28 = scalar_select %p27, 0, %s26
    %s29 = ssub.s32 %s16, %s28
    %s30 = ssub.s32 %s17, %s24
    %s31 = sor.u32 %s29, %s30
    %p32 = scmp.eq.s32.totalorder %s31, 0
    %s34 = sadd.s32 %s33, 1
    %s35 = scalar_select %p32, %s33, %s34
    %p38 = pneg %p32
    %p39 = scmp.eq.s32.totalorder %s9, 3
    %p40 = por %p38, %p39
    %p41 = scmp.ne.s32.totalorder %s33, %s36
    %p42 = scmp.eq.s32.totalorder %s9, 0
    %p43 = por %p41, %p42
    %p44 = scmp.ne.s32.totalorder %s33, %s36
    %p45 = scmp.eq.s32.totalorder %s14, 3
    %p46 = por %p44, %p45
    %p47 = scmp.ne.s32.totalorder %s36, %s37
    %p48 = scmp.eq.s32.totalorder %s14, 0
    %p49 = por %p47, %p48
    %p50 = scmp.ne.s32.totalorder %s36, %s37
    %p51 = scmp.eq.s32.totalorder %s15, 3
    %p52 = por %p50, %p51
    %p54 = scmp.ne.s32.totalorder %s37, %s53
    %p55 = scmp.eq.s32.totalorder %s15, 0
    %p56 = por %p54, %p55
    %s58 = sadd.s32 %s57, 1
    %p61 = scmp.eq.s32.totalorder %s9, 3
    %p62 = scmp.ne.s32.totalorder %s57, %s59
    %p63 = scmp.eq.s32.totalorder %s9, 0
    %p64 = por %p62, %p63
    %p65 = scmp.ne.s32.totalorder %s57, %s59
    %p66 = scmp.eq.s32.totalorder %s14, 3
    %p67 = por %p65, %p66
    %p68 = scmp.ne.s32.totalorder %s59, %s60
    %p69 = scmp.eq.s32.totalorder %s14, 0
    %p70 = por %p68, %p69
    %p71 = scmp.ne.s32.totalorder %s59, %s60
    %p72 = scmp.eq.s32.totalorder %s15, 3
    %p73 = por %p71, %p72
    %p75 = scmp.ne.s32.totalorder %s60, %s74
    %p76 = scmp.eq.s32.totalorder %s15, 0
    %p77 = por %p75, %p76
    %s79 = sadd.s32 %s78, 1
    %p82 = scmp.eq.s32.totalorder %s9, 3
    %p83 = scmp.ne.s32.totalorder %s78, %s80
    %p84 = scmp.eq.s32.totalorder %s9, 0
    %p85 = por %p83, %p84
    %p86 = scmp.ne.s32.totalorder %s78, %s80
    %p87 = scmp.eq.s32.totalorder %s14, 3
    %p88 = por %p86, %p87
    %p89 = scmp.ne.s32.totalorder %s80, %s81
    %p90 = scmp.eq.s32.totalorder %s14, 0
    %p91 = por %p89, %p90
    %p92 = scmp.ne.s32.totalorder %s80, %s81
    %p93 = scmp.eq.s32.totalorder %s15, 3
    %p94 = por %p92, %p93
    %p96 = scmp.ne.s32.totalorder %s81, %s95
    %p97 = scmp.eq.s32.totalorder %s15, 0
    %p98 = por %p96, %p97
    %s99 = ssub.s32 %s16, %s28
    %s100 = ssub.s32 %s17, %s24
    %s101 = sor.u32 %s99, %s100
    %p102 = scmp.eq.s32.totalorder %s101, 0
    %s104 = sadd.s32 %s103, 1
    %s105 = scalar_select %p102, %s103, %s104
    %p108 = pneg %p102
    %p109 = scmp.eq.s32.totalorder %s9, 3
    %p110 = por %p108, %p109
    %p111 = scmp.ne.s32.totalorder %s103, %s106
    %p112 = scmp.eq.s32.totalorder %s9, 0
    %p113 = por %p111, %p112
    %p114 = scmp.ne.s32.totalorder %s103, %s106
    %p115 = scmp.eq.s32.totalorder %s14, 3
    %p116 = por %p114, %p115
    %p117 = scmp.ne.s32.totalorder %s106, %s107
    %p118 = scmp.eq.s32.totalorder %s14, 0
    %p119 = por %p117, %p118
    %p120 = scmp.ne.s32.totalorder %s106, %s107
    %p121 = scmp.eq.s32.totalorder %s15, 3
    %p122 = por %p120, %p121
    %p124 = scmp.ne.s32.totalorder %s107, %s123
    %p125 = scmp.eq.s32.totalorder %s15, 0
    %p126 = por %p124, %p125
    %p127 = scmp.le.s32.totalorder 1, %s9
    %p128 = scmp.lt.s32.totalorder %s9, 5
    %p129 = pnand %p127, %p128
    %p130 = pneg %p129
    // Predicated region
    $region9: #{conv_block.5} parent=5 // pred_check
      _
    $region10: #{conv_block.5} parent=5 // pred_check_branch
      %132 = sbr.rel (%p129) target = $region12
    $region11: #{conv_block.5} parent=5 // pred_region
      %s133 = ssub.s32 %s9, 1
      // Predicated region
      $region13: #{conv_block.5} parent=11 // pred_check
        %p134 = pneg %p70
      $region14: #{conv_block.5} parent=11 // pred_check_branch
        %136 = sbr.rel (%p134) target = $region16
      $region15: #{conv_block.5} parent=11 // pred_region
        _
      $region16: #{conv_block.5} parent=11 // pred_fallthru
        _
      // Predicated region
      $region17: #{conv_block.5} parent=11 // pred_check
        %p137 = pneg %p91
      $region18: #{conv_block.5} parent=11 // pred_check_branch
        %139 = sbr.rel (%p137) target = $region20
      $region19: #{conv_block.5} parent=11 // pred_region
        _
      $region20: #{conv_block.5} parent=11 // pred_fallthru
        _
    $region12: #{conv_block.5} parent=5 // pred_fallthru
      _
    %p140 = scmp.lt.s32.totalorder %s9, 4
    // Predicated region
    $region21: #{conv_block.5} parent=5 // pred_check
      %p141 = pneg %p140
    $region22: #{conv_block.5} parent=5 // pred_check_branch
      %143 = sbr.rel (%p141) target = $region24
    $region23: #{conv_block.5} parent=5 // pred_region
      // Predicated region
      $region25: #{conv_block.5} parent=23 // pred_check
        %p144 = pneg %p43
      $region26: #{conv_block.5} parent=23 // pred_check_branch
        %146 = sbr.rel (%p144) target = $region28
      $region27: #{conv_block.5} parent=23 // pred_region
        %s147 = smul.u32 8, %s17
        %p148 = scmp.lt.s32.totalorder %s16, 1
        %s149 = scalar_select %p148, %s16, 1
        %p150 = scmp.lt.s32.totalorder %s147, 15
        %s151 = scalar_select %p150, %s147, 15
        %s152 = smul.addr %s151, 2
        %s153 = smul.addr %s149, 32
        %s154 = sadd.s32 %s152, %s153
        %s155 = smul.addr %s154, 4
        %s156 = scalar_lea.vmem %s0, %s155
        %s157 = smul.u32 8, %s17
      $region28: #{conv_block.5} parent=23 // pred_fallthru
        _
    $region24: #{conv_block.5} parent=5 // pred_fallthru
      _
    %p158 = scmp.le.s32.totalorder 1, %s9
    %p159 = scmp.lt.s32.totalorder %s9, 5
    %p160 = pnand %p158, %p159
    %p161 = pneg %p160
    // Predicated region
    $region29: #{conv_block.5} parent=5 // pred_check
      _
    $region30: #{conv_block.5} parent=5 // pred_check_branch
      %163 = sbr.rel (%p160) target = $region32
    $region31: #{conv_block.5} parent=5 // pred_region
      %s164 = ssub.s32 %s9, 1
      %s165 = smul.u32 8, %s19
      %p166 = scmp.lt.s32.totalorder %s18, 1
      %s167 = scalar_select %p166, %s18, 1
      %p168 = scmp.lt.s32.totalorder %s165, 15
      %s169 = scalar_select %p168, %s165, 15
      %s170 = smul.addr %s169, 2
      %s171 = smul.addr %s167, 32
      %s172 = sadd.s32 %s170, %s171
      %s173 = smul.addr %s172, 4
      %s174 = scalar_lea.vmem %s0, %s173
      %p175 = pneg %p49
      %p176 = pneg %p46
      %p177 = pneg %p70
      %p178 = pneg %p67
      %p179 = pneg %p91
      %p180 = pneg %p88
      %p181 = pneg %p119
      %p182 = pneg %p116
      %s183 = smul.u32 8, %s19
      %p184 = scmp.lt.s32.totalorder %s18, 1
      %s185 = scalar_select %p184, %s18, 1
      %p186 = scmp.lt.s32.totalorder %s183, 15
      %s187 = scalar_select %p186, %s183, 15
      %s188 = smul.addr %s187, 2
      %s189 = smul.addr %s185, 32
      %s190 = sadd.s32 %s188, %s189
      %s191 = smul.addr %s190, 4
      %s192 = scalar_lea.vmem %s3, %s191
      %s193 = smul.u32 8, %s19
      %p194 = scmp.lt.s32.totalorder %s18, 1
      %s195 = scalar_select %p194, %s18, 1
      %p196 = scmp.lt.s32.totalorder %s193, 15
      %s197 = scalar_select %p196, %s193, 15
      %s198 = smul.addr %s197, 2
      %s199 = smul.addr %s195, 32
      %s200 = sadd.s32 %s198, %s199
      %s201 = smul.addr %s200, 4
      %s202 = scalar_lea.vmem %s0, %s201
      %s203 = smul.u32 8, %s19
      %s204 = smul.u32 8, %s19
      %p205 = scmp.lt.s32.totalorder %s18, 1
      %s206 = scalar_select %p205, %s18, 1
      %p207 = scmp.lt.s32.totalorder %s204, 15
      %s208 = scalar_select %p207, %s204, 15
      %s209 = smul.addr %s208, 2
      %s210 = smul.addr %s206, 32
      %s211 = sadd.s32 %s209, %s210
      %s212 = smul.addr %s211, 4
      %s213 = scalar_lea.vmem %s3, %s212
      %s214 = smul.u32 8, %s19
      %v215 = vld [vmem:[%s202] sm:$0xf]
      %v216 = vld [vmem:[%s202 + $0x4] sm:$0xf]
      %v217 = vld [vmem:[%s202 + $0x8] sm:$0xf]
      %v218 = vld [vmem:[%s202 + $0xc] sm:$0xf]
      %v219 = vld [vmem:[%s202 + $0x10] sm:$0xf]
      %v220 = vld [vmem:[%s202 + $0x14] sm:$0xf]
      %v221 = vld [vmem:[%s202 + $0x18] sm:$0xf]
      %v222 = vld [vmem:[%s202 + $0x1c] sm:$0xf]
      %v223 = vld [vmem:[%s202 + $0x20] sm:$0xf]
      %v224 = vld [vmem:[%s202 + $0x24] sm:$0xf]
      %v225 = vld [vmem:[%s202 + $0x28] sm:$0xf]
      %v226 = vld [vmem:[%s202 + $0x2c] sm:$0xf]
      %v227 = vld [vmem:[%s202 + $0x30] sm:$0xf]
      %v228 = vld [vmem:[%s202 + $0x34] sm:$0xf]
      %v229 = vld [vmem:[%s202 + $0x38] sm:$0xf]
      %v230 = vld [vmem:[%s202 + $0x3c] sm:$0xf]
      %v231 = vunpack.c.l.bf16 %v215
      %v232 = vunpack.c.l.bf16 %v216
      %v233 = vunpack.c.l.bf16 %v217
      %v234 = vunpack.c.l.bf16 %v218
      %v235 = vunpack.c.l.bf16 %v219
      %v236 = vunpack.c.l.bf16 %v220
      %v237 = vunpack.c.l.bf16 %v221
      %v238 = vunpack.c.l.bf16 %v222
      %v239 = vunpack.c.l.bf16 %v223
      %v240 = vunpack.c.l.bf16 %v224
      %v241 = vunpack.c.l.bf16 %v225
      %v242 = vunpack.c.l.bf16 %v226
      %v243 = vunpack.c.l.bf16 %v227
      %v244 = vunpack.c.l.bf16 %v228
      %v245 = vunpack.c.l.bf16 %v229
      %v246 = vunpack.c.l.bf16 %v230
      %v247 = vld [vmem:[%s1] sm:$0x1]
      %v249 = vperm.slane %v247, 0
      %v251 = vmul.f32 %v231, %v249
      %v252 = vmul.f32 %v232, %v249
      %v253 = vmul.f32 %v233, %v249
      %v254 = vmul.f32 %v234, %v249
      %v255 = vmul.f32 %v235, %v249
      %v256 = vmul.f32 %v236, %v249
      %v257 = vmul.f32 %v237, %v249
      %v258 = vmul.f32 %v238, %v249
      %v259 = vmul.f32 %v239, %v249
      %v260 = vmul.f32 %v240, %v249
      %v261 = vmul.f32 %v241, %v249
      %v262 = vmul.f32 %v242, %v249
      %v263 = vmul.f32 %v243, %v249
      %v264 = vmul.f32 %v244, %v249
      %v265 = vmul.f32 %v245, %v249
      %v266 = vmul.f32 %v246, %v249
      %v267 = vld [vmem:[%s2] sm:$0x1]
      %v269 = vperm.slane %v267, 0
      %v271 = vadd.f32 %v251, %v269
      %v272 = vadd.f32 %v252, %v269
      %v273 = vadd.f32 %v253, %v269
      %v274 = vadd.f32 %v254, %v269
      %v275 = vadd.f32 %v255, %v269
      %v276 = vadd.f32 %v256, %v269
      %v277 = vadd.f32 %v257, %v269
      %v278 = vadd.f32 %v258, %v269
      %v279 = vadd.f32 %v259, %v269
      %v280 = vadd.f32 %v260, %v269
      %v281 = vadd.f32 %v261, %v269
      %v282 = vadd.f32 %v262, %v269
      %v283 = vadd.f32 %v263, %v269
      %v284 = vadd.f32 %v264, %v269
      %v285 = vadd.f32 %v265, %v269
      %v286 = vadd.f32 %v266, %v269
      %v287 = vmax.f32 %v271, 0.0
      %v288 = vmax.f32 %v272, 0.0
      %v289 = vmax.f32 %v273, 0.0
      %v290 = vmax.f32 %v274, 0.0
      %v291 = vmax.f32 %v275, 0.0
      %v292 = vmax.f32 %v276, 0.0
      %v293 = vmax.f32 %v277, 0.0
      %v294 = vmax.f32 %v278, 0.0
      %v295 = vmax.f32 %v279, 0.0
      %v296 = vmax.f32 %v280, 0.0
      %v297 = vmax.f32 %v281, 0.0
      %v298 = vmax.f32 %v282, 0.0
      %v299 = vmax.f32 %v283, 0.0
      %v300 = vmax.f32 %v284, 0.0
      %v301 = vmax.f32 %v285, 0.0
      %v302 = vmax.f32 %v286, 0.0
      %v303 = vpack.c.bf16 %v287, %v287
      %v304 = vpack.c.bf16 %v288, %v288
      %v305 = vpack.c.bf16 %v289, %v289
      %v306 = vpack.c.bf16 %v290, %v290
      %v307 = vpack.c.bf16 %v291, %v291
      %v308 = vpack.c.bf16 %v292, %v292
      %v309 = vpack.c.bf16 %v293, %v293
      %v310 = vpack.c.bf16 %v294, %v294
      %v311 = vpack.c.bf16 %v295, %v295
      %v312 = vpack.c.bf16 %v296, %v296
      %v313 = vpack.c.bf16 %v297, %v297
      %v314 = vpack.c.bf16 %v298, %v298
      %v315 = vpack.c.bf16 %v299, %v299
      %v316 = vpack.c.bf16 %v300, %v300
      %v317 = vpack.c.bf16 %v301, %v301
      %v318 = vpack.c.bf16 %v302, %v302
      %319 = vst [vmem:[%s213] sm:$0xf] %v303
      %320 = vst [vmem:[%s213 + $0x4] sm:$0xf] %v304
      %321 = vst [vmem:[%s213 + $0x8] sm:$0xf] %v305
      %322 = vst [vmem:[%s213 + $0xc] sm:$0xf] %v306
      %323 = vst [vmem:[%s213 + $0x10] sm:$0xf] %v307
      %324 = vst [vmem:[%s213 + $0x14] sm:$0xf] %v308
      %325 = vst [vmem:[%s213 + $0x18] sm:$0xf] %v309
      %326 = vst [vmem:[%s213 + $0x1c] sm:$0xf] %v310
      %327 = vst [vmem:[%s213 + $0x20] sm:$0xf] %v311
      %328 = vst [vmem:[%s213 + $0x24] sm:$0xf] %v312
      %329 = vst [vmem:[%s213 + $0x28] sm:$0xf] %v313
      %330 = vst [vmem:[%s213 + $0x2c] sm:$0xf] %v314
      %331 = vst [vmem:[%s213 + $0x30] sm:$0xf] %v315
      %332 = vst [vmem:[%s213 + $0x34] sm:$0xf] %v316
      %333 = vst [vmem:[%s213 + $0x38] sm:$0xf] %v317
      %334 = vst [vmem:[%s213 + $0x3c] sm:$0xf] %v318
      %s335 = smul.u32 8, %s19
      %p336 = scmp.lt.s32.totalorder %s18, 1
      %s337 = scalar_select %p336, %s18, 1
      %p338 = scmp.lt.s32.totalorder %s335, 15
      %s339 = scalar_select %p338, %s335, 15
      %s340 = smul.addr %s339, 2
      %s341 = smul.addr %s337, 32
      %s342 = sadd.s32 %s340, %s341
      %s343 = smul.addr %s342, 4
      %s344 = scalar_lea.vmem %s3, %s343
      // Predicated region
      $region33: #{conv_block.5} parent=31 // pred_check
        %p345 = pneg %p116
      $region34: #{conv_block.5} parent=31 // pred_check_branch
        %347 = sbr.rel (%p345) target = $region36
      $region35: #{conv_block.5} parent=31 // pred_region
        %s348 = smul.u32 8, %s19
      $region36: #{conv_block.5} parent=31 // pred_fallthru
        _
    $region32: #{conv_block.5} parent=5 // pred_fallthru
      _
    %p349 = scmp.le.s32.totalorder 2, %s9
    // Predicated region
    $region37: #{conv_block.5} parent=5 // pred_check
      %p350 = pneg %p349
    $region38: #{conv_block.5} parent=5 // pred_check_branch
      %352 = sbr.rel (%p350) target = $region40
    $region39: #{conv_block.5} parent=5 // pred_region
      %s353 = ssub.s32 %s9, 2
      // Predicated region
      $region41: #{conv_block.5} parent=39 // pred_check
        %p354 = pneg %p122
      $region42: #{conv_block.5} parent=39 // pred_check_branch
        %356 = sbr.rel (%p354) target = $region44
      $region43: #{conv_block.5} parent=39 // pred_region
        %s357 = smul.u32 8, %s21
        %p358 = scmp.lt.s32.totalorder %s20, 1
        %s359 = scalar_select %p358, %s20, 1
        %p360 = scmp.lt.s32.totalorder %s357, 15
        %s361 = scalar_select %p360, %s357, 15
        %s362 = smul.addr %s361, 2
        %s363 = smul.addr %s359, 32
        %s364 = sadd.s32 %s362, %s363
        %s365 = smul.addr %s364, 4
        %s366 = scalar_lea.vmem %s3, %s365
      $region44: #{conv_block.5} parent=39 // pred_fallthru
        _
    $region40: #{conv_block.5} parent=5 // pred_fallthru
      _
  $region6: #{conv_block.5} parent=0 // loop_footer
    %s13 = sadd.s32 1, %s9
  $region7: #{conv_block.5} parent=0 // loop_footer_branch
    %8 = sbr.rel target = $region3
  $region8: #{conv_block.5} parent=0 // loop_exit
    _

// kernel: conv_block.3
$region0: #{conv_block.3}
  #allocation0 [shape = 'u32[]', space=smem, size = 0x4, offset = 0x4, fixed_abs, tag = 'smem constant byte address 0x4 - core index']
  #allocation1 [shape = 'u32[72,128]{1,0:T(1,128)}', space=vmem, size = 0x9000, scoped, tag = 'internal scratch']
  #allocation2 [shape = 'bf16[10,18,128]{2,1,0:T(8,128)(2,1)}', space=vmem, size = 0xf000, scoped, tag = 'scratch operand']
  %s0 = inlined_call_operand.vmem [shape: bf16[2,16,16,128], index: 0, kind: input, shape index: {}, may-alias: {0,1,2}]
  %s1 = inlined_call_operand.vmem [shape: bf16[2,16,16,128], index: 1, kind: input, shape index: {}, may-alias: {0,1,2}]
  %s2 = inlined_call_operand.vmem [shape: bf16[2,16,16,128], index: 2, kind: input, shape index: {}, may-alias: {0,1,2}]
  %s3 = inlined_call_operand.vmem [shape: f32[1,128], index: 3, kind: input, shape index: {}]
  %s4 = inlined_call_operand.vmem [shape: f32[1,128], index: 4, kind: input, shape index: {}]
  %s5 = inlined_call_operand.vmem [shape: bf16[1152,128], index: 5, kind: input, shape index: {}]
  %s6 = inlined_call_operand.vmem [shape: f32[1,128], index: 6, kind: input, shape index: {}]
  %s7 = inlined_call_operand.vmem [shape: bf16[2,16,16,128], index: 7, kind: output, shape index: {0}]
  %s8 = inlined_call_operand.vmem [shape: f32[4,1,128], index: 8, kind: output, shape index: {1}]
  %s9 = inlined_call_operand.vmem [shape: f32[4,1,128], index: 9, kind: output, shape index: {2}]
  %10 = xla_tuple %s7, %s8, %s9
  %s11 = sld [smem:[#allocation0]]
  $region85: #{conv_block.3} parent=0
    _
  %s13 = ssub.s32 1, %s11
  %s14 = scalar_select 0, %s13, %s11
  loop: start=0, step=1, limit=6
  $region2: #{conv_block.3} parent=0 // loop_pre_header
    _
  $region3: #{conv_block.3} parent=0 // loop_header
    %s16 = sphi 0, %s20
    %p17 = scmp.ge.s32.totalorder %s16, 6
    %s23 = sphi 0, %s42
    %s24 = sphi 0, %s38
    %s25 = sphi 0, %s34
    %s26 = sphi 0, %s23
    %s27 = sphi 0, %s24
    %s28 = sphi 0, %s25
    %s29 = sphi 0, %s26
    %s30 = sphi 0, %s27
    %s31 = sphi 0, %s28
    %s47 = sphi 0, %s49
    %s50 = sphi 0, %s47
    %s51 = sphi 0, %s50
    %s67 = sphi 0, %s51
    %s83 = sphi 0, %s85
    %s86 = sphi 0, %s83
    %s87 = sphi 0, %s86
    %s103 = sphi 0, %s87
    %s119 = sphi 0, %s121
    %s122 = sphi 0, %s119
    %s123 = sphi 0, %s122
    %s139 = sphi 0, %s123
    %s143 = sphi 0, %s143
    %s145 = sphi 0, %s143
    %s146 = sphi 0, %s145
    %s160 = sphi 0, %s146
    %s164 = sphi 0, %s164
    %s166 = sphi 0, %s164
    %s167 = sphi 0, %s166
    %s181 = sphi 0, %s167
    %s187 = sphi 0, %s189
    %s190 = sphi 0, %s187
    %s191 = sphi 0, %s190
    %s207 = sphi 0, %s191
    %s213 = sphi 0, %s215
    %s216 = sphi 0, %s213
    %s217 = sphi 0, %s216
    %s233 = sphi 0, %s217
    %s243 = sphi 0, %s245
    %s246 = sphi 0, %s243
    %s247 = sphi 0, %s246
    %s263 = sphi 0, %s247
    %s275 = sphi 0, %s277
    %s278 = sphi 0, %s275
    %s279 = sphi 0, %s278
    %s295 = sphi 0, %s279
    %s307 = sphi 0, %s309
    %s310 = sphi 0, %s307
    %s311 = sphi 0, %s310
    %s327 = sphi 0, %s311
  $region4: #{conv_block.3} parent=0 // loop_header_branch
    %19 = sbr.rel (%p17) target = $region8
  $region5: #{conv_block.3} parent=0 // loop_body
    %s21 = ssub.s32 %s16, 1
    %s22 = ssub.s32 %s16, 2
    %s32 = sadd.s32 1, %s25
    %p33 = scmp.ge.s32.totalorder %s32, 1
    %s34 = scalar_select %p33, 0, %s32
    %s35 = sadd.s32 1, %s24
    %s36 = scalar_select %p33, %s35, %s24
    %p37 = scmp.ge.s32.totalorder %s36, 2
    %s38 = scalar_select %p37, 0, %s36
    %s39 = sadd.s32 1, %s23
    %s40 = scalar_select %p37, %s39, %s23
    %p41 = scmp.ge.s32.totalorder %s40, 2
    %s42 = scalar_select %p41, 0, %s40
    %s43 = ssub.s32 %s23, %s42
    %s44 = ssub.s32 %s24, %s38
    %s45 = sor.u32 %s43, %s44
    %p46 = scmp.eq.s32.totalorder %s45, 0
    %s48 = sadd.s32 %s47, 1
    %s49 = scalar_select %p46, %s47, %s48
    %p52 = pneg %p46
    %p53 = scmp.eq.s32.totalorder %s16, 3
    %p54 = por %p52, %p53
    %p55 = scmp.ne.s32.totalorder %s47, %s50
    %p56 = scmp.eq.s32.totalorder %s16, 0
    %p57 = por %p55, %p56
    %p58 = scmp.ne.s32.totalorder %s47, %s50
    %p59 = scmp.eq.s32.totalorder %s21, 3
    %p60 = por %p58, %p59
    %p61 = scmp.ne.s32.totalorder %s50, %s51
    %p62 = scmp.eq.s32.totalorder %s21, 0
    %p63 = por %p61, %p62
    %p64 = scmp.ne.s32.totalorder %s50, %s51
    %p65 = scmp.eq.s32.totalorder %s22, 3
    %p66 = por %p64, %p65
    %p68 = scmp.ne.s32.totalorder %s51, %s67
    %p69 = scmp.eq.s32.totalorder %s22, 0
    %p70 = por %p68, %p69
    %s71 = smul.u32 %s24, 8
    %s72 = ssub.s32 %s71, 1
    %p73 = scmp.gt.s32.totalorder %s72, 0
    %s74 = scalar_select %p73, %s72, 0
    %s75 = smul.u32 %s38, 8
    %s76 = ssub.s32 %s75, 1
    %p77 = scmp.gt.s32.totalorder %s76, 0
    %s78 = scalar_select %p77, %s76, 0
    %s79 = ssub.s32 %s23, %s42
    %s80 = ssub.s32 %s74, %s78
    %s81 = sor.u32 %s79, %s80
    %p82 = scmp.eq.s32.totalorder %s81, 0
    %s84 = sadd.s32 %s83, 1
    %s85 = scalar_select %p82, %s83, %s84
    %p88 = pneg %p82
    %p89 = scmp.eq.s32.totalorder %s16, 3
    %p90 = por %p88, %p89
    %p91 = scmp.ne.s32.totalorder %s83, %s86
    %p92 = scmp.eq.s32.totalorder %s16, 0
    %p93 = por %p91, %p92
    %p94 = scmp.ne.s32.totalorder %s83, %s86
    %p95 = scmp.eq.s32.totalorder %s21, 3
    %p96 = por %p94, %p95
    %p97 = scmp.ne.s32.totalorder %s86, %s87
    %p98 = scmp.eq.s32.totalorder %s21, 0
    %p99 = por %p97, %p98
    %p100 = scmp.ne.s32.totalorder %s86, %s87
    %p101 = scmp.eq.s32.totalorder %s22, 3
    %p102 = por %p100, %p101
    %p104 = scmp.ne.s32.totalorder %s87, %s103
    %p105 = scmp.eq.s32.totalorder %s22, 0
    %p106 = por %p104, %p105
    %s107 = smul.u32 %s24, 8
    %s108 = sadd.s32 %s107, 8
    %p109 = scmp.lt.s32.totalorder %s108, 15
    %s110 = scalar_select %p109, %s108, 15
    %s111 = smul.u32 %s38, 8
    %s112 = sadd.s32 %s111, 8
    %p113 = scmp.lt.s32.totalorder %s112, 15
    %s114 = scalar_select %p113, %s112, 15
    %s115 = ssub.s32 %s23, %s42
    %s116 = ssub.s32 %s110, %s114
    %s117 = sor.u32 %s115, %s116
    %p118 = scmp.eq.s32.totalorder %s117, 0
    %s120 = sadd.s32 %s119, 1
    %s121 = scalar_select %p118, %s119, %s120
    %p124 = pneg %p118
    %p125 = scmp.eq.s32.totalorder %s16, 3
    %p126 = por %p124, %p125
    %p127 = scmp.ne.s32.totalorder %s119, %s122
    %p128 = scmp.eq.s32.totalorder %s16, 0
    %p129 = por %p127, %p128
    %p130 = scmp.ne.s32.totalorder %s119, %s122
    %p131 = scmp.eq.s32.totalorder %s21, 3
    %p132 = por %p130, %p131
    %p133 = scmp.ne.s32.totalorder %s122, %s123
    %p134 = scmp.eq.s32.totalorder %s21, 0
    %p135 = por %p133, %p134
    %p136 = scmp.ne.s32.totalorder %s122, %s123
    %p137 = scmp.eq.s32.totalorder %s22, 3
    %p138 = por %p136, %p137
    %p140 = scmp.ne.s32.totalorder %s123, %s139
    %p141 = scmp.eq.s32.totalorder %s22, 0
    %p142 = por %p140, %p141
    %s144 = sadd.s32 %s143, 1
    %p147 = scmp.eq.s32.totalorder %s16, 3
    %p148 = scmp.ne.s32.totalorder %s143, %s145
    %p149 = scmp.eq.s32.totalorder %s16, 0
    %p150 = por %p148, %p149
    %p151 = scmp.ne.s32.totalorder %s143, %s145
    %p152 = scmp.eq.s32.totalorder %s21, 3
    %p153 = por %p151, %p152
    %p154 = scmp.ne.s32.totalorder %s145, %s146
    %p155 = scmp.eq.s32.totalorder %s21, 0
    %p156 = por %p154, %p155
    %p157 = scmp.ne.s32.totalorder %s145, %s146
    %p158 = scmp.eq.s32.totalorder %s22, 3
    %p159 = por %p157, %p158
    %p161 = scmp.ne.s32.totalorder %s146, %s160
    %p162 = scmp.eq.s32.totalorder %s22, 0
    %p163 = por %p161, %p162
    %s165 = sadd.s32 %s164, 1
    %p168 = scmp.eq.s32.totalorder %s16, 3
    %p169 = scmp.ne.s32.totalorder %s164, %s166
    %p170 = scmp.eq.s32.totalorder %s16, 0
    %p171 = por %p169, %p170
    %p172 = scmp.ne.s32.totalorder %s164, %s166
    %p173 = scmp.eq.s32.totalorder %s21, 3
    %p174 = por %p172, %p173
    %p175 = scmp.ne.s32.totalorder %s166, %s167
    %p176 = scmp.eq.s32.totalorder %s21, 0
    %p177 = por %p175, %p176
    %p178 = scmp.ne.s32.totalorder %s166, %s167
    %p179 = scmp.eq.s32.totalorder %s22, 3
    %p180 = por %p178, %p179
    %p182 = scmp.ne.s32.totalorder %s167, %s181
    %p183 = scmp.eq.s32.totalorder %s22, 0
    %p184 = por %p182, %p183
    %s185 = ssub.s32 %s25, %s34
    %p186 = scmp.eq.s32.totalorder %s185, 0
    %s188 = sadd.s32 %s187, 1
    %s189 = scalar_select %p186, %s187, %s188
    %p192 = pneg %p186
    %p193 = scmp.eq.s32.totalorder %s16, 3
    %p194 = por %p192, %p193
    %p195 = scmp.ne.s32.totalorder %s187, %s190
    %p196 = scmp.eq.s32.totalorder %s16, 0
    %p197 = por %p195, %p196
    %p198 = scmp.ne.s32.totalorder %s187, %s190
    %p199 = scmp.eq.s32.totalorder %s21, 3
    %p200 = por %p198, %p199
    %p201 = scmp.ne.s32.totalorder %s190, %s191
    %p202 = scmp.eq.s32.totalorder %s21, 0
    %p203 = por %p201, %p202
    %p204 = scmp.ne.s32.totalorder %s190, %s191
    %p205 = scmp.eq.s32.totalorder %s22, 3
    %p206 = por %p204, %p205
    %p208 = scmp.ne.s32.totalorder %s191, %s207
    %p209 = scmp.eq.s32.totalorder %s22, 0
    %p210 = por %p208, %p209
    %s211 = ssub.s32 %s25, %s34
    %p212 = scmp.eq.s32.totalorder %s211, 0
    %s214 = sadd.s32 %s213, 1
    %s215 = scalar_select %p212, %s213, %s214
    %p218 = pneg %p212
    %p219 = scmp.eq.s32.totalorder %s16, 3
    %p220 = por %p218, %p219
    %p221 = scmp.ne.s32.totalorder %s213, %s216
    %p222 = scmp.eq.s32.totalorder %s16, 0
    %p223 = por %p221, %p222
    %p224 = scmp.ne.s32.totalorder %s213, %s216
    %p225 = scmp.eq.s32.totalorder %s21, 3
    %p226 = por %p224, %p225
    %p227 = scmp.ne.s32.totalorder %s216, %s217
    %p228 = scmp.eq.s32.totalorder %s21, 0
    %p229 = por %p227, %p228
    %p230 = scmp.ne.s32.totalorder %s216, %s217
    %p231 = scmp.eq.s32.totalorder %s22, 3
    %p232 = por %p230, %p231
    %p234 = scmp.ne.s32.totalorder %s217, %s233
    %p235 = scmp.eq.s32.totalorder %s22, 0
    %p236 = por %p234, %p235
    %s237 = ssub.s32 %s23, %s42
    %s238 = ssub.s32 %s24, %s38
    %s239 = sor.u32 %s237, %s238
    %s240 = ssub.s32 %s25, %s34
    %s241 = sor.u32 %s239, %s240
    %p242 = scmp.eq.s32.totalorder %s241, 0
    %s244 = sadd.s32 %s243, 1
    %s245 = scalar_select %p242, %s243, %s244
    %p248 = pneg %p242
    %p249 = scmp.eq.s32.totalorder %s16, 3
    %p250 = por %p248, %p249
    %p251 = scmp.ne.s32.totalorder %s243, %s246
    %p252 = scmp.eq.s32.totalorder %s16, 0
    %p253 = por %p251, %p252
    %p254 = scmp.ne.s32.totalorder %s243, %s246
    %p255 = scmp.eq.s32.totalorder %s21, 3
    %p256 = por %p254, %p255
    %p257 = scmp.ne.s32.totalorder %s246, %s247
    %p258 = scmp.eq.s32.totalorder %s21, 0
    %p259 = por %p257, %p258
    %p260 = scmp.ne.s32.totalorder %s246, %s247
    %p261 = scmp.eq.s32.totalorder %s22, 3
    %p262 = por %p260, %p261
    %p264 = scmp.ne.s32.totalorder %s247, %s263
    %p265 = scmp.eq.s32.totalorder %s22, 0
    %p266 = por %p264, %p265
    %s267 = smul.u32 %s23, 2
    %s268 = sadd.s32 %s267, %s24
    %s269 = smul.u32 %s42, 2
    %s270 = sadd.s32 %s269, %s38
    %s271 = ssub.s32 %s268, %s270
    %s272 = ssub.s32 %s25, %s34
    %s273 = sor.u32 %s271, %s272
    %p274 = scmp.eq.s32.totalorder %s273, 0
    %s276 = sadd.s32 %s275, 1
    %s277 = scalar_select %p274, %s275, %s276
    %p280 = pneg %p274
    %p281 = scmp.eq.s32.totalorder %s16, 3
    %p282 = por %p280, %p281
    %p283 = scmp.ne.s32.totalorder %s275, %s278
    %p284 = scmp.eq.s32.totalorder %s16, 0
    %p285 = por %p283, %p284
    %p286 = scmp.ne.s32.totalorder %s275, %s278
    %p287 = scmp.eq.s32.totalorder %s21, 3
    %p288 = por %p286, %p287
    %p289 = scmp.ne.s32.totalorder %s278, %s279
    %p290 = scmp.eq.s32.totalorder %s21, 0
    %p291 = por %p289, %p290
    %p292 = scmp.ne.s32.totalorder %s278, %s279
    %p293 = scmp.eq.s32.totalorder %s22, 3
    %p294 = por %p292, %p293
    %p296 = scmp.ne.s32.totalorder %s279, %s295
    %p297 = scmp.eq.s32.totalorder %s22, 0
    %p298 = por %p296, %p297
    %s299 = smul.u32 %s23, 2
    %s300 = sadd.s32 %s299, %s24
    %s301 = smul.u32 %s42, 2
    %s302 = sadd.s32 %s301, %s38
    %s303 = ssub.s32 %s300, %s302
    %s304 = ssub.s32 %s25, %s34
    %s305 = sor.u32 %s303, %s304
    %p306 = scmp.eq.s32.totalorder %s305, 0
    %s308 = sadd.s32 %s307, 1
    %s309 = scalar_select %p306, %s307, %s308
    %p312 = pneg %p306
    %p313 = scmp.eq.s32.totalorder %s16, 3
    %p314 = por %p312, %p313
    %p315 = scmp.ne.s32.totalorder %s307, %s310
    %p316 = scmp.eq.s32.totalorder %s16, 0
    %p317 = por %p315, %p316
    %p318 = scmp.ne.s32.totalorder %s307, %s310
    %p319 = scmp.eq.s32.totalorder %s21, 3
    %p320 = por %p318, %p319
    %p321 = scmp.ne.s32.totalorder %s310, %s311
    %p322 = scmp.eq.s32.totalorder %s21, 0
    %p323 = por %p321, %p322
    %p324 = scmp.ne.s32.totalorder %s310, %s311
    %p325 = scmp.eq.s32.totalorder %s22, 3
    %p326 = por %p324, %p325
    %p328 = scmp.ne.s32.totalorder %s311, %s327
    %p329 = scmp.eq.s32.totalorder %s22, 0
    %p330 = por %p328, %p329
    %p331 = scmp.le.s32.totalorder 1, %s16
    %p332 = scmp.lt.s32.totalorder %s16, 5
    %p333 = pnand %p331, %p332
    %p334 = pneg %p333
    // Predicated region
    $region9: #{conv_block.3} parent=5 // pred_check
      _
    $region10: #{conv_block.3} parent=5 // pred_check_branch
      %336 = sbr.rel (%p333) target = $region12
    $region11: #{conv_block.3} parent=5 // pred_region
      %s337 = ssub.s32 %s16, 1
      // Predicated region
      $region13: #{conv_block.3} parent=11 // pred_check
        %p338 = pneg %p156
      $region14: #{conv_block.3} parent=11 // pred_check_branch
        %340 = sbr.rel (%p338) target = $region16
      $region15: #{conv_block.3} parent=11 // pred_region
        _
      $region16: #{conv_block.3} parent=11 // pred_fallthru
        _
      // Predicated region
      $region17: #{conv_block.3} parent=11 // pred_check
        %p341 = pneg %p177
      $region18: #{conv_block.3} parent=11 // pred_check_branch
        %343 = sbr.rel (%p341) target = $region20
      $region19: #{conv_block.3} parent=11 // pred_region
        _
      $region20: #{conv_block.3} parent=11 // pred_fallthru
        _
      // Predicated region
      $region21: #{conv_block.3} parent=11 // pred_check
        %p344 = pneg %p203
      $region22: #{conv_block.3} parent=11 // pred_check_branch
        %346 = sbr.rel (%p344) target = $region24
      $region23: #{conv_block.3} parent=11 // pred_region
        %p347 = scmp.lt.s32.totalorder %s28, 0
        %s348 = scalar_select %p347, %s28, 0
        %s349 = smul.addr %s348, 4
        %s350 = scalar_lea.vmem %s5, %s349
      $region24: #{conv_block.3} parent=11 // pred_fallthru
        _
      // Predicated region
      $region25: #{conv_block.3} parent=11 // pred_check
        %p351 = pneg %p229
      $region26: #{conv_block.3} parent=11 // pred_check_branch
        %353 = sbr.rel (%p351) target = $region28
      $region27: #{conv_block.3} parent=11 // pred_region
        %p354 = scmp.lt.s32.totalorder %s28, 0
        %s355 = scalar_select %p354, %s28, 0
        %s356 = scalar_lea.vmem %s6, %s355
      $region28: #{conv_block.3} parent=11 // pred_fallthru
        _
    $region12: #{conv_block.3} parent=5 // pred_fallthru
      _
    %p357 = scmp.lt.s32.totalorder %s16, 4
    // Predicated region
    $region29: #{conv_block.3} parent=5 // pred_check
      %p358 = pneg %p357
    $region30: #{conv_block.3} parent=5 // pred_check_branch
      %360 = sbr.rel (%p358) target = $region32
    $region31: #{conv_block.3} parent=5 // pred_region
      // Predicated region
      $region33: #{conv_block.3} parent=31 // pred_check
        %p361 = pneg %p57
      $region34: #{conv_block.3} parent=31 // pred_check_branch
        %363 = sbr.rel (%p361) target = $region36
      $region35: #{conv_block.3} parent=31 // pred_region
        %s364 = smul.u32 8, %s24
        %p365 = scmp.lt.s32.totalorder %s23, 1
        %s366 = scalar_select %p365, %s23, 1
        %p367 = scmp.lt.s32.totalorder %s364, 15
        %s368 = scalar_select %p367, %s364, 15
        %s369 = smul.addr %s368, 2
        %s370 = smul.addr %s366, 32
        %s371 = sadd.s32 %s369, %s370
        %s372 = smul.addr %s371, 4
        %s373 = scalar_lea.vmem %s0, %s372
        %s374 = smul.u32 8, %s24
      $region36: #{conv_block.3} parent=31 // pred_fallthru
        _
      // Predicated region
      $region37: #{conv_block.3} parent=31 // pred_check
        %p375 = pneg %p93
      $region38: #{conv_block.3} parent=31 // pred_check_branch
        %377 = sbr.rel (%p375) target = $region40
      $region39: #{conv_block.3} parent=31 // pred_region
        %s378 = smul.u32 %s24, 8
        %s379 = ssub.s32 %s378, 1
        %p380 = scmp.gt.s32.totalorder %s379, 0
        %s381 = scalar_select %p380, %s379, 0
        %p382 = scmp.lt.s32.totalorder %s23, 1
        %s383 = scalar_select %p382, %s23, 1
        %p384 = scmp.lt.s32.totalorder %s381, 15
        %s385 = scalar_select %p384, %s381, 15
        %s386 = smul.addr %s385, 2
        %s387 = smul.addr %s383, 32
        %s388 = sadd.s32 %s386, %s387
        %s389 = smul.addr %s388, 4
        %s390 = scalar_lea.vmem %s1, %s389
        %s391 = smul.u32 %s24, 8
        %s392 = ssub.s32 %s391, 1
        %p393 = scmp.gt.s32.totalorder %s392, 0
        %s394 = scalar_select %p393, %s392, 0
      $region40: #{conv_block.3} parent=31 // pred_fallthru
        _
      // Predicated region
      $region41: #{conv_block.3} parent=31 // pred_check
        %p395 = pneg %p129
      $region42: #{conv_block.3} parent=31 // pred_check_branch
        %397 = sbr.rel (%p395) target = $region44
      $region43: #{conv_block.3} parent=31 // pred_region
        %s398 = smul.u32 %s24, 8
        %s399 = sadd.s32 %s398, 8
        %p400 = scmp.lt.s32.totalorder %s399, 15
        %s401 = scalar_select %p400, %s399, 15
        %p402 = scmp.lt.s32.totalorder %s23, 1
        %s403 = scalar_select %p402, %s23, 1
        %p404 = scmp.lt.s32.totalorder %s401, 15
        %s405 = scalar_select %p404, %s401, 15
        %s406 = smul.addr %s405, 2
        %s407 = smul.addr %s403, 32
        %s408 = sadd.s32 %s406, %s407
        %s409 = smul.addr %s408, 4
        %s410 = scalar_lea.vmem %s2, %s409
        %s411 = smul.u32 %s24, 8
        %s412 = sadd.s32 %s411, 8
        %p413 = scmp.lt.s32.totalorder %s412, 15
        %s414 = scalar_select %p413, %s412, 15
      $region44: #{conv_block.3} parent=31 // pred_fallthru
        _
    $region32: #{conv_block.3} parent=5 // pred_fallthru
      _
    %p415 = scmp.le.s32.totalorder 1, %s16
    %p416 = scmp.lt.s32.totalorder %s16, 5
    %p417 = pnand %p415, %p416
    %p418 = pneg %p417
    // Predicated region
    $region45: #{conv_block.3} parent=5 // pred_check
      _
    $region46: #{conv_block.3} parent=5 // pred_check_branch
      %420 = sbr.rel (%p417) target = $region48
    $region47: #{conv_block.3} parent=5 // pred_region
      %s421 = ssub.s32 %s16, 1
      %s422 = smul.u32 8, %s27
      %p423 = scmp.lt.s32.totalorder %s26, 1
      %s424 = scalar_select %p423, %s26, 1
      %p425 = scmp.lt.s32.totalorder %s422, 15
      %s426 = scalar_select %p425, %s422, 15
      %s427 = smul.addr %s426, 2
      %s428 = smul.addr %s424, 32
      %s429 = sadd.s32 %s427, %s428
      %s430 = smul.addr %s429, 4
      %s431 = scalar_lea.vmem %s0, %s430
      %p432 = pneg %p63
      %p433 = pneg %p60
      %s434 = smul.u32 %s27, 8
      %s435 = ssub.s32 %s434, 1
      %p436 = scmp.gt.s32.totalorder %s435, 0
      %s437 = scalar_select %p436, %s435, 0
      %p438 = scmp.lt.s32.totalorder %s26, 1
      %s439 = scalar_select %p438, %s26, 1
      %p440 = scmp.lt.s32.totalorder %s437, 15
      %s441 = scalar_select %p440, %s437, 15
      %s442 = smul.addr %s441, 2
      %s443 = smul.addr %s439, 32
      %s444 = sadd.s32 %s442, %s443
      %s445 = smul.addr %s444, 4
      %s446 = scalar_lea.vmem %s1, %s445
      %p447 = pneg %p99
      %p448 = pneg %p96
      %s449 = smul.u32 %s27, 8
      %s450 = sadd.s32 %s449, 8
      %p451 = scmp.lt.s32.totalorder %s450, 15
      %s452 = scalar_select %p451, %s450, 15
      %p453 = scmp.lt.s32.totalorder %s26, 1
      %s454 = scalar_select %p453, %s26, 1
      %p455 = scmp.lt.s32.totalorder %s452, 15
      %s456 = scalar_select %p455, %s452, 15
      %s457 = smul.addr %s456, 2
      %s458 = smul.addr %s454, 32
      %s459 = sadd.s32 %s457, %s458
      %s460 = smul.addr %s459, 4
      %s461 = scalar_lea.vmem %s2, %s460
      %p462 = pneg %p135
      %p463 = pneg %p132
      %p464 = pneg %p156
      %p465 = pneg %p153
      %p466 = pneg %p177
      %p467 = pneg %p174
      %p468 = scmp.lt.s32.totalorder %s28, 0
      %s469 = scalar_select %p468, %s28, 0
      %s470 = smul.addr %s469, 4
      %s471 = scalar_lea.vmem %s5, %s470
      %p472 = pneg %p203
      %p473 = pneg %p200
      %p474 = scmp.lt.s32.totalorder %s28, 0
      %s475 = scalar_select %p474, %s28, 0
      %s476 = scalar_lea.vmem %s6, %s475
      %p477 = pneg %p229
      %p478 = pneg %p226
      %p479 = pneg %p259
      %p480 = pneg %p256
      %s481 = smul.u32 8, %s27
      %p482 = scmp.lt.s32.totalorder %s26, 1
      %s483 = scalar_select %p482, %s26, 1
      %p484 = scmp.lt.s32.totalorder %s481, 15
      %s485 = scalar_select %p484, %s481, 15
      %p486 = scmp.lt.s32.totalorder %s28, 0
      %s487 = scalar_select %p486, %s28, 0
      %s488 = smul.addr %s485, 2
      %s489 = sadd.s32 %s487, %s488
      %s490 = smul.addr %s483, 32
      %s491 = sadd.s32 %s489, %s490
      %s492 = smul.addr %s491, 4
      %s493 = scalar_lea.vmem %s7, %s492
      %p494 = pneg %p291
      %p495 = pneg %p288
      %s496 = smul.u32 %s26, 2
      %s497 = sadd.s32 %s496, %s27
      %p498 = scmp.lt.s32.totalorder %s497, 3
      %s499 = scalar_select %p498, %s497, 3
      %p500 = scmp.lt.s32.totalorder %s28, 0
      %s501 = scalar_select %p500, %s28, 0
      %s502 = sadd.s32 %s501, %s499
      %s503 = scalar_lea.vmem %s8, %s502
      %p504 = pneg %p323
      %p505 = pneg %p320
      %s506 = smul.u32 %s26, 2
      %s507 = sadd.s32 %s506, %s27
      %p508 = scmp.lt.s32.totalorder %s507, 3
      %s509 = scalar_select %p508, %s507, 3
      %p510 = scmp.lt.s32.totalorder %s28, 0
      %s511 = scalar_select %p510, %s28, 0
      %s512 = sadd.s32 %s511, %s509
      %s513 = scalar_lea.vmem %s9, %s512
      %s514 = smul.u32 8, %s27
      %p515 = scmp.lt.s32.totalorder %s26, 1
      %s516 = scalar_select %p515, %s26, 1
      %p517 = scmp.lt.s32.totalorder %s514, 15
      %s518 = scalar_select %p517, %s514, 15
      %s519 = smul.addr %s518, 2
      %s520 = smul.addr %s516, 32
      %s521 = sadd.s32 %s519, %s520
      %s522 = smul.addr %s521, 4
      %s523 = scalar_lea.vmem %s0, %s522
      %s524 = smul.u32 8, %s27
      %s525 = smul.u32 %s27, 8
      %s526 = ssub.s32 %s525, 1
      %p527 = scmp.gt.s32.totalorder %s526, 0
      %s528 = scalar_select %p527, %s526, 0
      %p529 = scmp.lt.s32.totalorder %s26, 1
      %s530 = scalar_select %p529, %s26, 1
      %p531 = scmp.lt.s32.totalorder %s528, 15
      %s532 = scalar_select %p531, %s528, 15
      %s533 = smul.addr %s532, 2
      %s534 = smul.addr %s530, 32
      %s535 = sadd.s32 %s533, %s534
      %s536 = smul.addr %s535, 4
      %s537 = scalar_lea.vmem %s1, %s536
      %s538 = smul.u32 %s27, 8
      %s539 = ssub.s32 %s538, 1
      %p540 = scmp.gt.s32.totalorder %s539, 0
      %s541 = scalar_select %p540, %s539, 0
      %s542 = smul.u32 %s27, 8
      %s543 = sadd.s32 %s542, 8
      %p544 = scmp.lt.s32.totalorder %s543, 15
      %s545 = scalar_select %p544, %s543, 15
      %p546 = scmp.lt.s32.totalorder %s26, 1
      %s547 = scalar_select %p546, %s26, 1
      %p548 = scmp.lt.s32.totalorder %s545, 15
      %s549 = scalar_select %p548, %s545, 15
      %s550 = smul.addr %s549, 2
      %s551 = smul.addr %s547, 32
      %s552 = sadd.s32 %s550, %s551
      %s553 = smul.addr %s552, 4
      %s554 = scalar_lea.vmem %s2, %s553
      %s555 = smul.u32 %s27, 8
      %s556 = sadd.s32 %s555, 8
      %p557 = scmp.lt.s32.totalorder %s556, 15
      %s558 = scalar_select %p557, %s556, 15
      %p559 = scmp.lt.s32.totalorder %s28, 0
      %s560 = scalar_select %p559, %s28, 0
      %s561 = smul.addr %s560, 4
      %s562 = scalar_lea.vmem %s5, %s561
      %p563 = scmp.lt.s32.totalorder %s28, 0
      %s564 = scalar_select %p563, %s28, 0
      %s565 = scalar_lea.vmem %s6, %s564
      %s566 = smul.u32 8, %s27
      %p567 = scmp.lt.s32.totalorder %s26, 1
      %s568 = scalar_select %p567, %s26, 1
      %p569 = scmp.lt.s32.totalorder %s566, 15
      %s570 = scalar_select %p569, %s566, 15
      %p571 = scmp.lt.s32.totalorder %s28, 0
      %s572 = scalar_select %p571, %s28, 0
      %s573 = smul.addr %s570, 2
      %s574 = sadd.s32 %s572, %s573
      %s575 = smul.addr %s568, 32
      %s576 = sadd.s32 %s574, %s575
      %s577 = smul.addr %s576, 4
      %s578 = scalar_lea.vmem %s7, %s577
      %s579 = smul.u32 8, %s27
      %s580 = smul.u32 %s26, 2
      %s581 = sadd.s32 %s580, %s27
      %p582 = scmp.lt.s32.totalorder %s581, 3
      %s583 = scalar_select %p582, %s581, 3
      %p584 = scmp.lt.s32.totalorder %s28, 0
      %s585 = scalar_select %p584, %s28, 0
      %s586 = sadd.s32 %s585, %s583
      %s587 = scalar_lea.vmem %s8, %s586
      %s588 = smul.u32 %s26, 2
      %s589 = sadd.s32 %s588, %s27
      %s590 = smul.u32 %s26, 2
      %s591 = sadd.s32 %s590, %s27
      %p592 = scmp.lt.s32.totalorder %s591, 3
      %s593 = scalar_select %p592, %s591, 3
      %p594 = scmp.lt.s32.totalorder %s28, 0
      %s595 = scalar_select %p594, %s28, 0
      %s596 = sadd.s32 %s595, %s593
      %s597 = scalar_lea.vmem %s9, %s596
      %s598 = smul.u32 %s26, 2
      %s599 = sadd.s32 %s598, %s27
      %601 = vst [vmem:[#allocation2] sm:$0xf] 0
      %602 = vst [vmem:[#allocation2 + $0x4] sm:$0xf] 0
      %603 = vst [vmem:[#allocation2 + $0x8] sm:$0x1] 0
      %604 = vst [vmem:[#allocation2 + $0xc] sm:$0xf] 0
      %605 = vst [vmem:[#allocation2 + $0x10] sm:$0xf] 0
      %606 = vst [vmem:[#allocation2 + $0x14] sm:$0x1] 0
      %607 = vst [vmem:[#allocation2 + $0x18] sm:$0xf] 0
      %608 = vst [vmem:[#allocation2 + $0x1c] sm:$0xf] 0
      %609 = vst [vmem:[#allocation2 + $0x20] sm:$0x1] 0
      %610 = vst [vmem:[#allocation2 + $0x24] sm:$0xf] 0
      %611 = vst [vmem:[#allocation2 + $0x28] sm:$0xf] 0
      %612 = vst [vmem:[#allocation2 + $0x2c] sm:$0x1] 0
      %613 = vst [vmem:[#allocation2 + $0x30] sm:$0xf] 0
      %614 = vst [vmem:[#allocation2 + $0x34] sm:$0xf] 0
      %615 = vst [vmem:[#allocation2 + $0x38] sm:$0x1] 0
      %616 = vst [vmem:[#allocation2 + $0x3c] sm:$0xf] 0
      %617 = vst [vmem:[#allocation2 + $0x40] sm:$0xf] 0
      %618 = vst [vmem:[#allocation2 + $0x44] sm:$0x1] 0
      %619 = vst [vmem:[#allocation2 + $0x48] sm:$0xf] 0
      %620 = vst [vmem:[#allocation2 + $0x4c] sm:$0xf] 0
      %621 = vst [vmem:[#allocation2 + $0x50] sm:$0x1] 0
      %622 = vst [vmem:[#allocation2 + $0x54] sm:$0xf] 0
      %623 = vst [vmem:[#allocation2 + $0x58] sm:$0xf] 0
      %624 = vst [vmem:[#allocation2 + $0x5c] sm:$0x1] 0
      %625 = vst [vmem:[#allocation2 + $0x60] sm:$0xf] 0
      %626 = vst [vmem:[#allocation2 + $0x64] sm:$0xf] 0
      %627 = vst [vmem:[#allocation2 + $0x68] sm:$0x1] 0
      %628 = vst [vmem:[#allocation2 + $0x6c] sm:$0xf] 0
      %629 = vst [vmem:[#allocation2 + $0x70] sm:$0xf] 0
      %630 = vst [vmem:[#allocation2 + $0x74] sm:$0x1] 0
      %v631 = vld [vmem:[%s523] sm:$0xf]
      %v632 = vld [vmem:[%s523 + $0x4] sm:$0xf]
      %v633 = vld [vmem:[%s523 + $0x8] sm:$0xf]
      %v634 = vld [vmem:[%s523 + $0xc] sm:$0xf]
      %v635 = vld [vmem:[%s523 + $0x10] sm:$0xf]
      %v636 = vld [vmem:[%s523 + $0x14] sm:$0xf]
      %v637 = vld [vmem:[%s523 + $0x18] sm:$0xf]
      %v638 = vld [vmem:[%s523 + $0x1c] sm:$0xf]
      %v639 = vld [vmem:[%s523 + $0x20] sm:$0xf]
      %v640 = vld [vmem:[%s523 + $0x24] sm:$0xf]
      %v641 = vld [vmem:[%s523 + $0x28] sm:$0xf]
      %v642 = vld [vmem:[%s523 + $0x2c] sm:$0xf]
      %v643 = vld [vmem:[%s523 + $0x30] sm:$0xf]
      %v644 = vld [vmem:[%s523 + $0x34] sm:$0xf]
      %v645 = vld [vmem:[%s523 + $0x38] sm:$0xf]
      %v646 = vld [vmem:[%s523 + $0x3c] sm:$0xf]
      %vm647 = vsmask.f32 256
      %vm648 = vsmask.f32 4368
      %vm649 = vmor %vm647, %vm648
      %v651 = vshrl.u32 %v631, 16
      %v653 = vrot.slane %v651, 7
      %v654 = vshll.u32 %v631, 16
      %v656 = vor.u32 %v653, %v654
      %v657 = vrot.slane %v653, 4
      %v659 = vshrl.u32 %v632, 16
      %v661 = vrot.slane %v659, 7
      %v662 = vshll.u32 %v632, 16
      %v664 = vor.u32 %v661, %v662
      %v665 = vsel %vm649, %v657, %v664
      %v666 = vrot.slane %v661, 4
      %v668 = vshrl.u32 %v633, 16
      %v670 = vrot.slane %v668, 7
      %v671 = vshll.u32 %v633, 16
      %v673 = vor.u32 %v670, %v671
      %v674 = vrot.slane %v670, 4
      %v676 = vshrl.u32 %v634, 16
      %v678 = vrot.slane %v676, 7
      %v679 = vshll.u32 %v634, 16
      %v681 = vor.u32 %v678, %v679
      %v682 = vsel %vm649, %v674, %v681
      %v683 = vrot.slane %v678, 4
      %v685 = vshrl.u32 %v635, 16
      %v687 = vrot.slane %v685, 7
      %v688 = vshll.u32 %v635, 16
      %v690 = vor.u32 %v687, %v688
      %v691 = vrot.slane %v687, 4
      %v693 = vshrl.u32 %v636, 16
      %v695 = vrot.slane %v693, 7
      %v696 = vshll.u32 %v636, 16
      %v698 = vor.u32 %v695, %v696
      %v699 = vsel %vm649, %v691, %v698
      %v700 = vrot.slane %v695, 4
      %v702 = vshrl.u32 %v637, 16
      %v704 = vrot.slane %v702, 7
      %v705 = vshll.u32 %v637, 16
      %v707 = vor.u32 %v704, %v705
      %v708 = vrot.slane %v704, 4
      %v710 = vshrl.u32 %v638, 16
      %v712 = vrot.slane %v710, 7
      %v713 = vshll.u32 %v638, 16
      %v715 = vor.u32 %v712, %v713
      %v716 = vsel %vm649, %v708, %v715
      %v717 = vrot.slane %v712, 4
      %v719 = vshrl.u32 %v639, 16
      %v721 = vrot.slane %v719, 7
      %v722 = vshll.u32 %v639, 16
      %v724 = vor.u32 %v721, %v722
      %v725 = vrot.slane %v721, 4
      %v727 = vshrl.u32 %v640, 16
      %v729 = vrot.slane %v727, 7
      %v730 = vshll.u32 %v640, 16
      %v732 = vor.u32 %v729, %v730
      %v733 = vsel %vm649, %v725, %v732
      %v734 = vrot.slane %v729, 4
      %v736 = vshrl.u32 %v641, 16
      %v738 = vrot.slane %v736, 7
      %v739 = vshll.u32 %v641, 16
      %v741 = vor.u32 %v738, %v739
      %v742 = vrot.slane %v738, 4
      %v744 = vshrl.u32 %v642, 16
      %v746 = vrot.slane %v744, 7
      %v747 = vshll.u32 %v642, 16
      %v749 = vor.u32 %v746, %v747
      %v750 = vsel %vm649, %v742, %v749
      %v751 = vrot.slane %v746, 4
      %v753 = vshrl.u32 %v643, 16
      %v755 = vrot.slane %v753, 7
      %v756 = vshll.u32 %v643, 16
      %v758 = vor.u32 %v755, %v756
      %v759 = vrot.slane %v755, 4
      %v761 = vshrl.u32 %v644, 16
      %v763 = vrot.slane %v761, 7
      %v764 = vshll.u32 %v644, 16
      %v766 = vor.u32 %v763, %v764
      %v767 = vsel %vm649, %v759, %v766
      %v768 = vrot.slane %v763, 4
      %v770 = vshrl.u32 %v645, 16
      %v772 = vrot.slane %v770, 7
      %v773 = vshll.u32 %v645, 16
      %v775 = vor.u32 %v772, %v773
      %v776 = vrot.slane %v772, 4
      %v778 = vshrl.u32 %v646, 16
      %v780 = vrot.slane %v778, 7
      %v781 = vshll.u32 %v646, 16
      %v783 = vor.u32 %v780, %v781
      %v784 = vsel %vm649, %v776, %v783
      %v785 = vrot.slane %v780, 4
      %s810 = scalar_lea.vmem [#allocation2], 12
      %vm811 = vcmask 1043456
      %vm812 = vsmask.f32 7938
      %vm813 = vmand %vm811, %vm812
      %v814 = vld [vmem:[%s810] sm:$0xf]
      %v815 = vsel %vm813, %v656, %v814
      %816 = vst [vmem:[%s810] sm:$0xf] %v815
      %817 = vst [vmem:[%s810 + $0x4] sm:$0xf] %v665
      %vm818 = vcmask 1040384
      %vm819 = vmand %vm818, %vm647
      %v820 = vld [vmem:[%s810 + $0x8] sm:$0x1]
      %v821 = vsel %vm819, %v666, %v820
      %822 = vst [vmem:[%s810 + $0x8] sm:$0x1] %v821
      %v823 = vld [vmem:[%s810 + $0xc] sm:$0xf]
      %v824 = vsel %vm813, %v673, %v823
      %825 = vst [vmem:[%s810 + $0xc] sm:$0xf] %v824
      %826 = vst [vmem:[%s810 + $0x10] sm:$0xf] %v682
      %v827 = vld [vmem:[%s810 + $0x14] sm:$0x1]
      %v828 = vsel %vm819, %v683, %v827
      %829 = vst [vmem:[%s810 + $0x14] sm:$0x1] %v828
      %v830 = vld [vmem:[%s810 + $0x18] sm:$0xf]
      %v831 = vsel %vm813, %v690, %v830
      %832 = vst [vmem:[%s810 + $0x18] sm:$0xf] %v831
      %833 = vst [vmem:[%s810 + $0x1c] sm:$0xf] %v699
      %v834 = vld [vmem:[%s810 + $0x20] sm:$0x1]
      %v835 = vsel %vm819, %v700, %v834
      %836 = vst [vmem:[%s810 + $0x20] sm:$0x1] %v835
      %v837 = vld [vmem:[%s810 + $0x24] sm:$0xf]
      %v838 = vsel %vm813, %v707, %v837
      %839 = vst [vmem:[%s810 + $0x24] sm:$0xf] %v838
      %840 = vst [vmem:[%s810 + $0x28] sm:$0xf] %v716
      %v841 = vld [vmem:[%s810 + $0x2c] sm:$0x1]
      %v842 = vsel %vm819, %v717, %v841
      %843 = vst [vmem:[%s810 + $0x2c] sm:$0x1] %v842
      %v844 = vld [vmem:[%s810 + $0x30] sm:$0xf]
      %v845 = vsel %vm813, %v724, %v844
      %846 = vst [vmem:[%s810 + $0x30] sm:$0xf] %v845
      %847 = vst [vmem:[%s810 + $0x34] sm:$0xf] %v733
      %v848 = vld [vmem:[%s810 + $0x38] sm:$0x1]
      %v849 = vsel %vm819, %v734, %v848
      %850 = vst [vmem:[%s810 + $0x38] sm:$0x1] %v849
      %v851 = vld [vmem:[%s810 + $0x3c] sm:$0xf]
      %v852 = vsel %vm813, %v741, %v851
      %853 = vst [vmem:[%s810 + $0x3c] sm:$0xf] %v852
      %854 = vst [vmem:[%s810 + $0x40] sm:$0xf] %v750
      %v855 = vld [vmem:[%s810 + $0x44] sm:$0x1]
      %v856 = vsel %vm819, %v751, %v855
      %857 = vst [vmem:[%s810 + $0x44] sm:$0x1] %v856
      %v858 = vld [vmem:[%s810 + $0x48] sm:$0xf]
      %v859 = vsel %vm813, %v758, %v858
      %860 = vst [vmem:[%s810 + $0x48] sm:$0xf] %v859
      %861 = vst [vmem:[%s810 + $0x4c] sm:$0xf] %v767
      %v862 = vld [vmem:[%s810 + $0x50] sm:$0x1]
      %v863 = vsel %vm819, %v768, %v862
      %864 = vst [vmem:[%s810 + $0x50] sm:$0x1] %v863
      %v865 = vld [vmem:[%s810 + $0x54] sm:$0xf]
      %v866 = vsel %vm813, %v775, %v865
      %867 = vst [vmem:[%s810 + $0x54] sm:$0xf] %v866
      %868 = vst [vmem:[%s810 + $0x58] sm:$0xf] %v784
      %v869 = vld [vmem:[%s810 + $0x5c] sm:$0x1]
      %v870 = vsel %vm819, %v785, %v869
      %871 = vst [vmem:[%s810 + $0x5c] sm:$0x1] %v870
      %p872 = scmp.gt.s32.totalorder %s27, 0
      // Predicated region
      $region49: #{conv_block.3} parent=47 // pred_check
        %p873 = pneg %p872
      $region50: #{conv_block.3} parent=47 // pred_check_branch
        %875 = sbr.rel (%p873) target = $region52
      $region51: #{conv_block.3} parent=47 // pred_region
        %v876 = vld [vmem:[%s537] sm:$0xf]
        %v877 = vld [vmem:[%s537 + $0x4] sm:$0xf]
        %v879 = vshrl.u32 %v876, 16
        %v881 = vrot.slane %v879, 7
        %v882 = vshll.u32 %v876, 16
        %v884 = vor.u32 %v881, %v882
        %v885 = vrot.slane %v881, 4
        %v887 = vshrl.u32 %v877, 16
        %v889 = vrot.slane %v887, 7
        %v890 = vshll.u32 %v877, 16
        %v892 = vor.u32 %v889, %v890
        %v893 = vsel %vm649, %v885, %v892
        %v894 = vrot.slane %v889, 4
        %v898 = vld [vmem:[#allocation2] sm:$0xf]
        %v899 = vsel %vm813, %v884, %v898
        %900 = vst [vmem:[#allocation2] sm:$0xf] %v899
        %901 = vst [vmem:[#allocation2 + $0x4] sm:$0xf] %v893
        %v902 = vld [vmem:[#allocation2 + $0x8] sm:$0x1]
        %v903 = vsel %vm819, %v894, %v902
        %904 = vst [vmem:[#allocation2 + $0x8] sm:$0x1] %v903
      $region52: #{conv_block.3} parent=47 // pred_fallthru
        _
      %p905 = scmp.lt.s32.totalorder %s27, 1
      // Predicated region
      $region53: #{conv_block.3} parent=47 // pred_check
        %p906 = pneg %p905
      $region54: #{conv_block.3} parent=47 // pred_check_branch
        %908 = sbr.rel (%p906) target = $region56
      $region55: #{conv_block.3} parent=47 // pred_region
        %v909 = vld [vmem:[%s554] sm:$0xf]
        %v910 = vld [vmem:[%s554 + $0x4] sm:$0xf]
        %v912 = vshrl.u32 %v909, 16
        %v914 = vrot.slane %v912, 7
        %v915 = vshll.u32 %v909, 16
        %v917 = vor.u32 %v914, %v915
        %v918 = vrot.slane %v914, 4
        %v920 = vshrl.u32 %v910, 16
        %v922 = vrot.slane %v920, 7
        %v923 = vshll.u32 %v910, 16
        %v925 = vor.u32 %v922, %v923
        %v926 = vsel %vm649, %v918, %v925
        %v927 = vrot.slane %v922, 4
        %s931 = scalar_lea.vmem [#allocation2], 108
        %v932 = vld [vmem:[%s931] sm:$0xf]
        %v933 = vsel %vm813, %v917, %v932
        %934 = vst [vmem:[%s931] sm:$0xf] %v933
        %935 = vst [vmem:[%s931 + $0x4] sm:$0xf] %v926
        %v936 = vld [vmem:[%s931 + $0x8] sm:$0x1]
        %v937 = vsel %vm819, %v927, %v936
        %938 = vst [vmem:[%s931 + $0x8] sm:$0x1] %v937
      $region56: #{conv_block.3} parent=47 // pred_fallthru
        _
      %v939 = vld [vmem:[#allocation2] sm:$0xf]
      %v940 = vld [vmem:[#allocation2 + $0x4] sm:$0xf]
      %v941 = vld [vmem:[#allocation2 + $0xc] sm:$0xf]
      %v942 = vld [vmem:[#allocation2 + $0x10] sm:$0xf]
      %v943 = vld [vmem:[#allocation2 + $0x18] sm:$0xf]
      %v944 = vld [vmem:[#allocation2 + $0x1c] sm:$0xf]
      %v945 = vld [vmem:[#allocation2 + $0x24] sm:$0xf]
      %v946 = vld [vmem:[#allocation2 + $0x28] sm:$0xf]
      %v947 = vld [vmem:[#allocation2 + $0x30] sm:$0xf]
      %v948 = vld [vmem:[#allocation2 + $0x34] sm:$0xf]
      %v949 = vld [vmem:[#allocation2 + $0x3c] sm:$0xf]
      %v950 = vld [vmem:[#allocation2 + $0x40] sm:$0xf]
      %v951 = vld [vmem:[#allocation2 + $0x48] sm:$0xf]
      %v952 = vld [vmem:[#allocation2 + $0x4c] sm:$0xf]
      %v953 = vld [vmem:[#allocation2 + $0x54] sm:$0xf]
      %v954 = vld [vmem:[#allocation2 + $0x58] sm:$0xf]
      %v955 = vld [vmem:[#allocation2 + $0x8] sm:$0x1]
      %v956 = vld [vmem:[#allocation2 + $0x14] sm:$0x1]
      %v957 = vld [vmem:[#allocation2 + $0x20] sm:$0x1]
      %v958 = vld [vmem:[#allocation2 + $0x2c] sm:$0x1]
      %v959 = vld [vmem:[#allocation2 + $0x38] sm:$0x1]
      %v960 = vld [vmem:[#allocation2 + $0x44] sm:$0x1]
      %v961 = vld [vmem:[#allocation2 + $0x50] sm:$0x1]
      %v962 = vld [vmem:[#allocation2 + $0x5c] sm:$0x1]
      %v963 = vld [vmem:[#allocation2] sm:$0xe]
      %v964 = vld [vmem:[#allocation2 + $0xc] sm:$0xe]
      %v965 = vld [vmem:[#allocation2 + $0x18] sm:$0xe]
      %v966 = vld [vmem:[#allocation2 + $0x24] sm:$0xe]
      %v967 = vld [vmem:[#allocation2 + $0x30] sm:$0xe]
      %v968 = vld [vmem:[#allocation2 + $0x3c] sm:$0xe]
      %v969 = vld [vmem:[#allocation2 + $0x48] sm:$0xe]
      %v970 = vld [vmem:[#allocation2 + $0x54] sm:$0xe]
      %v971 = vld [vmem:[%s810] sm:$0xf]
      %v972 = vld [vmem:[%s810 + $0x4] sm:$0xf]
      %v973 = vld [vmem:[%s810 + $0xc] sm:$0xf]
      %v974 = vld [vmem:[%s810 + $0x10] sm:$0xf]
      %v975 = vld [vmem:[%s810 + $0x18] sm:$0xf]
      %v976 = vld [vmem:[%s810 + $0x1c] sm:$0xf]
      %v977 = vld [vmem:[%s810 + $0x24] sm:$0xf]
      %v978 = vld [vmem:[%s810 + $0x28] sm:$0xf]
      %v979 = vld [vmem:[%s810 + $0x30] sm:$0xf]
      %v980 = vld [vmem:[%s810 + $0x34] sm:$0xf]
      %v981 = vld [vmem:[%s810 + $0x3c] sm:$0xf]
      %v982 = vld [vmem:[%s810 + $0x40] sm:$0xf]
      %v983 = vld [vmem:[%s810 + $0x48] sm:$0xf]
      %v984 = vld [vmem:[%s810 + $0x4c] sm:$0xf]
      %v985 = vld [vmem:[%s810 + $0x54] sm:$0xf]
      %v986 = vld [vmem:[%s810 + $0x58] sm:$0xf]
      %v987 = vld [vmem:[%s810 + $0x8] sm:$0x1]
      %v988 = vld [vmem:[%s810 + $0x14] sm:$0x1]
      %v989 = vld [vmem:[%s810 + $0x20] sm:$0x1]
      %v990 = vld [vmem:[%s810 + $0x2c] sm:$0x1]
      %v991 = vld [vmem:[%s810 + $0x38] sm:$0x1]
      %v992 = vld [vmem:[%s810 + $0x44] sm:$0x1]
      %v993 = vld [vmem:[%s810 + $0x50] sm:$0x1]
      %v994 = vld [vmem:[%s810 + $0x5c] sm:$0x1]
      %v995 = vld [vmem:[%s810] sm:$0xe]
      %v996 = vld [vmem:[%s810 + $0xc] sm:$0xe]
      %v997 = vld [vmem:[%s810 + $0x18] sm:$0xe]
      %v998 = vld [vmem:[%s810 + $0x24] sm:$0xe]
      %v999 = vld [vmem:[%s810 + $0x30] sm:$0xe]
      %v1000 = vld [vmem:[%s810 + $0x3c] sm:$0xe]
      %v1001 = vld [vmem:[%s810 + $0x48] sm:$0xe]
      %v1002 = vld [vmem:[%s810 + $0x54] sm:$0xe]
      %s1003 = scalar_lea.vmem [#allocation2], 24
      %v1004 = vld [vmem:[%s1003] sm:$0xf]
      %v1005 = vld [vmem:[%s1003 + $0x4] sm:$0xf]
      %v1006 = vld [vmem:[%s1003 + $0xc] sm:$0xf]
      %v1007 = vld [vmem:[%s1003 + $0x10] sm:$0xf]
      %v1008 = vld [vmem:[%s1003 + $0x18] sm:$0xf]
      %v1009 = vld [vmem:[%s1003 + $0x1c] sm:$0xf]
      %v1010 = vld [vmem:[%s1003 + $0x24] sm:$0xf]
      %v1011 = vld [vmem:[%s1003 + $0x28] sm:$0xf]
      %v1012 = vld [vmem:[%s1003 + $0x30] sm:$0xf]
      %v1013 = vld [vmem:[%s1003 + $0x34] sm:$0xf]
      %v1014 = vld [vmem:[%s1003 + $0x3c] sm:$0xf]
      %v1015 = vld [vmem:[%s1003 + $0x40] sm:$0xf]
      %v1016 = vld [vmem:[%s1003 + $0x48] sm:$0xf]
      %v1017 = vld [vmem:[%s1003 + $0x4c] sm:$0xf]
      %v1018 = vld [vmem:[%s1003 + $0x54] sm:$0xf]
      %v1019 = vld [vmem:[%s1003 + $0x58] sm:$0xf]
      %v1020 = vld [vmem:[%s1003 + $0x8] sm:$0x1]
      %v1021 = vld [vmem:[%s1003 + $0x14] sm:$0x1]
      %v1022 = vld [vmem:[%s1003 + $0x20] sm:$0x1]
      %v1023 = vld [vmem:[%s1003 + $0x2c] sm:$0x1]
      %v1024 = vld [vmem:[%s1003 + $0x38] sm:$0x1]
      %v1025 = vld [vmem:[%s1003 + $0x44] sm:$0x1]
      %v1026 = vld [vmem:[%s1003 + $0x50] sm:$0x1]
      %v1027 = vld [vmem:[%s1003 + $0x5c] sm:$0x1]
      %v1028 = vld [vmem:[%s1003] sm:$0xe]
      %v1029 = vld [vmem:[%s1003 + $0xc] sm:$0xe]
      %v1030 = vld [vmem:[%s1003 + $0x18] sm:$0xe]
      %v1031 = vld [vmem:[%s1003 + $0x24] sm:$0xe]
      %v1032 = vld [vmem:[%s1003 + $0x30] sm:$0xe]
      %v1033 = vld [vmem:[%s1003 + $0x3c] sm:$0xe]
      %v1034 = vld [vmem:[%s1003 + $0x48] sm:$0xe]
      %v1035 = vld [vmem:[%s1003 + $0x54] sm:$0xe]
      %v1052 = vunpack.c.l.b16 %v939
      %v1053 = vunpack.c.l.b16 %v940
      %v1054 = vunpack.c.l.b16 %v941
      %v1055 = vunpack.c.l.b16 %v942
      %v1056 = vunpack.c.l.b16 %v943
      %v1057 = vunpack.c.l.b16 %v944
      %v1058 = vunpack.c.l.b16 %v945
      %v1059 = vunpack.c.l.b16 %v946
      %v1060 = vunpack.c.l.b16 %v947
      %v1061 = vunpack.c.l.b16 %v948
      %v1062 = vunpack.c.l.b16 %v949
      %v1063 = vunpack.c.l.b16 %v950
      %v1064 = vunpack.c.l.b16 %v951
      %v1065 = vunpack.c.l.b16 %v952
      %v1066 = vunpack.c.l.b16 %v953
      %v1067 = vunpack.c.l.b16 %v954
      %v1068 = vpack.c.b16 %v1053, %v1052
      %v1069 = vpack.c.b16 %v1055, %v1054
      %v1070 = vpack.c.b16 %v1057, %v1056
      %v1071 = vpack.c.b16 %v1059, %v1058
      %v1072 = vpack.c.b16 %v1061, %v1060
      %v1073 = vpack.c.b16 %v1063, %v1062
      %v1074 = vpack.c.b16 %v1065, %v1064
      %v1075 = vpack.c.b16 %v1067, %v1066
      %v1092 = vunpack.c.l.b16 %v955
      %v1093 = vunpack.c.l.b16 %v956
      %v1094 = vunpack.c.l.b16 %v957
      %v1095 = vunpack.c.l.b16 %v958
      %v1096 = vunpack.c.l.b16 %v959
      %v1097 = vunpack.c.l.b16 %v960
      %v1098 = vunpack.c.l.b16 %v961
      %v1099 = vunpack.c.l.b16 %v962
      %v1100 = vpack.c.b16 %v1092, %v1092
      %v1101 = vpack.c.b16 %v1093, %v1093
      %v1102 = vpack.c.b16 %v1094, %v1094
      %v1103 = vpack.c.b16 %v1095, %v1095
      %v1104 = vpack.c.b16 %v1096, %v1096
      %v1105 = vpack.c.b16 %v1097, %v1097
      %v1106 = vpack.c.b16 %v1098, %v1098
      %v1107 = vpack.c.b16 %v1099, %v1099
      %vm1108 = vsmask.f32 7424
      %v1110 = vshrl.u32 %v1068, 16
      %v1112 = vshll.u32 %v1068, 16
      %v1114 = vrot.slane %v1112, 1
      %v1115 = vor.u32 %v1110, %v1114
      %v1117 = vshll.u32 %v1100, 16
      %v1119 = vrot.slane %v1117, 1
      %v1120 = vsel %vm1108, %v1115, %v1119
      %v1122 = vshrl.u32 %v1069, 16
      %v1124 = vshll.u32 %v1069, 16
      %v1126 = vrot.slane %v1124, 1
      %v1127 = vor.u32 %v1122, %v1126
      %v1129 = vshll.u32 %v1101, 16
      %v1131 = vrot.slane %v1129, 1
      %v1132 = vsel %vm1108, %v1127, %v1131
      %v1134 = vshrl.u32 %v1070, 16
      %v1136 = vshll.u32 %v1070, 16
      %v1138 = vrot.slane %v1136, 1
      %v1139 = vor.u32 %v1134, %v1138
      %v1141 = vshll.u32 %v1102, 16
      %v1143 = vrot.slane %v1141, 1
      %v1144 = vsel %vm1108, %v1139, %v1143
      %v1146 = vshrl.u32 %v1071, 16
      %v1148 = vshll.u32 %v1071, 16
      %v1150 = vrot.slane %v1148, 1
      %v1151 = vor.u32 %v1146, %v1150
      %v1153 = vshll.u32 %v1103, 16
      %v1155 = vrot.slane %v1153, 1
      %v1156 = vsel %vm1108, %v1151, %v1155
      %v1158 = vshrl.u32 %v1072, 16
      %v1160 = vshll.u32 %v1072, 16
      %v1162 = vrot.slane %v1160, 1
      %v1163 = vor.u32 %v1158, %v1162
      %v1165 = vshll.u32 %v1104, 16
      %v1167 = vrot.slane %v1165, 1
      %v1168 = vsel %vm1108, %v1163, %v1167
      %v1170 = vshrl.u32 %v1073, 16
      %v1172 = vshll.u32 %v1073, 16
      %v1174 = vrot.slane %v1172, 1
      %v1175 = vor.u32 %v1170, %v1174
      %v1177 = vshll.u32 %v1105, 16
      %v1179 = vrot.slane %v1177, 1
      %v1180 = vsel %vm1108, %v1175, %v1179
      %v1182 = vshrl.u32 %v1074, 16
      %v1184 = vshll.u32 %v1074, 16
      %v1186 = vrot.slane %v1184, 1
      %v1187 = vor.u32 %v1182, %v1186
      %v1189 = vshll.u32 %v1106, 16
      %v1191 = vrot.slane %v1189, 1
      %v1192 = vsel %vm1108, %v1187, %v1191
      %v1194 = vshrl.u32 %v1075, 16
      %v1196 = vshll.u32 %v1075, 16
      %v1198 = vrot.slane %v1196, 1
      %v1199 = vor.u32 %v1194, %v1198
      %v1201 = vshll.u32 %v1107, 16
      %v1203 = vrot.slane %v1201, 1
      %v1204 = vsel %vm1108, %v1199, %v1203
      %v1221 = vunpack.c.l.b16 %v963
      %v1222 = vunpack.c.l.b16 %v964
      %v1223 = vunpack.c.l.b16 %v965
      %v1224 = vunpack.c.l.b16 %v966
      %v1225 = vunpack.c.l.b16 %v967
      %v1226 = vunpack.c.l.b16 %v968
      %v1227 = vunpack.c.l.b16 %v969
      %v1228 = vunpack.c.l.b16 %v970
      %v1229 = vpack.c.b16 %v1053, %v1221
      %v1230 = vpack.c.b16 %v1055, %v1222
      %v1231 = vpack.c.b16 %v1057, %v1223
      %v1232 = vpack.c.b16 %v1059, %v1224
      %v1233 = vpack.c.b16 %v1061, %v1225
      %v1234 = vpack.c.b16 %v1063, %v1226
      %v1235 = vpack.c.b16 %v1065, %v1227
      %v1236 = vpack.c.b16 %v1067, %v1228
      %vm1237 = vcmask 1046528
      %v1238 = vrot.slane %v1229, 1
      %v1239 = vrot.slane %v1100, 1
      %v1240 = vsel %vm1237, %v1238, %v1239
      %v1241 = vrot.slane %v1230, 1
      %v1242 = vrot.slane %v1101, 1
      %v1243 = vsel %vm1237, %v1241, %v1242
      %v1244 = vrot.slane %v1231, 1
      %v1245 = vrot.slane %v1102, 1
      %v1246 = vsel %vm1237, %v1244, %v1245
      %v1247 = vrot.slane %v1232, 1
      %v1248 = vrot.slane %v1103, 1
      %v1249 = vsel %vm1237, %v1247, %v1248
      %v1250 = vrot.slane %v1233, 1
      %v1251 = vrot.slane %v1104, 1
      %v1252 = vsel %vm1237, %v1250, %v1251
      %v1253 = vrot.slane %v1234, 1
      %v1254 = vrot.slane %v1105, 1
      %v1255 = vsel %vm1237, %v1253, %v1254
      %v1256 = vrot.slane %v1235, 1
      %v1257 = vrot.slane %v1106, 1
      %v1258 = vsel %vm1237, %v1256, %v1257
      %v1259 = vrot.slane %v1236, 1
      %v1260 = vrot.slane %v1107, 1
      %v1261 = vsel %vm1237, %v1259, %v1260
      %v1286 = vunpack.c.l.b16 %v971
      %v1287 = vunpack.c.l.b16 %v972
      %v1288 = vunpack.c.l.b16 %v973
      %v1289 = vunpack.c.l.b16 %v974
      %v1290 = vunpack.c.l.b16 %v975
      %v1291 = vunpack.c.l.b16 %v976
      %v1292 = vunpack.c.l.b16 %v977
      %v1293 = vunpack.c.l.b16 %v978
      %v1294 = vunpack.c.l.b16 %v979
      %v1295 = vunpack.c.l.b16 %v980
      %v1296 = vunpack.c.l.b16 %v981
      %v1297 = vunpack.c.l.b16 %v982
      %v1298 = vunpack.c.l.b16 %v983
      %v1299 = vunpack.c.l.b16 %v984
      %v1300 = vunpack.c.l.b16 %v985
      %v1301 = vunpack.c.l.b16 %v986
      %v1302 = vpack.c.b16 %v1287, %v1286
      %v1303 = vpack.c.b16 %v1289, %v1288
      %v1304 = vpack.c.b16 %v1291, %v1290
      %v1305 = vpack.c.b16 %v1293, %v1292
      %v1306 = vpack.c.b16 %v1295, %v1294
      %v1307 = vpack.c.b16 %v1297, %v1296
      %v1308 = vpack.c.b16 %v1299, %v1298
      %v1309 = vpack.c.b16 %v1301, %v1300
      %v1326 = vunpack.c.l.b16 %v987
      %v1327 = vunpack.c.l.b16 %v988
      %v1328 = vunpack.c.l.b16 %v989
      %v1329 = vunpack.c.l.b16 %v990
      %v1330 = vunpack.c.l.b16 %v991
      %v1331 = vunpack.c.l.b16 %v992
      %v1332 = vunpack.c.l.b16 %v993
      %v1333 = vunpack.c.l.b16 %v994
      %v1334 = vpack.c.b16 %v1326, %v1326
      %v1335 = vpack.c.b16 %v1327, %v1327
      %v1336 = vpack.c.b16 %v1328, %v1328
      %v1337 = vpack.c.b16 %v1329, %v1329
      %v1338 = vpack.c.b16 %v1330, %v1330
      %v1339 = vpack.c.b16 %v1331, %v1331
      %v1340 = vpack.c.b16 %v1332, %v1332
      %v1341 = vpack.c.b16 %v1333, %v1333
      %v1343 = vshrl.u32 %v1302, 16
      %v1345 = vshll.u32 %v1302, 16
      %v1347 = vrot.slane %v1345, 1
      %v1348 = vor.u32 %v1343, %v1347
      %v1350 = vshll.u32 %v1334, 16
      %v1352 = vrot.slane %v1350, 1
      %v1353 = vsel %vm1108, %v1348, %v1352
      %v1355 = vshrl.u32 %v1303, 16
      %v1357 = vshll.u32 %v1303, 16
      %v1359 = vrot.slane %v1357, 1
      %v1360 = vor.u32 %v1355, %v1359
      %v1362 = vshll.u32 %v1335, 16
      %v1364 = vrot.slane %v1362, 1
      %v1365 = vsel %vm1108, %v1360, %v1364
      %v1367 = vshrl.u32 %v1304, 16
      %v1369 = vshll.u32 %v1304, 16
      %v1371 = vrot.slane %v1369, 1
      %v1372 = vor.u32 %v1367, %v1371
      %v1374 = vshll.u32 %v1336, 16
      %v1376 = vrot.slane %v1374, 1
      %v1377 = vsel %vm1108, %v1372, %v1376
      %v1379 = vshrl.u32 %v1305, 16
      %v1381 = vshll.u32 %v1305, 16
      %v1383 = vrot.slane %v1381, 1
      %v1384 = vor.u32 %v1379, %v1383
      %v1386 = vshll.u32 %v1337, 16
      %v1388 = vrot.slane %v1386, 1
      %v1389 = vsel %vm1108, %v1384, %v1388
      %v1391 = vshrl.u32 %v1306, 16
      %v1393 = vshll.u32 %v1306, 16
      %v1395 = vrot.slane %v1393, 1
      %v1396 = vor.u32 %v1391, %v1395
      %v1398 = vshll.u32 %v1338, 16
      %v1400 = vrot.slane %v1398, 1
      %v1401 = vsel %vm1108, %v1396, %v1400
      %v1403 = vshrl.u32 %v1307, 16
      %v1405 = vshll.u32 %v1307, 16
      %v1407 = vrot.slane %v1405, 1
      %v1408 = vor.u32 %v1403, %v1407
      %v1410 = vshll.u32 %v1339, 16
      %v1412 = vrot.slane %v1410, 1
      %v1413 = vsel %vm1108, %v1408, %v1412
      %v1415 = vshrl.u32 %v1308, 16
      %v1417 = vshll.u32 %v1308, 16
      %v1419 = vrot.slane %v1417, 1
      %v1420 = vor.u32 %v1415, %v1419
      %v1422 = vshll.u32 %v1340, 16
      %v1424 = vrot.slane %v1422, 1
      %v1425 = vsel %vm1108, %v1420, %v1424
      %v1427 = vshrl.u32 %v1309, 16
      %v1429 = vshll.u32 %v1309, 16
      %v1431 = vrot.slane %v1429, 1
      %v1432 = vor.u32 %v1427, %v1431
      %v1434 = vshll.u32 %v1341, 16
      %v1436 = vrot.slane %v1434, 1
      %v1437 = vsel %vm1108, %v1432, %v1436
      %v1454 = vunpack.c.l.b16 %v995
      %v1455 = vunpack.c.l.b16 %v996
      %v1456 = vunpack.c.l.b16 %v997
      %v1457 = vunpack.c.l.b16 %v998
      %v1458 = vunpack.c.l.b16 %v999
      %v1459 = vunpack.c.l.b16 %v1000
      %v1460 = vunpack.c.l.b16 %v1001
      %v1461 = vunpack.c.l.b16 %v1002
      %v1462 = vpack.c.b16 %v1287, %v1454
      %v1463 = vpack.c.b16 %v1289, %v1455
      %v1464 = vpack.c.b16 %v1291, %v1456
      %v1465 = vpack.c.b16 %v1293, %v1457
      %v1466 = vpack.c.b16 %v1295, %v1458
      %v1467 = vpack.c.b16 %v1297, %v1459
      %v1468 = vpack.c.b16 %v1299, %v1460
      %v1469 = vpack.c.b16 %v1301, %v1461
      %v1470 = vrot.slane %v1462, 1
      %v1471 = vrot.slane %v1334, 1
      %v1472 = vsel %vm1237, %v1470, %v1471
      %v1473 = vrot.slane %v1463, 1
      %v1474 = vrot.slane %v1335, 1
      %v1475 = vsel %vm1237, %v1473, %v1474
      %v1476 = vrot.slane %v1464, 1
      %v1477 = vrot.slane %v1336, 1
      %v1478 = vsel %vm1237, %v1476, %v1477
      %v1479 = vrot.slane %v1465, 1
      %v1480 = vrot.slane %v1337, 1
      %v1481 = vsel %vm1237, %v1479, %v1480
      %v1482 = vrot.slane %v1466, 1
      %v1483 = vrot.slane %v1338, 1
      %v1484 = vsel %vm1237, %v1482, %v1483
      %v1485 = vrot.slane %v1467, 1
      %v1486 = vrot.slane %v1339, 1
      %v1487 = vsel %vm1237, %v1485, %v1486
      %v1488 = vrot.slane %v1468, 1
      %v1489 = vrot.slane %v1340, 1
      %v1490 = vsel %vm1237, %v1488, %v1489
      %v1491 = vrot.slane %v1469, 1
      %v1492 = vrot.slane %v1341, 1
      %v1493 = vsel %vm1237, %v1491, %v1492
      %v1518 = vunpack.c.l.b16 %v1004
      %v1519 = vunpack.c.l.b16 %v1005
      %v1520 = vunpack.c.l.b16 %v1006
      %v1521 = vunpack.c.l.b16 %v1007
      %v1522 = vunpack.c.l.b16 %v1008
      %v1523 = vunpack.c.l.b16 %v1009
      %v1524 = vunpack.c.l.b16 %v1010
      %v1525 = vunpack.c.l.b16 %v1011
      %v1526 = vunpack.c.l.b16 %v1012
      %v1527 = vunpack.c.l.b16 %v1013
      %v1528 = vunpack.c.l.b16 %v1014
      %v1529 = vunpack.c.l.b16 %v1015
      %v1530 = vunpack.c.l.b16 %v1016
      %v1531 = vunpack.c.l.b16 %v1017
      %v1532 = vunpack.c.l.b16 %v1018
      %v1533 = vunpack.c.l.b16 %v1019
      %v1534 = vpack.c.b16 %v1519, %v1518
      %v1535 = vpack.c.b16 %v1521, %v1520
      %v1536 = vpack.c.b16 %v1523, %v1522
      %v1537 = vpack.c.b16 %v1525, %v1524
      %v1538 = vpack.c.b16 %v1527, %v1526
      %v1539 = vpack.c.b16 %v1529, %v1528
      %v1540 = vpack.c.b16 %v1531, %v1530
      %v1541 = vpack.c.b16 %v1533, %v1532
      %v1558 = vunpack.c.l.b16 %v1020
      %v1559 = vunpack.c.l.b16 %v1021
      %v1560 = vunpack.c.l.b16 %v1022
      %v1561 = vunpack.c.l.b16 %v1023
      %v1562 = vunpack.c.l.b16 %v1024
      %v1563 = vunpack.c.l.b16 %v1025
      %v1564 = vunpack.c.l.b16 %v1026
      %v1565 = vunpack.c.l.b16 %v1027
      %v1566 = vpack.c.b16 %v1558, %v1558
      %v1567 = vpack.c.b16 %v1559, %v1559
      %v1568 = vpack.c.b16 %v1560, %v1560
      %v1569 = vpack.c.b16 %v1561, %v1561
      %v1570 = vpack.c.b16 %v1562, %v1562
      %v1571 = vpack.c.b16 %v1563, %v1563
      %v1572 = vpack.c.b16 %v1564, %v1564
      %v1573 = vpack.c.b16 %v1565, %v1565
      %v1575 = vshrl.u32 %v1534, 16
      %v1577 = vshll.u32 %v1534, 16
      %v1579 = vrot.slane %v1577, 1
      %v1580 = vor.u32 %v1575, %v1579
      %v1582 = vshll.u32 %v1566, 16
      %v1584 = vrot.slane %v1582, 1
      %v1585 = vsel %vm1108, %v1580, %v1584
      %v1587 = vshrl.u32 %v1535, 16
      %v1589 = vshll.u32 %v1535, 16
      %v1591 = vrot.slane %v1589, 1
      %v1592 = vor.u32 %v1587, %v1591
      %v1594 = vshll.u32 %v1567, 16
      %v1596 = vrot.slane %v1594, 1
      %v1597 = vsel %vm1108, %v1592, %v1596
      %v1599 = vshrl.u32 %v1536, 16
      %v1601 = vshll.u32 %v1536, 16
      %v1603 = vrot.slane %v1601, 1
      %v1604 = vor.u32 %v1599, %v1603
      %v1606 = vshll.u32 %v1568, 16
      %v1608 = vrot.slane %v1606, 1
      %v1609 = vsel %vm1108, %v1604, %v1608
      %v1611 = vshrl.u32 %v1537, 16
      %v1613 = vshll.u32 %v1537, 16
      %v1615 = vrot.slane %v1613, 1
      %v1616 = vor.u32 %v1611, %v1615
      %v1618 = vshll.u32 %v1569, 16
      %v1620 = vrot.slane %v1618, 1
      %v1621 = vsel %vm1108, %v1616, %v1620
      %v1623 = vshrl.u32 %v1538, 16
      %v1625 = vshll.u32 %v1538, 16
      %v1627 = vrot.slane %v1625, 1
      %v1628 = vor.u32 %v1623, %v1627
      %v1630 = vshll.u32 %v1570, 16
      %v1632 = vrot.slane %v1630, 1
      %v1633 = vsel %vm1108, %v1628, %v1632
      %v1635 = vshrl.u32 %v1539, 16
      %v1637 = vshll.u32 %v1539, 16
      %v1639 = vrot.slane %v1637, 1
      %v1640 = vor.u32 %v1635, %v1639
      %v1642 = vshll.u32 %v1571, 16
      %v1644 = vrot.slane %v1642, 1
      %v1645 = vsel %vm1108, %v1640, %v1644
      %v1647 = vshrl.u32 %v1540, 16
      %v1649 = vshll.u32 %v1540, 16
      %v1651 = vrot.slane %v1649, 1
      %v1652 = vor.u32 %v1647, %v1651
      %v1654 = vshll.u32 %v1572, 16
      %v1656 = vrot.slane %v1654, 1
      %v1657 = vsel %vm1108, %v1652, %v1656
      %v1659 = vshrl.u32 %v1541, 16
      %v1661 = vshll.u32 %v1541, 16
      %v1663 = vrot.slane %v1661, 1
      %v1664 = vor.u32 %v1659, %v1663
      %v1666 = vshll.u32 %v1573, 16
      %v1668 = vrot.slane %v1666, 1
      %v1669 = vsel %vm1108, %v1664, %v1668
      %v1686 = vunpack.c.l.b16 %v1028
      %v1687 = vunpack.c.l.b16 %v1029
      %v1688 = vunpack.c.l.b16 %v1030
      %v1689 = vunpack.c.l.b16 %v1031
      %v1690 = vunpack.c.l.b16 %v1032
      %v1691 = vunpack.c.l.b16 %v1033
      %v1692 = vunpack.c.l.b16 %v1034
      %v1693 = vunpack.c.l.b16 %v1035
      %v1694 = vpack.c.b16 %v1519, %v1686
      %v1695 = vpack.c.b16 %v1521, %v1687
      %v1696 = vpack.c.b16 %v1523, %v1688
      %v1697 = vpack.c.b16 %v1525, %v1689
      %v1698 = vpack.c.b16 %v1527, %v1690
      %v1699 = vpack.c.b16 %v1529, %v1691
      %v1700 = vpack.c.b16 %v1531, %v1692
      %v1701 = vpack.c.b16 %v1533, %v1693
      %v1702 = vrot.slane %v1694, 1
      %v1703 = vrot.slane %v1566, 1
      %v1704 = vsel %vm1237, %v1702, %v1703
      %v1705 = vrot.slane %v1695, 1
      %v1706 = vrot.slane %v1567, 1
      %v1707 = vsel %vm1237, %v1705, %v1706
      %v1708 = vrot.slane %v1696, 1
      %v1709 = vrot.slane %v1568, 1
      %v1710 = vsel %vm1237, %v1708, %v1709
      %v1711 = vrot.slane %v1697, 1
      %v1712 = vrot.slane %v1569, 1
      %v1713 = vsel %vm1237, %v1711, %v1712
      %v1714 = vrot.slane %v1698, 1
      %v1715 = vrot.slane %v1570, 1
      %v1716 = vsel %vm1237, %v1714, %v1715
      %v1717 = vrot.slane %v1699, 1
      %v1718 = vrot.slane %v1571, 1
      %v1719 = vsel %vm1237, %v1717, %v1718
      %v1720 = vrot.slane %v1700, 1
      %v1721 = vrot.slane %v1572, 1
      %v1722 = vsel %vm1237, %v1720, %v1721
      %v1723 = vrot.slane %v1701, 1
      %v1724 = vrot.slane %v1573, 1
      %v1725 = vsel %vm1237, %v1723, %v1724
      %v1734 = vld [vmem:[%s562] sm:$0xf]
      %v1735 = vld [vmem:[%s562 + $0x4] sm:$0xf]
      %v1736 = vld [vmem:[%s562 + $0x8] sm:$0xf]
      %v1737 = vld [vmem:[%s562 + $0xc] sm:$0xf]
      %v1738 = vld [vmem:[%s562 + $0x10] sm:$0xf]
      %v1739 = vld [vmem:[%s562 + $0x14] sm:$0xf]
      %v1740 = vld [vmem:[%s562 + $0x18] sm:$0xf]
      %v1741 = vld [vmem:[%s562 + $0x1c] sm:$0xf]
      %v1742 = vld [vmem:[%s562 + $0x20] sm:$0xf]
      %v1743 = vld [vmem:[%s562 + $0x24] sm:$0xf]
      %v1744 = vld [vmem:[%s562 + $0x28] sm:$0xf]
      %v1745 = vld [vmem:[%s562 + $0x2c] sm:$0xf]
      %v1746 = vld [vmem:[%s562 + $0x30] sm:$0xf]
      %v1747 = vld [vmem:[%s562 + $0x34] sm:$0xf]
      %v1748 = vld [vmem:[%s562 + $0x38] sm:$0xf]
      %v1749 = vld [vmem:[%s562 + $0x3c] sm:$0xf]
      %v1750 = vld [vmem:[%s562 + $0x40] sm:$0xf]
      %v1751 = vld [vmem:[%s562 + $0x44] sm:$0xf]
      %v1752 = vld [vmem:[%s562 + $0x48] sm:$0xf]
      %v1753 = vld [vmem:[%s562 + $0x4c] sm:$0xf]
      %v1754 = vld [vmem:[%s562 + $0x50] sm:$0xf]
      %v1755 = vld [vmem:[%s562 + $0x54] sm:$0xf]
      %v1756 = vld [vmem:[%s562 + $0x58] sm:$0xf]
      %v1757 = vld [vmem:[%s562 + $0x5c] sm:$0xf]
      %v1758 = vld [vmem:[%s562 + $0x60] sm:$0xf]
      %v1759 = vld [vmem:[%s562 + $0x64] sm:$0xf]
      %v1760 = vld [vmem:[%s562 + $0x68] sm:$0xf]
      %v1761 = vld [vmem:[%s562 + $0x6c] sm:$0xf]
      %v1762 = vld [vmem:[%s562 + $0x70] sm:$0xf]
      %v1763 = vld [vmem:[%s562 + $0x74] sm:$0xf]
      %v1764 = vld [vmem:[%s562 + $0x78] sm:$0xf]
      %v1765 = vld [vmem:[%s562 + $0x7c] sm:$0xf]
      %v1766 = vld [vmem:[%s562 + $0x80] sm:$0xf]
      %v1767 = vld [vmem:[%s562 + $0x84] sm:$0xf]
      %v1768 = vld [vmem:[%s562 + $0x88] sm:$0xf]
      %v1769 = vld [vmem:[%s562 + $0x8c] sm:$0xf]
      %v1770 = vld [vmem:[%s562 + $0x90] sm:$0xf]
      %v1771 = vld [vmem:[%s562 + $0x94] sm:$0xf]
      %v1772 = vld [vmem:[%s562 + $0x98] sm:$0xf]
      %v1773 = vld [vmem:[%s562 + $0x9c] sm:$0xf]
      %v1774 = vld [vmem:[%s562 + $0xa0] sm:$0xf]
      %v1775 = vld [vmem:[%s562 + $0xa4] sm:$0xf]
      %v1776 = vld [vmem:[%s562 + $0xa8] sm:$0xf]
      %v1777 = vld [vmem:[%s562 + $0xac] sm:$0xf]
      %v1778 = vld [vmem:[%s562 + $0xb0] sm:$0xf]
      %v1779 = vld [vmem:[%s562 + $0xb4] sm:$0xf]
      %v1780 = vld [vmem:[%s562 + $0xb8] sm:$0xf]
      %v1781 = vld [vmem:[%s562 + $0xbc] sm:$0xf]
      %v1782 = vld [vmem:[%s562 + $0xc0] sm:$0xf]
      %v1783 = vld [vmem:[%s562 + $0xc4] sm:$0xf]
      %v1784 = vld [vmem:[%s562 + $0xc8] sm:$0xf]
      %v1785 = vld [vmem:[%s562 + $0xcc] sm:$0xf]
      %v1786 = vld [vmem:[%s562 + $0xd0] sm:$0xf]
      %v1787 = vld [vmem:[%s562 + $0xd4] sm:$0xf]
      %v1788 = vld [vmem:[%s562 + $0xd8] sm:$0xf]
      %v1789 = vld [vmem:[%s562 + $0xdc] sm:$0xf]
      %v1790 = vld [vmem:[%s562 + $0xe0] sm:$0xf]
      %v1791 = vld [vmem:[%s562 + $0xe4] sm:$0xf]
      %v1792 = vld [vmem:[%s562 + $0xe8] sm:$0xf]
      %v1793 = vld [vmem:[%s562 + $0xec] sm:$0xf]
      %v1794 = vld [vmem:[%s562 + $0xf0] sm:$0xf]
      %v1795 = vld [vmem:[%s562 + $0xf4] sm:$0xf]
      %v1796 = vld [vmem:[%s562 + $0xf8] sm:$0xf]
      %v1797 = vld [vmem:[%s562 + $0xfc] sm:$0xf]
      %v1798 = vld [vmem:[%s562 + $0x100] sm:$0xf]
      %v1799 = vld [vmem:[%s562 + $0x104] sm:$0xf]
      %v1800 = vld [vmem:[%s562 + $0x108] sm:$0xf]
      %v1801 = vld [vmem:[%s562 + $0x10c] sm:$0xf]
      %v1802 = vld [vmem:[%s562 + $0x110] sm:$0xf]
      %v1803 = vld [vmem:[%s562 + $0x114] sm:$0xf]
      %v1804 = vld [vmem:[%s562 + $0x118] sm:$0xf]
      %v1805 = vld [vmem:[%s562 + $0x11c] sm:$0xf]
      %v1806 = vld [vmem:[%s562 + $0x120] sm:$0xf]
      %v1807 = vld [vmem:[%s562 + $0x124] sm:$0xf]
      %v1808 = vld [vmem:[%s562 + $0x128] sm:$0xf]
      %v1809 = vld [vmem:[%s562 + $0x12c] sm:$0xf]
      %v1810 = vld [vmem:[%s562 + $0x130] sm:$0xf]
      %v1811 = vld [vmem:[%s562 + $0x134] sm:$0xf]
      %v1812 = vld [vmem:[%s562 + $0x138] sm:$0xf]
      %v1813 = vld [vmem:[%s562 + $0x13c] sm:$0xf]
      %v1814 = vld [vmem:[%s562 + $0x140] sm:$0xf]
      %v1815 = vld [vmem:[%s562 + $0x144] sm:$0xf]
      %v1816 = vld [vmem:[%s562 + $0x148] sm:$0xf]
      %v1817 = vld [vmem:[%s562 + $0x14c] sm:$0xf]
      %v1818 = vld [vmem:[%s562 + $0x150] sm:$0xf]
      %v1819 = vld [vmem:[%s562 + $0x154] sm:$0xf]
      %v1820 = vld [vmem:[%s562 + $0x158] sm:$0xf]
      %v1821 = vld [vmem:[%s562 + $0x15c] sm:$0xf]
      %v1822 = vld [vmem:[%s562 + $0x160] sm:$0xf]
      %v1823 = vld [vmem:[%s562 + $0x164] sm:$0xf]
      %v1824 = vld [vmem:[%s562 + $0x168] sm:$0xf]
      %v1825 = vld [vmem:[%s562 + $0x16c] sm:$0xf]
      %v1826 = vld [vmem:[%s562 + $0x170] sm:$0xf]
      %v1827 = vld [vmem:[%s562 + $0x174] sm:$0xf]
      %v1828 = vld [vmem:[%s562 + $0x178] sm:$0xf]
      %v1829 = vld [vmem:[%s562 + $0x17c] sm:$0xf]
      %v1830 = vld [vmem:[%s562 + $0x180] sm:$0xf]
      %v1831 = vld [vmem:[%s562 + $0x184] sm:$0xf]
      %v1832 = vld [vmem:[%s562 + $0x188] sm:$0xf]
      %v1833 = vld [vmem:[%s562 + $0x18c] sm:$0xf]
      %v1834 = vld [vmem:[%s562 + $0x190] sm:$0xf]
      %v1835 = vld [vmem:[%s562 + $0x194] sm:$0xf]
      %v1836 = vld [vmem:[%s562 + $0x198] sm:$0xf]
      %v1837 = vld [vmem:[%s562 + $0x19c] sm:$0xf]
      %v1838 = vld [vmem:[%s562 + $0x1a0] sm:$0xf]
      %v1839 = vld [vmem:[%s562 + $0x1a4] sm:$0xf]
      %v1840 = vld [vmem:[%s562 + $0x1a8] sm:$0xf]
      %v1841 = vld [vmem:[%s562 + $0x1ac] sm:$0xf]
      %v1842 = vld [vmem:[%s562 + $0x1b0] sm:$0xf]
      %v1843 = vld [vmem:[%s562 + $0x1b4] sm:$0xf]
      %v1844 = vld [vmem:[%s562 + $0x1b8] sm:$0xf]
      %v1845 = vld [vmem:[%s562 + $0x1bc] sm:$0xf]
      %v1846 = vld [vmem:[%s562 + $0x1c0] sm:$0xf]
      %v1847 = vld [vmem:[%s562 + $0x1c4] sm:$0xf]
      %v1848 = vld [vmem:[%s562 + $0x1c8] sm:$0xf]
      %v1849 = vld [vmem:[%s562 + $0x1cc] sm:$0xf]
      %v1850 = vld [vmem:[%s562 + $0x1d0] sm:$0xf]
      %v1851 = vld [vmem:[%s562 + $0x1d4] sm:$0xf]
      %v1852 = vld [vmem:[%s562 + $0x1d8] sm:$0xf]
      %v1853 = vld [vmem:[%s562 + $0x1dc] sm:$0xf]
      %v1854 = vld [vmem:[%s562 + $0x1e0] sm:$0xf]
      %v1855 = vld [vmem:[%s562 + $0x1e4] sm:$0xf]
      %v1856 = vld [vmem:[%s562 + $0x1e8] sm:$0xf]
      %v1857 = vld [vmem:[%s562 + $0x1ec] sm:$0xf]
      %v1858 = vld [vmem:[%s562 + $0x1f0] sm:$0xf]
      %v1859 = vld [vmem:[%s562 + $0x1f4] sm:$0xf]
      %v1860 = vld [vmem:[%s562 + $0x1f8] sm:$0xf]
      %v1861 = vld [vmem:[%s562 + $0x1fc] sm:$0xf]
      %v1862 = vld [vmem:[%s562 + $0x200] sm:$0xf]
      %v1863 = vld [vmem:[%s562 + $0x204] sm:$0xf]
      %v1864 = vld [vmem:[%s562 + $0x208] sm:$0xf]
      %v1865 = vld [vmem:[%s562 + $0x20c] sm:$0xf]
      %v1866 = vld [vmem:[%s562 + $0x210] sm:$0xf]
      %v1867 = vld [vmem:[%s562 + $0x214] sm:$0xf]
      %v1868 = vld [vmem:[%s562 + $0x218] sm:$0xf]
      %v1869 = vld [vmem:[%s562 + $0x21c] sm:$0xf]
      %v1870 = vld [vmem:[%s562 + $0x220] sm:$0xf]
      %v1871 = vld [vmem:[%s562 + $0x224] sm:$0xf]
      %v1872 = vld [vmem:[%s562 + $0x228] sm:$0xf]
      %v1873 = vld [vmem:[%s562 + $0x22c] sm:$0xf]
      %v1874 = vld [vmem:[%s562 + $0x230] sm:$0xf]
      %v1875 = vld [vmem:[%s562 + $0x234] sm:$0xf]
      %v1876 = vld [vmem:[%s562 + $0x238] sm:$0xf]
      %v1877 = vld [vmem:[%s562 + $0x23c] sm:$0xf]
      %v1878 = vld [vmem:[%s565] sm:$0x1]
      %v1880 = vperm.slane %v1878, 0
      %v2026 = vunpack.c.l.b16 %v1734
      %v2027 = vunpack.c.l.b16 %v1735
      %v2028 = vunpack.c.l.b16 %v1736
      %v2029 = vunpack.c.l.b16 %v1737
      %v2030 = vunpack.c.l.b16 %v1738
      %v2031 = vunpack.c.l.b16 %v1739
      %v2032 = vunpack.c.l.b16 %v1740
      %v2033 = vunpack.c.l.b16 %v1741
      %v2034 = vunpack.c.l.b16 %v1742
      %v2035 = vunpack.c.l.b16 %v1743
      %v2036 = vunpack.c.l.b16 %v1744
      %v2037 = vunpack.c.l.b16 %v1745
      %v2038 = vunpack.c.l.b16 %v1746
      %v2039 = vunpack.c.l.b16 %v1747
      %v2040 = vunpack.c.l.b16 %v1748
      %v2041 = vunpack.c.l.b16 %v1749
      %v2042 = vunpack.c.l.b16 %v1750
      %v2043 = vunpack.c.l.b16 %v1751
      %v2044 = vunpack.c.l.b16 %v1752
      %v2045 = vunpack.c.l.b16 %v1753
      %v2046 = vunpack.c.l.b16 %v1754
      %v2047 = vunpack.c.l.b16 %v1755
      %v2048 = vunpack.c.l.b16 %v1756
      %v2049 = vunpack.c.l.b16 %v1757
      %v2050 = vunpack.c.l.b16 %v1758
      %v2051 = vunpack.c.l.b16 %v1759
      %v2052 = vunpack.c.l.b16 %v1760
      %v2053 = vunpack.c.l.b16 %v1761
      %v2054 = vunpack.c.l.b16 %v1762
      %v2055 = vunpack.c.l.b16 %v1763
      %v2056 = vunpack.c.l.b16 %v1764
      %v2057 = vunpack.c.l.b16 %v1765
      %v2058 = vunpack.c.l.b16 %v1766
      %v2059 = vunpack.c.l.b16 %v1767
      %v2060 = vunpack.c.l.b16 %v1768
      %v2061 = vunpack.c.l.b16 %v1769
      %v2062 = vunpack.c.l.b16 %v1770
      %v2063 = vunpack.c.l.b16 %v1771
      %v2064 = vunpack.c.l.b16 %v1772
      %v2065 = vunpack.c.l.b16 %v1773
      %v2066 = vunpack.c.l.b16 %v1774
      %v2067 = vunpack.c.l.b16 %v1775
      %v2068 = vunpack.c.l.b16 %v1776
      %v2069 = vunpack.c.l.b16 %v1777
      %v2070 = vunpack.c.l.b16 %v1778
      %v2071 = vunpack.c.l.b16 %v1779
      %v2072 = vunpack.c.l.b16 %v1780
      %v2073 = vunpack.c.l.b16 %v1781
      %v2074 = vunpack.c.l.b16 %v1782
      %v2075 = vunpack.c.l.b16 %v1783
      %v2076 = vunpack.c.l.b16 %v1784
      %v2077 = vunpack.c.l.b16 %v1785
      %v2078 = vunpack.c.l.b16 %v1786
      %v2079 = vunpack.c.l.b16 %v1787
      %v2080 = vunpack.c.l.b16 %v1788
      %v2081 = vunpack.c.l.b16 %v1789
      %v2082 = vunpack.c.l.b16 %v1790
      %v2083 = vunpack.c.l.b16 %v1791
      %v2084 = vunpack.c.l.b16 %v1792
      %v2085 = vunpack.c.l.b16 %v1793
      %v2086 = vunpack.c.l.b16 %v1794
      %v2087 = vunpack.c.l.b16 %v1795
      %v2088 = vunpack.c.l.b16 %v1796
      %v2089 = vunpack.c.l.b16 %v1797
      %v2090 = vunpack.c.l.b16 %v1798
      %v2091 = vunpack.c.l.b16 %v1799
      %v2092 = vunpack.c.l.b16 %v1800
      %v2093 = vunpack.c.l.b16 %v1801
      %v2094 = vunpack.c.l.b16 %v1802
      %v2095 = vunpack.c.l.b16 %v1803
      %v2096 = vunpack.c.l.b16 %v1804
      %v2097 = vunpack.c.l.b16 %v1805
      %v2098 = vunpack.c.l.b16 %v1806
      %v2099 = vunpack.c.l.b16 %v1807
      %v2100 = vunpack.c.l.b16 %v1808
      %v2101 = vunpack.c.l.b16 %v1809
      %v2102 = vunpack.c.l.b16 %v1810
      %v2103 = vunpack.c.l.b16 %v1811
      %v2104 = vunpack.c.l.b16 %v1812
      %v2105 = vunpack.c.l.b16 %v1813
      %v2106 = vunpack.c.l.b16 %v1814
      %v2107 = vunpack.c.l.b16 %v1815
      %v2108 = vunpack.c.l.b16 %v1816
      %v2109 = vunpack.c.l.b16 %v1817
      %v2110 = vunpack.c.l.b16 %v1818
      %v2111 = vunpack.c.l.b16 %v1819
      %v2112 = vunpack.c.l.b16 %v1820
      %v2113 = vunpack.c.l.b16 %v1821
      %v2114 = vunpack.c.l.b16 %v1822
      %v2115 = vunpack.c.l.b16 %v1823
      %v2116 = vunpack.c.l.b16 %v1824
      %v2117 = vunpack.c.l.b16 %v1825
      %v2118 = vunpack.c.l.b16 %v1826
      %v2119 = vunpack.c.l.b16 %v1827
      %v2120 = vunpack.c.l.b16 %v1828
      %v2121 = vunpack.c.l.b16 %v1829
      %v2122 = vunpack.c.l.b16 %v1830
      %v2123 = vunpack.c.l.b16 %v1831
      %v2124 = vunpack.c.l.b16 %v1832
      %v2125 = vunpack.c.l.b16 %v1833
      %v2126 = vunpack.c.l.b16 %v1834
      %v2127 = vunpack.c.l.b16 %v1835
      %v2128 = vunpack.c.l.b16 %v1836
      %v2129 = vunpack.c.l.b16 %v1837
      %v2130 = vunpack.c.l.b16 %v1838
      %v2131 = vunpack.c.l.b16 %v1839
      %v2132 = vunpack.c.l.b16 %v1840
      %v2133 = vunpack.c.l.b16 %v1841
      %v2134 = vunpack.c.l.b16 %v1842
      %v2135 = vunpack.c.l.b16 %v1843
      %v2136 = vunpack.c.l.b16 %v1844
      %v2137 = vunpack.c.l.b16 %v1845
      %v2138 = vunpack.c.l.b16 %v1846
      %v2139 = vunpack.c.l.b16 %v1847
      %v2140 = vunpack.c.l.b16 %v1848
      %v2141 = vunpack.c.l.b16 %v1849
      %v2142 = vunpack.c.l.b16 %v1850
      %v2143 = vunpack.c.l.b16 %v1851
      %v2144 = vunpack.c.l.b16 %v1852
      %v2145 = vunpack.c.l.b16 %v1853
      %v2146 = vunpack.c.l.b16 %v1854
      %v2147 = vunpack.c.l.b16 %v1855
      %v2148 = vunpack.c.l.b16 %v1856
      %v2149 = vunpack.c.l.b16 %v1857
      %v2150 = vunpack.c.l.b16 %v1858
      %v2151 = vunpack.c.l.b16 %v1859
      %v2152 = vunpack.c.l.b16 %v1860
      %v2153 = vunpack.c.l.b16 %v1861
      %v2154 = vunpack.c.l.b16 %v1862
      %v2155 = vunpack.c.l.b16 %v1863
      %v2156 = vunpack.c.l.b16 %v1864
      %v2157 = vunpack.c.l.b16 %v1865
      %v2158 = vunpack.c.l.b16 %v1866
      %v2159 = vunpack.c.l.b16 %v1867
      %v2160 = vunpack.c.l.b16 %v1868
      %v2161 = vunpack.c.l.b16 %v1869
      %v2162 = vunpack.c.l.b16 %v1870
      %v2163 = vunpack.c.l.b16 %v1871
      %v2164 = vunpack.c.l.b16 %v1872
      %v2165 = vunpack.c.l.b16 %v1873
      %v2166 = vunpack.c.l.b16 %v1874
      %v2167 = vunpack.c.l.b16 %v1875
      %v2168 = vunpack.c.l.b16 %v1876
      %v2169 = vunpack.c.l.b16 %v1877
      %v2170 = vpack.c.b16 %v2027, %v2026
      %v2171 = vpack.c.b16 %v2029, %v2028
      %v2172 = vpack.c.b16 %v2031, %v2030
      %v2173 = vpack.c.b16 %v2033, %v2032
      %v2174 = vpack.c.b16 %v2035, %v2034
      %v2175 = vpack.c.b16 %v2037, %v2036
      %v2176 = vpack.c.b16 %v2039, %v2038
      %v2177 = vpack.c.b16 %v2041, %v2040
      %v2178 = vpack.c.b16 %v2043, %v2042
      %v2179 = vpack.c.b16 %v2045, %v2044
      %v2180 = vpack.c.b16 %v2047, %v2046
      %v2181 = vpack.c.b16 %v2049, %v2048
      %v2182 = vpack.c.b16 %v2051, %v2050
      %v2183 = vpack.c.b16 %v2053, %v2052
      %v2184 = vpack.c.b16 %v2055, %v2054
      %v2185 = vpack.c.b16 %v2057, %v2056
      %v2186 = vpack.c.b16 %v2059, %v2058
      %v2187 = vpack.c.b16 %v2061, %v2060
      %v2188 = vpack.c.b16 %v2063, %v2062
      %v2189 = vpack.c.b16 %v2065, %v2064
      %v2190 = vpack.c.b16 %v2067, %v2066
      %v2191 = vpack.c.b16 %v2069, %v2068
      %v2192 = vpack.c.b16 %v2071, %v2070
      %v2193 = vpack.c.b16 %v2073, %v2072
      %v2194 = vpack.c.b16 %v2075, %v2074
      %v2195 = vpack.c.b16 %v2077, %v2076
      %v2196 = vpack.c.b16 %v2079, %v2078
      %v2197 = vpack.c.b16 %v2081, %v2080
      %v2198 = vpack.c.b16 %v2083, %v2082
      %v2199 = vpack.c.b16 %v2085, %v2084
      %v2200 = vpack.c.b16 %v2087, %v2086
      %v2201 = vpack.c.b16 %v2089, %v2088
      %v2202 = vpack.c.b16 %v2091, %v2090
      %v2203 = vpack.c.b16 %v2093, %v2092
      %v2204 = vpack.c.b16 %v2095, %v2094
      %v2205 = vpack.c.b16 %v2097, %v2096
      %v2206 = vpack.c.b16 %v2099, %v2098
      %v2207 = vpack.c.b16 %v2101, %v2100
      %v2208 = vpack.c.b16 %v2103, %v2102
      %v2209 = vpack.c.b16 %v2105, %v2104
      %v2210 = vpack.c.b16 %v2107, %v2106
      %v2211 = vpack.c.b16 %v2109, %v2108
      %v2212 = vpack.c.b16 %v2111, %v2110
      %v2213 = vpack.c.b16 %v2113, %v2112
      %v2214 = vpack.c.b16 %v2115, %v2114
      %v2215 = vpack.c.b16 %v2117, %v2116
      %v2216 = vpack.c.b16 %v2119, %v2118
      %v2217 = vpack.c.b16 %v2121, %v2120
      %v2218 = vpack.c.b16 %v2123, %v2122
      %v2219 = vpack.c.b16 %v2125, %v2124
      %v2220 = vpack.c.b16 %v2127, %v2126
      %v2221 = vpack.c.b16 %v2129, %v2128
      %v2222 = vpack.c.b16 %v2131, %v2130
      %v2223 = vpack.c.b16 %v2133, %v2132
      %v2224 = vpack.c.b16 %v2135, %v2134
      %v2225 = vpack.c.b16 %v2137, %v2136
      %v2226 = vpack.c.b16 %v2139, %v2138
      %v2227 = vpack.c.b16 %v2141, %v2140
      %v2228 = vpack.c.b16 %v2143, %v2142
      %v2229 = vpack.c.b16 %v2145, %v2144
      %v2230 = vpack.c.b16 %v2147, %v2146
      %v2231 = vpack.c.b16 %v2149, %v2148
      %v2232 = vpack.c.b16 %v2151, %v2150
      %v2233 = vpack.c.b16 %v2153, %v2152
      %v2234 = vpack.c.b16 %v2155, %v2154
      %v2235 = vpack.c.b16 %v2157, %v2156
      %v2236 = vpack.c.b16 %v2159, %v2158
      %v2237 = vpack.c.b16 %v2161, %v2160
      %v2238 = vpack.c.b16 %v2163, %v2162
      %v2239 = vpack.c.b16 %v2165, %v2164
      %v2240 = vpack.c.b16 %v2167, %v2166
      %v2241 = vpack.c.b16 %v2169, %v2168
      %2314 = vmatpush.bf16.msra.mxu0 %v2177
      %2315 = vmatpush.bf16.msra.mxu0 %v2176
      %2316 = vmatpush.bf16.msra.mxu0 %v2175
      %2317 = vmatpush.bf16.msra.mxu0 %v2174
      %2318 = vmatpush.bf16.msra.mxu0 %v2173
      %2319 = vmatpush.bf16.msra.mxu0 %v2172
      %2320 = vmatpush.bf16.msra.mxu0 %v2171
      %2321 = vmatpush.bf16.msra.mxu0 %v2170
      %2322 = vmatmul.bf16.gmra.mxu0 %v1068
      %v2323 = vpop.f32.mrf.mxu0
      %v2324 = vadd.f32 %v1880, %v2323
      %v2325 = vpop.f32.mrf.mxu0
      %v2326 = vadd.f32 %v1880, %v2325
      %2327 = vmatmul.bf16.gmra.mxu0 %v1069
      %v2328 = vpop.f32.mrf.mxu0
      %v2329 = vadd.f32 %v1880, %v2328
      %v2330 = vpop.f32.mrf.mxu0
      %v2331 = vadd.f32 %v1880, %v2330
      %2332 = vmatmul.bf16.gmra.mxu0 %v1070
      %v2333 = vpop.f32.mrf.mxu0
      %v2334 = vadd.f32 %v1880, %v2333
      %v2335 = vpop.f32.mrf.mxu0
      %v2336 = vadd.f32 %v1880, %v2335
      %2337 = vmatmul.bf16.gmra.mxu0 %v1071
      %v2338 = vpop.f32.mrf.mxu0
      %v2339 = vadd.f32 %v1880, %v2338
      %v2340 = vpop.f32.mrf.mxu0
      %v2341 = vadd.f32 %v1880, %v2340
      %2342 = vmatmul.bf16.gmra.mxu0 %v1072
      %v2343 = vpop.f32.mrf.mxu0
      %v2344 = vadd.f32 %v1880, %v2343
      %v2345 = vpop.f32.mrf.mxu0
      %v2346 = vadd.f32 %v1880, %v2345
      %2347 = vmatmul.bf16.gmra.mxu0 %v1073
      %v2348 = vpop.f32.mrf.mxu0
      %v2349 = vadd.f32 %v1880, %v2348
      %v2350 = vpop.f32.mrf.mxu0
      %v2351 = vadd.f32 %v1880, %v2350
      %2352 = vmatmul.bf16.gmra.mxu0 %v1074
      %v2353 = vpop.f32.mrf.mxu0
      %v2354 = vadd.f32 %v1880, %v2353
      %v2355 = vpop.f32.mrf.mxu0
      %v2356 = vadd.f32 %v1880, %v2355
      %2357 = vmatmul.bf16.gmra.mxu0 %v1075
      %v2358 = vpop.f32.mrf.mxu0
      %v2359 = vadd.f32 %v1880, %v2358
      %v2360 = vpop.f32.mrf.mxu0
      %v2361 = vadd.f32 %v1880, %v2360
      %2362 = vdwg.mxu0
      %2363 = vmatpush.bf16.msra.mxu0 %v2185
      %2364 = vmatpush.bf16.msra.mxu0 %v2184
      %2365 = vmatpush.bf16.msra.mxu0 %v2183
      %2366 = vmatpush.bf16.msra.mxu0 %v2182
      %2367 = vmatpush.bf16.msra.mxu0 %v2181
      %2368 = vmatpush.bf16.msra.mxu0 %v2180
      %2369 = vmatpush.bf16.msra.mxu0 %v2179
      %2370 = vmatpush.bf16.msra.mxu0 %v2178
      %2371 = vmatmul.bf16.gmra.mxu0 %v1120
      %v2372 = vpop.f32.mrf.mxu0
      %v2373 = vadd.f32 %v2324, %v2372
      %v2374 = vpop.f32.mrf.mxu0
      %v2375 = vadd.f32 %v2326, %v2374
      %2376 = vmatmul.bf16.gmra.mxu0 %v1132
      %v2377 = vpop.f32.mrf.mxu0
      %v2378 = vadd.f32 %v2329, %v2377
      %v2379 = vpop.f32.mrf.mxu0
      %v2380 = vadd.f32 %v2331, %v2379
      %2381 = vmatmul.bf16.gmra.mxu0 %v1144
      %v2382 = vpop.f32.mrf.mxu0
      %v2383 = vadd.f32 %v2334, %v2382
      %v2384 = vpop.f32.mrf.mxu0
      %v2385 = vadd.f32 %v2336, %v2384
      %2386 = vmatmul.bf16.gmra.mxu0 %v1156
      %v2387 = vpop.f32.mrf.mxu0
      %v2388 = vadd.f32 %v2339, %v2387
      %v2389 = vpop.f32.mrf.mxu0
      %v2390 = vadd.f32 %v2341, %v2389
      %2391 = vmatmul.bf16.gmra.mxu0 %v1168
      %v2392 = vpop.f32.mrf.mxu0
      %v2393 = vadd.f32 %v2344, %v2392
      %v2394 = vpop.f32.mrf.mxu0
      %v2395 = vadd.f32 %v2346, %v2394
      %2396 = vmatmul.bf16.gmra.mxu0 %v1180
      %v2397 = vpop.f32.mrf.mxu0
      %v2398 = vadd.f32 %v2349, %v2397
      %v2399 = vpop.f32.mrf.mxu0
      %v2400 = vadd.f32 %v2351, %v2399
      %2401 = vmatmul.bf16.gmra.mxu0 %v1192
      %v2402 = vpop.f32.mrf.mxu0
      %v2403 = vadd.f32 %v2354, %v2402
      %v2404 = vpop.f32.mrf.mxu0
      %v2405 = vadd.f32 %v2356, %v2404
      %2406 = vmatmul.bf16.gmra.mxu0 %v1204
      %v2407 = vpop.f32.mrf.mxu0
      %v2408 = vadd.f32 %v2359, %v2407
      %v2409 = vpop.f32.mrf.mxu0
      %v2410 = vadd.f32 %v2361, %v2409
      %2411 = vdwg.mxu0
      %2412 = vmatpush.bf16.msra.mxu0 %v2193
      %2413 = vmatpush.bf16.msra.mxu0 %v2192
      %2414 = vmatpush.bf16.msra.mxu0 %v2191
      %2415 = vmatpush.bf16.msra.mxu0 %v2190
      %2416 = vmatpush.bf16.msra.mxu0 %v2189
      %2417 = vmatpush.bf16.msra.mxu0 %v2188
      %2418 = vmatpush.bf16.msra.mxu0 %v2187
      %2419 = vmatpush.bf16.msra.mxu0 %v2186
      %2420 = vmatmul.bf16.gmra.mxu0 %v1240
      %v2421 = vpop.f32.mrf.mxu0
      %v2422 = vadd.f32 %v2373, %v2421
      %v2423 = vpop.f32.mrf.mxu0
      %v2424 = vadd.f32 %v2375, %v2423
      %2425 = vmatmul.bf16.gmra.mxu0 %v1243
      %v2426 = vpop.f32.mrf.mxu0
      %v2427 = vadd.f32 %v2378, %v2426
      %v2428 = vpop.f32.mrf.mxu0
      %v2429 = vadd.f32 %v2380, %v2428
      %2430 = vmatmul.bf16.gmra.mxu0 %v1246
      %v2431 = vpop.f32.mrf.mxu0
      %v2432 = vadd.f32 %v2383, %v2431
      %v2433 = vpop.f32.mrf.mxu0
      %v2434 = vadd.f32 %v2385, %v2433
      %2435 = vmatmul.bf16.gmra.mxu0 %v1249
      %v2436 = vpop.f32.mrf.mxu0
      %v2437 = vadd.f32 %v2388, %v2436
      %v2438 = vpop.f32.mrf.mxu0
      %v2439 = vadd.f32 %v2390, %v2438
      %2440 = vmatmul.bf16.gmra.mxu0 %v1252
      %v2441 = vpop.f32.mrf.mxu0
      %v2442 = vadd.f32 %v2393, %v2441
      %v2443 = vpop.f32.mrf.mxu0
      %v2444 = vadd.f32 %v2395, %v2443
      %2445 = vmatmul.bf16.gmra.mxu0 %v1255
      %v2446 = vpop.f32.mrf.mxu0
      %v2447 = vadd.f32 %v2398, %v2446
      %v2448 = vpop.f32.mrf.mxu0
      %v2449 = vadd.f32 %v2400, %v2448
      %2450 = vmatmul.bf16.gmra.mxu0 %v1258
      %v2451 = vpop.f32.mrf.mxu0
      %v2452 = vadd.f32 %v2403, %v2451
      %v2453 = vpop.f32.mrf.mxu0
      %v2454 = vadd.f32 %v2405, %v2453
      %2455 = vmatmul.bf16.gmra.mxu0 %v1261
      %v2456 = vpop.f32.mrf.mxu0
      %v2457 = vadd.f32 %v2408, %v2456
      %v2458 = vpop.f32.mrf.mxu0
      %v2459 = vadd.f32 %v2410, %v2458
      %2460 = vdwg.mxu0
      %2461 = vmatpush.bf16.msra.mxu0 %v2201
      %2462 = vmatpush.bf16.msra.mxu0 %v2200
      %2463 = vmatpush.bf16.msra.mxu0 %v2199
      %2464 = vmatpush.bf16.msra.mxu0 %v2198
      %2465 = vmatpush.bf16.msra.mxu0 %v2197
      %2466 = vmatpush.bf16.msra.mxu0 %v2196
      %2467 = vmatpush.bf16.msra.mxu0 %v2195
      %2468 = vmatpush.bf16.msra.mxu0 %v2194
      %2469 = vmatmul.bf16.gmra.mxu0 %v1302
      %v2470 = vpop.f32.mrf.mxu0
      %v2471 = vadd.f32 %v2422, %v2470
      %v2472 = vpop.f32.mrf.mxu0
      %v2473 = vadd.f32 %v2424, %v2472
      %2474 = vmatmul.bf16.gmra.mxu0 %v1303
      %v2475 = vpop.f32.mrf.mxu0
      %v2476 = vadd.f32 %v2427, %v2475
      %v2477 = vpop.f32.mrf.mxu0
      %v2478 = vadd.f32 %v2429, %v2477
      %2479 = vmatmul.bf16.gmra.mxu0 %v1304
      %v2480 = vpop.f32.mrf.mxu0
      %v2481 = vadd.f32 %v2432, %v2480
      %v2482 = vpop.f32.mrf.mxu0
      %v2483 = vadd.f32 %v2434, %v2482
      %2484 = vmatmul.bf16.gmra.mxu0 %v1305
      %v2485 = vpop.f32.mrf.mxu0
      %v2486 = vadd.f32 %v2437, %v2485
      %v2487 = vpop.f32.mrf.mxu0
      %v2488 = vadd.f32 %v2439, %v2487
      %2489 = vmatmul.bf16.gmra.mxu0 %v1306
      %v2490 = vpop.f32.mrf.mxu0
      %v2491 = vadd.f32 %v2442, %v2490
      %v2492 = vpop.f32.mrf.mxu0
      %v2493 = vadd.f32 %v2444, %v2492
      %2494 = vmatmul.bf16.gmra.mxu0 %v1307
      %v2495 = vpop.f32.mrf.mxu0
      %v2496 = vadd.f32 %v2447, %v2495
      %v2497 = vpop.f32.mrf.mxu0
      %v2498 = vadd.f32 %v2449, %v2497
      %2499 = vmatmul.bf16.gmra.mxu0 %v1308
      %v2500 = vpop.f32.mrf.mxu0
      %v2501 = vadd.f32 %v2452, %v2500
      %v2502 = vpop.f32.mrf.mxu0
      %v2503 = vadd.f32 %v2454, %v2502
      %2504 = vmatmul.bf16.gmra.mxu0 %v1309
      %v2505 = vpop.f32.mrf.mxu0
      %v2506 = vadd.f32 %v2457, %v2505
      %v2507 = vpop.f32.mrf.mxu0
      %v2508 = vadd.f32 %v2459, %v2507
      %2509 = vdwg.mxu0
      %2510 = vmatpush.bf16.msra.mxu0 %v2209
      %2511 = vmatpush.bf16.msra.mxu0 %v2208
      %2512 = vmatpush.bf16.msra.mxu0 %v2207
      %2513 = vmatpush.bf16.msra.mxu0 %v2206
      %2514 = vmatpush.bf16.msra.mxu0 %v2205
      %2515 = vmatpush.bf16.msra.mxu0 %v2204
      %2516 = vmatpush.bf16.msra.mxu0 %v2203
      %2517 = vmatpush.bf16.msra.mxu0 %v2202
      %2518 = vmatmul.bf16.gmra.mxu0 %v1353
      %v2519 = vpop.f32.mrf.mxu0
      %v2520 = vadd.f32 %v2471, %v2519
      %v2521 = vpop.f32.mrf.mxu0
      %v2522 = vadd.f32 %v2473, %v2521
      %2523 = vmatmul.bf16.gmra.mxu0 %v1365
      %v2524 = vpop.f32.mrf.mxu0
      %v2525 = vadd.f32 %v2476, %v2524
      %v2526 = vpop.f32.mrf.mxu0
      %v2527 = vadd.f32 %v2478, %v2526
      %2528 = vmatmul.bf16.gmra.mxu0 %v1377
      %v2529 = vpop.f32.mrf.mxu0
      %v2530 = vadd.f32 %v2481, %v2529
      %v2531 = vpop.f32.mrf.mxu0
      %v2532 = vadd.f32 %v2483, %v2531
      %2533 = vmatmul.bf16.gmra.mxu0 %v1389
      %v2534 = vpop.f32.mrf.mxu0
      %v2535 = vadd.f32 %v2486, %v2534
      %v2536 = vpop.f32.mrf.mxu0
      %v2537 = vadd.f32 %v2488, %v2536
      %2538 = vmatmul.bf16.gmra.mxu0 %v1401
      %v2539 = vpop.f32.mrf.mxu0
      %v2540 = vadd.f32 %v2491, %v2539
      %v2541 = vpop.f32.mrf.mxu0
      %v2542 = vadd.f32 %v2493, %v2541
      %2543 = vmatmul.bf16.gmra.mxu0 %v1413
      %v2544 = vpop.f32.mrf.mxu0
      %v2545 = vadd.f32 %v2496, %v2544
      %v2546 = vpop.f32.mrf.mxu0
      %v2547 = vadd.f32 %v2498, %v2546
      %2548 = vmatmul.bf16.gmra.mxu0 %v1425
      %v2549 = vpop.f32.mrf.mxu0
      %v2550 = vadd.f32 %v2501, %v2549
      %v2551 = vpop.f32.mrf.mxu0
      %v2552 = vadd.f32 %v2503, %v2551
      %2553 = vmatmul.bf16.gmra.mxu0 %v1437
      %v2554 = vpop.f32.mrf.mxu0
      %v2555 = vadd.f32 %v2506, %v2554
      %v2556 = vpop.f32.mrf.mxu0
      %v2557 = vadd.f32 %v2508, %v2556
      %2558 = vdwg.mxu0
      %2559 = vmatpush.bf16.msra.mxu0 %v2217
      %2560 = vmatpush.bf16.msra.mxu0 %v2216
      %2561 = vmatpush.bf16.msra.mxu0 %v2215
      %2562 = vmatpush.bf16.msra.mxu0 %v2214
      %2563 = vmatpush.bf16.msra.mxu0 %v2213
      %2564 = vmatpush.bf16.msra.mxu0 %v2212
      %2565 = vmatpush.bf16.msra.mxu0 %v2211
      %2566 = vmatpush.bf16.msra.mxu0 %v2210
      %2567 = vmatmul.bf16.gmra.mxu0 %v1472
      %v2568 = vpop.f32.mrf.mxu0
      %v2569 = vadd.f32 %v2520, %v2568
      %v2570 = vpop.f32.mrf.mxu0
      %v2571 = vadd.f32 %v2522, %v2570
      %2572 = vmatmul.bf16.gmra.mxu0 %v1475
      %v2573 = vpop.f32.mrf.mxu0
      %v2574 = vadd.f32 %v2525, %v2573
      %v2575 = vpop.f32.mrf.mxu0
      %v2576 = vadd.f32 %v2527, %v2575
      %2577 = vmatmul.bf16.gmra.mxu0 %v1478
      %v2578 = vpop.f32.mrf.mxu0
      %v2579 = vadd.f32 %v2530, %v2578
      %v2580 = vpop.f32.mrf.mxu0
      %v2581 = vadd.f32 %v2532, %v2580
      %2582 = vmatmul.bf16.gmra.mxu0 %v1481
      %v2583 = vpop.f32.mrf.mxu0
      %v2584 = vadd.f32 %v2535, %v2583
      %v2585 = vpop.f32.mrf.mxu0
      %v2586 = vadd.f32 %v2537, %v2585
      %2587 = vmatmul.bf16.gmra.mxu0 %v1484
      %v2588 = vpop.f32.mrf.mxu0
      %v2589 = vadd.f32 %v2540, %v2588
      %v2590 = vpop.f32.mrf.mxu0
      %v2591 = vadd.f32 %v2542, %v2590
      %2592 = vmatmul.bf16.gmra.mxu0 %v1487
      %v2593 = vpop.f32.mrf.mxu0
      %v2594 = vadd.f32 %v2545, %v2593
      %v2595 = vpop.f32.mrf.mxu0
      %v2596 = vadd.f32 %v2547, %v2595
      %2597 = vmatmul.bf16.gmra.mxu0 %v1490
      %v2598 = vpop.f32.mrf.mxu0
      %v2599 = vadd.f32 %v2550, %v2598
      %v2600 = vpop.f32.mrf.mxu0
      %v2601 = vadd.f32 %v2552, %v2600
      %2602 = vmatmul.bf16.gmra.mxu0 %v1493
      %v2603 = vpop.f32.mrf.mxu0
      %v2604 = vadd.f32 %v2555, %v2603
      %v2605 = vpop.f32.mrf.mxu0
      %v2606 = vadd.f32 %v2557, %v2605
      %2607 = vdwg.mxu0
      %2608 = vmatpush.bf16.msra.mxu0 %v2225
      %2609 = vmatpush.bf16.msra.mxu0 %v2224
      %2610 = vmatpush.bf16.msra.mxu0 %v2223
      %2611 = vmatpush.bf16.msra.mxu0 %v2222
      %2612 = vmatpush.bf16.msra.mxu0 %v2221
      %2613 = vmatpush.bf16.msra.mxu0 %v2220
      %2614 = vmatpush.bf16.msra.mxu0 %v2219
      %2615 = vmatpush.bf16.msra.mxu0 %v2218
      %2616 = vmatmul.bf16.gmra.mxu0 %v1534
      %v2617 = vpop.f32.mrf.mxu0
      %v2618 = vadd.f32 %v2569, %v2617
      %v2619 = vpop.f32.mrf.mxu0
      %v2620 = vadd.f32 %v2571, %v2619
      %2621 = vmatmul.bf16.gmra.mxu0 %v1535
      %v2622 = vpop.f32.mrf.mxu0
      %v2623 = vadd.f32 %v2574, %v2622
      %v2624 = vpop.f32.mrf.mxu0
      %v2625 = vadd.f32 %v2576, %v2624
      %2626 = vmatmul.bf16.gmra.mxu0 %v1536
      %v2627 = vpop.f32.mrf.mxu0
      %v2628 = vadd.f32 %v2579, %v2627
      %v2629 = vpop.f32.mrf.mxu0
      %v2630 = vadd.f32 %v2581, %v2629
      %2631 = vmatmul.bf16.gmra.mxu0 %v1537
      %v2632 = vpop.f32.mrf.mxu0
      %v2633 = vadd.f32 %v2584, %v2632
      %v2634 = vpop.f32.mrf.mxu0
      %v2635 = vadd.f32 %v2586, %v2634
      %2636 = vmatmul.bf16.gmra.mxu0 %v1538
      %v2637 = vpop.f32.mrf.mxu0
      %v2638 = vadd.f32 %v2589, %v2637
      %v2639 = vpop.f32.mrf.mxu0
      %v2640 = vadd.f32 %v2591, %v2639
      %2641 = vmatmul.bf16.gmra.mxu0 %v1539
      %v2642 = vpop.f32.mrf.mxu0
      %v2643 = vadd.f32 %v2594, %v2642
      %v2644 = vpop.f32.mrf.mxu0
      %v2645 = vadd.f32 %v2596, %v2644
      %2646 = vmatmul.bf16.gmra.mxu0 %v1540
      %v2647 = vpop.f32.mrf.mxu0
      %v2648 = vadd.f32 %v2599, %v2647
      %v2649 = vpop.f32.mrf.mxu0
      %v2650 = vadd.f32 %v2601, %v2649
      %2651 = vmatmul.bf16.gmra.mxu0 %v1541
      %v2652 = vpop.f32.mrf.mxu0
      %v2653 = vadd.f32 %v2604, %v2652
      %v2654 = vpop.f32.mrf.mxu0
      %v2655 = vadd.f32 %v2606, %v2654
      %2656 = vdwg.mxu0
      %2657 = vmatpush.bf16.msra.mxu0 %v2233
      %2658 = vmatpush.bf16.msra.mxu0 %v2232
      %2659 = vmatpush.bf16.msra.mxu0 %v2231
      %2660 = vmatpush.bf16.msra.mxu0 %v2230
      %2661 = vmatpush.bf16.msra.mxu0 %v2229
      %2662 = vmatpush.bf16.msra.mxu0 %v2228
      %2663 = vmatpush.bf16.msra.mxu0 %v2227
      %2664 = vmatpush.bf16.msra.mxu0 %v2226
      %2665 = vmatmul.bf16.gmra.mxu0 %v1585
      %v2666 = vpop.f32.mrf.mxu0
      %v2667 = vadd.f32 %v2618, %v2666
      %v2668 = vpop.f32.mrf.mxu0
      %v2669 = vadd.f32 %v2620, %v2668
      %2670 = vmatmul.bf16.gmra.mxu0 %v1597
      %v2671 = vpop.f32.mrf.mxu0
      %v2672 = vadd.f32 %v2623, %v2671
      %v2673 = vpop.f32.mrf.mxu0
      %v2674 = vadd.f32 %v2625, %v2673
      %2675 = vmatmul.bf16.gmra.mxu0 %v1609
      %v2676 = vpop.f32.mrf.mxu0
      %v2677 = vadd.f32 %v2628, %v2676
      %v2678 = vpop.f32.mrf.mxu0
      %v2679 = vadd.f32 %v2630, %v2678
      %2680 = vmatmul.bf16.gmra.mxu0 %v1621
      %v2681 = vpop.f32.mrf.mxu0
      %v2682 = vadd.f32 %v2633, %v2681
      %v2683 = vpop.f32.mrf.mxu0
      %v2684 = vadd.f32 %v2635, %v2683
      %2685 = vmatmul.bf16.gmra.mxu0 %v1633
      %v2686 = vpop.f32.mrf.mxu0
      %v2687 = vadd.f32 %v2638, %v2686
      %v2688 = vpop.f32.mrf.mxu0
      %v2689 = vadd.f32 %v2640, %v2688
      %2690 = vmatmul.bf16.gmra.mxu0 %v1645
      %v2691 = vpop.f32.mrf.mxu0
      %v2692 = vadd.f32 %v2643, %v2691
      %v2693 = vpop.f32.mrf.mxu0
      %v2694 = vadd.f32 %v2645, %v2693
      %2695 = vmatmul.bf16.gmra.mxu0 %v1657
      %v2696 = vpop.f32.mrf.mxu0
      %v2697 = vadd.f32 %v2648, %v2696
      %v2698 = vpop.f32.mrf.mxu0
      %v2699 = vadd.f32 %v2650, %v2698
      %2700 = vmatmul.bf16.gmra.mxu0 %v1669
      %v2701 = vpop.f32.mrf.mxu0
      %v2702 = vadd.f32 %v2653, %v2701
      %v2703 = vpop.f32.mrf.mxu0
      %v2704 = vadd.f32 %v2655, %v2703
      %2705 = vdwg.mxu0
      %2706 = vmatpush.bf16.msra.mxu0 %v2241
      %2707 = vmatpush.bf16.msra.mxu0 %v2240
      %2708 = vmatpush.bf16.msra.mxu0 %v2239
      %2709 = vmatpush.bf16.msra.mxu0 %v2238
      %2710 = vmatpush.bf16.msra.mxu0 %v2237
      %2711 = vmatpush.bf16.msra.mxu0 %v2236
      %2712 = vmatpush.bf16.msra.mxu0 %v2235
      %2713 = vmatpush.bf16.msra.mxu0 %v2234
      %2714 = vmatmul.bf16.gmra.mxu0 %v1704
      %v2715 = vpop.f32.mrf.mxu0
      %v2716 = vadd.f32 %v2667, %v2715
      %v2717 = vpop.f32.mrf.mxu0
      %v2718 = vadd.f32 %v2669, %v2717
      %2719 = vmatmul.bf16.gmra.mxu0 %v1707
      %v2720 = vpop.f32.mrf.mxu0
      %v2721 = vadd.f32 %v2672, %v2720
      %v2722 = vpop.f32.mrf.mxu0
      %v2723 = vadd.f32 %v2674, %v2722
      %2724 = vmatmul.bf16.gmra.mxu0 %v1710
      %v2725 = vpop.f32.mrf.mxu0
      %v2726 = vadd.f32 %v2677, %v2725
      %v2727 = vpop.f32.mrf.mxu0
      %v2728 = vadd.f32 %v2679, %v2727
      %2729 = vmatmul.bf16.gmra.mxu0 %v1713
      %v2730 = vpop.f32.mrf.mxu0
      %v2731 = vadd.f32 %v2682, %v2730
      %v2732 = vpop.f32.mrf.mxu0
      %v2733 = vadd.f32 %v2684, %v2732
      %2734 = vmatmul.bf16.gmra.mxu0 %v1716
      %v2735 = vpop.f32.mrf.mxu0
      %v2736 = vadd.f32 %v2687, %v2735
      %v2737 = vpop.f32.mrf.mxu0
      %v2738 = vadd.f32 %v2689, %v2737
      %2739 = vmatmul.bf16.gmra.mxu0 %v1719
      %v2740 = vpop.f32.mrf.mxu0
      %v2741 = vadd.f32 %v2692, %v2740
      %v2742 = vpop.f32.mrf.mxu0
      %v2743 = vadd.f32 %v2694, %v2742
      %2744 = vmatmul.bf16.gmra.mxu0 %v1722
      %v2745 = vpop.f32.mrf.mxu0
      %v2746 = vadd.f32 %v2697, %v2745
      %v2747 = vpop.f32.mrf.mxu0
      %v2748 = vadd.f32 %v2699, %v2747
      %2749 = vmatmul.bf16.gmra.mxu0 %v1725
      %v2750 = vpop.f32.mrf.mxu0
      %v2751 = vadd.f32 %v2702, %v2750
      %v2752 = vpop.f32.mrf.mxu0
      %v2753 = vadd.f32 %v2704, %v2752
      %2754 = vdwg.mxu0
      %v2755 = vpack.c.bf16 %v2716, %v2716
      %v2756 = vpack.c.bf16 %v2718, %v2718
      %v2757 = vpack.c.bf16 %v2721, %v2721
      %v2758 = vpack.c.bf16 %v2723, %v2723
      %v2759 = vpack.c.bf16 %v2726, %v2726
      %v2760 = vpack.c.bf16 %v2728, %v2728
      %v2761 = vpack.c.bf16 %v2731, %v2731
      %v2762 = vpack.c.bf16 %v2733, %v2733
      %v2763 = vpack.c.bf16 %v2736, %v2736
      %v2764 = vpack.c.bf16 %v2738, %v2738
      %v2765 = vpack.c.bf16 %v2741, %v2741
      %v2766 = vpack.c.bf16 %v2743, %v2743
      %v2767 = vpack.c.bf16 %v2746, %v2746
      %v2768 = vpack.c.bf16 %v2748, %v2748
      %v2769 = vpack.c.bf16 %v2751, %v2751
      %v2770 = vpack.c.bf16 %v2753, %v2753
      %2771 = vst [vmem:[%s578] sm:$0xf] %v2755
      %2772 = vst [vmem:[%s578 + $0x4] sm:$0xf] %v2756
      %2773 = vst [vmem:[%s578 + $0x8] sm:$0xf] %v2757
      %2774 = vst [vmem:[%s578 + $0xc] sm:$0xf] %v2758
      %2775 = vst [vmem:[%s578 + $0x10] sm:$0xf] %v2759
      %2776 = vst [vmem:[%s578 + $0x14] sm:$0xf] %v2760
      %2777 = vst [vmem:[%s578 + $0x18] sm:$0xf] %v2761
      %2778 = vst [vmem:[%s578 + $0x1c] sm:$0xf] %v2762
      %2779 = vst [vmem:[%s578 + $0x20] sm:$0xf] %v2763
      %2780 = vst [vmem:[%s578 + $0x24] sm:$0xf] %v2764
      %2781 = vst [vmem:[%s578 + $0x28] sm:$0xf] %v2765
      %2782 = vst [vmem:[%s578 + $0x2c] sm:$0xf] %v2766
      %2783 = vst [vmem:[%s578 + $0x30] sm:$0xf] %v2767
      %2784 = vst [vmem:[%s578 + $0x34] sm:$0xf] %v2768
      %2785 = vst [vmem:[%s578 + $0x38] sm:$0xf] %v2769
      %2786 = vst [vmem:[%s578 + $0x3c] sm:$0xf] %v2770
      %v2787 = vadd.f32 %v2716, %v2718
      %v2788 = vadd.f32 %v2787, %v2721
      %v2789 = vadd.f32 %v2788, %v2723
      %v2790 = vadd.f32 %v2789, %v2726
      %v2791 = vadd.f32 %v2790, %v2728
      %v2792 = vadd.f32 %v2791, %v2731
      %v2793 = vadd.f32 %v2792, %v2733
      %v2794 = vadd.f32 %v2793, %v2736
      %v2795 = vadd.f32 %v2794, %v2738
      %v2796 = vadd.f32 %v2795, %v2741
      %v2797 = vadd.f32 %v2796, %v2743
      %v2798 = vadd.f32 %v2797, %v2746
      %v2799 = vadd.f32 %v2798, %v2748
      %v2800 = vadd.f32 %v2799, %v2751
      %v2801 = vadd.f32 %v2800, %v2753
      %v2802 = vrot.slane %v2801, 4
      %v2803 = vadd.f32 %v2801, %v2802
      %v2804 = vrot.slane %v2803, 2
      %v2805 = vadd.f32 %v2803, %v2804
      %v2806 = vrot.slane %v2805, 1
      %v2807 = vadd.f32 %v2805, %v2806
      %2808 = vst [vmem:[%s587] sm:$0x1] %v2807
      %v2809 = vmul.f32 %v2716, %v2716
      %v2810 = vmul.f32 %v2718, %v2718
      %v2811 = vmul.f32 %v2721, %v2721
      %v2812 = vmul.f32 %v2723, %v2723
      %v2813 = vmul.f32 %v2726, %v2726
      %v2814 = vmul.f32 %v2728, %v2728
      %v2815 = vmul.f32 %v2731, %v2731
      %v2816 = vmul.f32 %v2733, %v2733
      %v2817 = vmul.f32 %v2736, %v2736
      %v2818 = vmul.f32 %v2738, %v2738
      %v2819 = vmul.f32 %v2741, %v2741
      %v2820 = vmul.f32 %v2743, %v2743
      %v2821 = vmul.f32 %v2746, %v2746
      %v2822 = vmul.f32 %v2748, %v2748
      %v2823 = vmul.f32 %v2751, %v2751
      %v2824 = vmul.f32 %v2753, %v2753
      %v2825 = vadd.f32 %v2809, %v2810
      %v2826 = vadd.f32 %v2825, %v2811
      %v2827 = vadd.f32 %v2826, %v2812
      %v2828 = vadd.f32 %v2827, %v2813
      %v2829 = vadd.f32 %v2828, %v2814
      %v2830 = vadd.f32 %v2829, %v2815
      %v2831 = vadd.f32 %v2830, %v2816
      %v2832 = vadd.f32 %v2831, %v2817
      %v2833 = vadd.f32 %v2832, %v2818
      %v2834 = vadd.f32 %v2833, %v2819
      %v2835 = vadd.f32 %v2834, %v2820
      %v2836 = vadd.f32 %v2835, %v2821
      %v2837 = vadd.f32 %v2836, %v2822
      %v2838 = vadd.f32 %v2837, %v2823
      %v2839 = vadd.f32 %v2838, %v2824
      %v2840 = vrot.slane %v2839, 4
      %v2841 = vadd.f32 %v2839, %v2840
      %v2842 = vrot.slane %v2841, 2
      %v2843 = vadd.f32 %v2841, %v2842
      %v2844 = vrot.slane %v2843, 1
      %v2845 = vadd.f32 %v2843, %v2844
      %2846 = vst [vmem:[%s597] sm:$0x1] %v2845
      %s2847 = smul.u32 8, %s27
      %p2848 = scmp.lt.s32.totalorder %s26, 1
      %s2849 = scalar_select %p2848, %s26, 1
      %p2850 = scmp.lt.s32.totalorder %s2847, 15
      %s2851 = scalar_select %p2850, %s2847, 15
      %p2852 = scmp.lt.s32.totalorder %s28, 0
      %s2853 = scalar_select %p2852, %s28, 0
      %s2854 = smul.addr %s2851, 2
      %s2855 = sadd.s32 %s2853, %s2854
      %s2856 = smul.addr %s2849, 32
      %s2857 = sadd.s32 %s2855, %s2856
      %s2858 = smul.addr %s2857, 4
      %s2859 = scalar_lea.vmem %s7, %s2858
      %s2860 = smul.u32 %s26, 2
      %s2861 = sadd.s32 %s2860, %s27
      %p2862 = scmp.lt.s32.totalorder %s2861, 3
      %s2863 = scalar_select %p2862, %s2861, 3
      %p2864 = scmp.lt.s32.totalorder %s28, 0
      %s2865 = scalar_select %p2864, %s28, 0
      %s2866 = sadd.s32 %s2865, %s2863
      %s2867 = scalar_lea.vmem %s8, %s2866
      %s2868 = smul.u32 %s26, 2
      %s2869 = sadd.s32 %s2868, %s27
      %p2870 = scmp.lt.s32.totalorder %s2869, 3
      %s2871 = scalar_select %p2870, %s2869, 3
      %p2872 = scmp.lt.s32.totalorder %s28, 0
      %s2873 = scalar_select %p2872, %s28, 0
      %s2874 = sadd.s32 %s2873, %s2871
      %s2875 = scalar_lea.vmem %s9, %s2874
      // Predicated region
      $region57: #{conv_block.3} parent=47 // pred_check
        %p2876 = pneg %p256
      $region58: #{conv_block.3} parent=47 // pred_check_branch
        %2878 = sbr.rel (%p2876) target = $region60
      $region59: #{conv_block.3} parent=47 // pred_region
        %s2879 = smul.u32 8, %s27
      $region60: #{conv_block.3} parent=47 // pred_fallthru
        _
      // Predicated region
      $region61: #{conv_block.3} parent=47 // pred_check
        %p2880 = pneg %p288
      $region62: #{conv_block.3} parent=47 // pred_check_branch
        %2882 = sbr.rel (%p2880) target = $region64
      $region63: #{conv_block.3} parent=47 // pred_region
        %s2883 = smul.u32 %s26, 2
        %s2884 = sadd.s32 %s2883, %s27
      $region64: #{conv_block.3} parent=47 // pred_fallthru
        _
      // Predicated region
      $region65: #{conv_block.3} parent=47 // pred_check
        %p2885 = pneg %p320
      $region66: #{conv_block.3} parent=47 // pred_check_branch
        %2887 = sbr.rel (%p2885) target = $region68
      $region67: #{conv_block.3} parent=47 // pred_region
        %s2888 = smul.u32 %s26, 2
        %s2889 = sadd.s32 %s2888, %s27
      $region68: #{conv_block.3} parent=47 // pred_fallthru
        _
    $region48: #{conv_block.3} parent=5 // pred_fallthru
      _
    %p2890 = scmp.le.s32.totalorder 2, %s16
    // Predicated region
    $region69: #{conv_block.3} parent=5 // pred_check
      %p2891 = pneg %p2890
    $region70: #{conv_block.3} parent=5 // pred_check_branch
      %2893 = sbr.rel (%p2891) target = $region72
    $region71: #{conv_block.3} parent=5 // pred_region
      %s2894 = ssub.s32 %s16, 2
      // Predicated region
      $region73: #{conv_block.3} parent=71 // pred_check
        %p2895 = pneg %p262
      $region74: #{conv_block.3} parent=71 // pred_check_branch
        %2897 = sbr.rel (%p2895) target = $region76
      $region75: #{conv_block.3} parent=71 // pred_region
        %s2898 = smul.u32 8, %s30
        %p2899 = scmp.lt.s32.totalorder %s29, 1
        %s2900 = scalar_select %p2899, %s29, 1
        %p2901 = scmp.lt.s32.totalorder %s2898, 15
        %s2902 = scalar_select %p2901, %s2898, 15
        %p2903 = scmp.lt.s32.totalorder %s31, 0
        %s2904 = scalar_select %p2903, %s31, 0
        %s2905 = smul.addr %s2902, 2
        %s2906 = sadd.s32 %s2904, %s2905
        %s2907 = smul.addr %s2900, 32
        %s2908 = sadd.s32 %s2906, %s2907
        %s2909 = smul.addr %s2908, 4
        %s2910 = scalar_lea.vmem %s7, %s2909
      $region76: #{conv_block.3} parent=71 // pred_fallthru
        _
      // Predicated region
      $region77: #{conv_block.3} parent=71 // pred_check
        %p2911 = pneg %p294
      $region78: #{conv_block.3} parent=71 // pred_check_branch
        %2913 = sbr.rel (%p2911) target = $region80
      $region79: #{conv_block.3} parent=71 // pred_region
        %s2914 = smul.u32 %s29, 2
        %s2915 = sadd.s32 %s2914, %s30
        %p2916 = scmp.lt.s32.totalorder %s2915, 3
        %s2917 = scalar_select %p2916, %s2915, 3
        %p2918 = scmp.lt.s32.totalorder %s31, 0
        %s2919 = scalar_select %p2918, %s31, 0
        %s2920 = sadd.s32 %s2919, %s2917
        %s2921 = scalar_lea.vmem %s8, %s2920
      $region80: #{conv_block.3} parent=71 // pred_fallthru
        _
      // Predicated region
      $region81: #{conv_block.3} parent=71 // pred_check
        %p2922 = pneg %p326
      $region82: #{conv_block.3} parent=71 // pred_check_branch
        %2924 = sbr.rel (%p2922) target = $region84
      $region83: #{conv_block.3} parent=71 // pred_region
        %s2925 = smul.u32 %s29, 2
        %s2926 = sadd.s32 %s2925, %s30
        %p2927 = scmp.lt.s32.totalorder %s2926, 3
        %s2928 = scalar_select %p2927, %s2926, 3
        %p2929 = scmp.lt.s32.totalorder %s31, 0
        %s2930 = scalar_select %p2929, %s31, 0
        %s2931 = sadd.s32 %s2930, %s2928
        %s2932 = scalar_lea.vmem %s9, %s2931
      $region84: #{conv_block.3} parent=71 // pred_fallthru
        _
    $region72: #{conv_block.3} parent=5 // pred_fallthru
      _
  $region6: #{conv_block.3} parent=0 // loop_footer
    %s20 = sadd.s32 1, %s16
  $region7: #{conv_block.3} parent=0 // loop_footer_branch
    %15 = sbr.rel target = $region3
  $region8: #{conv_block.3} parent=0 // loop_exit
    _

// kernel: conv_block.4
$region0: #{conv_block.4}
  #allocation0 [shape = 'u32[]', space=smem, size = 0x4, offset = 0x4, fixed_abs, tag = 'smem constant byte address 0x4 - core index']
  #allocation1 [shape = 'u32[72,128]{1,0:T(1,128)}', space=vmem, size = 0x9000, scoped, tag = 'internal scratch']
  #allocation2 [shape = 'bf16[10,18,128]{2,1,0:T(8,128)(2,1)}', space=vmem, size = 0xf000, scoped, tag = 'scratch operand']
  %s0 = inlined_call_operand.vmem [shape: bf16[2,16,16,128], index: 0, kind: input, shape index: {}, may-alias: {0,1,2}]
  %s1 = inlined_call_operand.vmem [shape: bf16[2,16,16,128], index: 1, kind: input, shape index: {}, may-alias: {0,1,2}]
  %s2 = inlined_call_operand.vmem [shape: bf16[2,16,16,128], index: 2, kind: input, shape index: {}, may-alias: {0,1,2}]
  %s3 = inlined_call_operand.vmem [shape: f32[1,128], index: 3, kind: input, shape index: {}]
  %s4 = inlined_call_operand.vmem [shape: f32[1,128], index: 4, kind: input, shape index: {}]
  %s5 = inlined_call_operand.vmem [shape: bf16[1152,128], index: 5, kind: input, shape index: {}]
  %s6 = inlined_call_operand.vmem [shape: f32[1,128], index: 6, kind: input, shape index: {}]
  %s7 = inlined_call_operand.vmem [shape: bf16[2,16,16,128], index: 7, kind: output, shape index: {0}]
  %s8 = inlined_call_operand.vmem [shape: f32[4,1,128], index: 8, kind: output, shape index: {1}]
  %s9 = inlined_call_operand.vmem [shape: f32[4,1,128], index: 9, kind: output, shape index: {2}]
  %10 = xla_tuple %s7, %s8, %s9
  %s11 = sld [smem:[#allocation0]]
  $region85: #{conv_block.4} parent=0
    _
  %s13 = ssub.s32 1, %s11
  %s14 = scalar_select 0, %s13, %s11
  loop: start=0, step=1, limit=6
  $region2: #{conv_block.4} parent=0 // loop_pre_header
    _
  $region3: #{conv_block.4} parent=0 // loop_header
    %s16 = sphi 0, %s20
    %p17 = scmp.ge.s32.totalorder %s16, 6
    %s23 = sphi 0, %s42
    %s24 = sphi 0, %s38
    %s25 = sphi 0, %s34
    %s26 = sphi 0, %s23
    %s27 = sphi 0, %s24
    %s28 = sphi 0, %s25
    %s29 = sphi 0, %s26
    %s30 = sphi 0, %s27
    %s31 = sphi 0, %s28
    %s47 = sphi 0, %s49
    %s50 = sphi 0, %s47
    %s51 = sphi 0, %s50
    %s67 = sphi 0, %s51
    %s83 = sphi 0, %s85
    %s86 = sphi 0, %s83
    %s87 = sphi 0, %s86
    %s103 = sphi 0, %s87
    %s119 = sphi 0, %s121
    %s122 = sphi 0, %s119
    %s123 = sphi 0, %s122
    %s139 = sphi 0, %s123
    %s143 = sphi 0, %s143
    %s145 = sphi 0, %s143
    %s146 = sphi 0, %s145
    %s160 = sphi 0, %s146
    %s164 = sphi 0, %s164
    %s166 = sphi 0, %s164
    %s167 = sphi 0, %s166
    %s181 = sphi 0, %s167
    %s187 = sphi 0, %s189
    %s190 = sphi 0, %s187
    %s191 = sphi 0, %s190
    %s207 = sphi 0, %s191
    %s213 = sphi 0, %s215
    %s216 = sphi 0, %s213
    %s217 = sphi 0, %s216
    %s233 = sphi 0, %s217
    %s243 = sphi 0, %s245
    %s246 = sphi 0, %s243
    %s247 = sphi 0, %s246
    %s263 = sphi 0, %s247
    %s275 = sphi 0, %s277
    %s278 = sphi 0, %s275
    %s279 = sphi 0, %s278
    %s295 = sphi 0, %s279
    %s307 = sphi 0, %s309
    %s310 = sphi 0, %s307
    %s311 = sphi 0, %s310
    %s327 = sphi 0, %s311
  $region4: #{conv_block.4} parent=0 // loop_header_branch
    %19 = sbr.rel (%p17) target = $region8
  $region5: #{conv_block.4} parent=0 // loop_body
    %s21 = ssub.s32 %s16, 1
    %s22 = ssub.s32 %s16, 2
    %s32 = sadd.s32 1, %s25
    %p33 = scmp.ge.s32.totalorder %s32, 1
    %s34 = scalar_select %p33, 0, %s32
    %s35 = sadd.s32 1, %s24
    %s36 = scalar_select %p33, %s35, %s24
    %p37 = scmp.ge.s32.totalorder %s36, 2
    %s38 = scalar_select %p37, 0, %s36
    %s39 = sadd.s32 1, %s23
    %s40 = scalar_select %p37, %s39, %s23
    %p41 = scmp.ge.s32.totalorder %s40, 2
    %s42 = scalar_select %p41, 0, %s40
    %s43 = ssub.s32 %s23, %s42
    %s44 = ssub.s32 %s24, %s38
    %s45 = sor.u32 %s43, %s44
    %p46 = scmp.eq.s32.totalorder %s45, 0
    %s48 = sadd.s32 %s47, 1
    %s49 = scalar_select %p46, %s47, %s48
    %p52 = pneg %p46
    %p53 = scmp.eq.s32.totalorder %s16, 3
    %p54 = por %p52, %p53
    %p55 = scmp.ne.s32.totalorder %s47, %s50
    %p56 = scmp.eq.s32.totalorder %s16, 0
    %p57 = por %p55, %p56
    %p58 = scmp.ne.s32.totalorder %s47, %s50
    %p59 = scmp.eq.s32.totalorder %s21, 3
    %p60 = por %p58, %p59
    %p61 = scmp.ne.s32.totalorder %s50, %s51
    %p62 = scmp.eq.s32.totalorder %s21, 0
    %p63 = por %p61, %p62
    %p64 = scmp.ne.s32.totalorder %s50, %s51
    %p65 = scmp.eq.s32.totalorder %s22, 3
    %p66 = por %p64, %p65
    %p68 = scmp.ne.s32.totalorder %s51, %s67
    %p69 = scmp.eq.s32.totalorder %s22, 0
    %p70 = por %p68, %p69
    %s71 = smul.u32 %s24, 8
    %s72 = ssub.s32 %s71, 1
    %p73 = scmp.gt.s32.totalorder %s72, 0
    %s74 = scalar_select %p73, %s72, 0
    %s75 = smul.u32 %s38, 8
    %s76 = ssub.s32 %s75, 1
    %p77 = scmp.gt.s32.totalorder %s76, 0
    %s78 = scalar_select %p77, %s76, 0
    %s79 = ssub.s32 %s23, %s42
    %s80 = ssub.s32 %s74, %s78
    %s81 = sor.u32 %s79, %s80
    %p82 = scmp.eq.s32.totalorder %s81, 0
    %s84 = sadd.s32 %s83, 1
    %s85 = scalar_select %p82, %s83, %s84
    %p88 = pneg %p82
    %p89 = scmp.eq.s32.totalorder %s16, 3
    %p90 = por %p88, %p89
    %p91 = scmp.ne.s32.totalorder %s83, %s86
    %p92 = scmp.eq.s32.totalorder %s16, 0
    %p93 = por %p91, %p92
    %p94 = scmp.ne.s32.totalorder %s83, %s86
    %p95 = scmp.eq.s32.totalorder %s21, 3
    %p96 = por %p94, %p95
    %p97 = scmp.ne.s32.totalorder %s86, %s87
    %p98 = scmp.eq.s32.totalorder %s21, 0
    %p99 = por %p97, %p98
    %p100 = scmp.ne.s32.totalorder %s86, %s87
    %p101 = scmp.eq.s32.totalorder %s22, 3
    %p102 = por %p100, %p101
    %p104 = scmp.ne.s32.totalorder %s87, %s103
    %p105 = scmp.eq.s32.totalorder %s22, 0
    %p106 = por %p104, %p105
    %s107 = smul.u32 %s24, 8
    %s108 = sadd.s32 %s107, 8
    %p109 = scmp.lt.s32.totalorder %s108, 15
    %s110 = scalar_select %p109, %s108, 15
    %s111 = smul.u32 %s38, 8
    %s112 = sadd.s32 %s111, 8
    %p113 = scmp.lt.s32.totalorder %s112, 15
    %s114 = scalar_select %p113, %s112, 15
    %s115 = ssub.s32 %s23, %s42
    %s116 = ssub.s32 %s110, %s114
    %s117 = sor.u32 %s115, %s116
    %p118 = scmp.eq.s32.totalorder %s117, 0
    %s120 = sadd.s32 %s119, 1
    %s121 = scalar_select %p118, %s119, %s120
    %p124 = pneg %p118
    %p125 = scmp.eq.s32.totalorder %s16, 3
    %p126 = por %p124, %p125
    %p127 = scmp.ne.s32.totalorder %s119, %s122
    %p128 = scmp.eq.s32.totalorder %s16, 0
    %p129 = por %p127, %p128
    %p130 = scmp.ne.s32.totalorder %s119, %s122
    %p131 = scmp.eq.s32.totalorder %s21, 3
    %p132 = por %p130, %p131
    %p133 = scmp.ne.s32.totalorder %s122, %s123
    %p134 = scmp.eq.s32.totalorder %s21, 0
    %p135 = por %p133, %p134
    %p136 = scmp.ne.s32.totalorder %s122, %s123
    %p137 = scmp.eq.s32.totalorder %s22, 3
    %p138 = por %p136, %p137
    %p140 = scmp.ne.s32.totalorder %s123, %s139
    %p141 = scmp.eq.s32.totalorder %s22, 0
    %p142 = por %p140, %p141
    %s144 = sadd.s32 %s143, 1
    %p147 = scmp.eq.s32.totalorder %s16, 3
    %p148 = scmp.ne.s32.totalorder %s143, %s145
    %p149 = scmp.eq.s32.totalorder %s16, 0
    %p150 = por %p148, %p149
    %p151 = scmp.ne.s32.totalorder %s143, %s145
    %p152 = scmp.eq.s32.totalorder %s21, 3
    %p153 = por %p151, %p152
    %p154 = scmp.ne.s32.totalorder %s145, %s146
    %p155 = scmp.eq.s32.totalorder %s21, 0
    %p156 = por %p154, %p155
    %p157 = scmp.ne.s32.totalorder %s145, %s146
    %p158 = scmp.eq.s32.totalorder %s22, 3
    %p159 = por %p157, %p158
    %p161 = scmp.ne.s32.totalorder %s146, %s160
    %p162 = scmp.eq.s32.totalorder %s22, 0
    %p163 = por %p161, %p162
    %s165 = sadd.s32 %s164, 1
    %p168 = scmp.eq.s32.totalorder %s16, 3
    %p169 = scmp.ne.s32.totalorder %s164, %s166
    %p170 = scmp.eq.s32.totalorder %s16, 0
    %p171 = por %p169, %p170
    %p172 = scmp.ne.s32.totalorder %s164, %s166
    %p173 = scmp.eq.s32.totalorder %s21, 3
    %p174 = por %p172, %p173
    %p175 = scmp.ne.s32.totalorder %s166, %s167
    %p176 = scmp.eq.s32.totalorder %s21, 0
    %p177 = por %p175, %p176
    %p178 = scmp.ne.s32.totalorder %s166, %s167
    %p179 = scmp.eq.s32.totalorder %s22, 3
    %p180 = por %p178, %p179
    %p182 = scmp.ne.s32.totalorder %s167, %s181
    %p183 = scmp.eq.s32.totalorder %s22, 0
    %p184 = por %p182, %p183
    %s185 = ssub.s32 %s25, %s34
    %p186 = scmp.eq.s32.totalorder %s185, 0
    %s188 = sadd.s32 %s187, 1
    %s189 = scalar_select %p186, %s187, %s188
    %p192 = pneg %p186
    %p193 = scmp.eq.s32.totalorder %s16, 3
    %p194 = por %p192, %p193
    %p195 = scmp.ne.s32.totalorder %s187, %s190
    %p196 = scmp.eq.s32.totalorder %s16, 0
    %p197 = por %p195, %p196
    %p198 = scmp.ne.s32.totalorder %s187, %s190
    %p199 = scmp.eq.s32.totalorder %s21, 3
    %p200 = por %p198, %p199
    %p201 = scmp.ne.s32.totalorder %s190, %s191
    %p202 = scmp.eq.s32.totalorder %s21, 0
    %p203 = por %p201, %p202
    %p204 = scmp.ne.s32.totalorder %s190, %s191
    %p205 = scmp.eq.s32.totalorder %s22, 3
    %p206 = por %p204, %p205
    %p208 = scmp.ne.s32.totalorder %s191, %s207
    %p209 = scmp.eq.s32.totalorder %s22, 0
    %p210 = por %p208, %p209
    %s211 = ssub.s32 %s25, %s34
    %p212 = scmp.eq.s32.totalorder %s211, 0
    %s214 = sadd.s32 %s213, 1
    %s215 = scalar_select %p212, %s213, %s214
    %p218 = pneg %p212
    %p219 = scmp.eq.s32.totalorder %s16, 3
    %p220 = por %p218, %p219
    %p221 = scmp.ne.s32.totalorder %s213, %s216
    %p222 = scmp.eq.s32.totalorder %s16, 0
    %p223 = por %p221, %p222
    %p224 = scmp.ne.s32.totalorder %s213, %s216
    %p225 = scmp.eq.s32.totalorder %s21, 3
    %p226 = por %p224, %p225
    %p227 = scmp.ne.s32.totalorder %s216, %s217
    %p228 = scmp.eq.s32.totalorder %s21, 0
    %p229 = por %p227, %p228
    %p230 = scmp.ne.s32.totalorder %s216, %s217
    %p231 = scmp.eq.s32.totalorder %s22, 3
    %p232 = por %p230, %p231
    %p234 = scmp.ne.s32.totalorder %s217, %s233
    %p235 = scmp.eq.s32.totalorder %s22, 0
    %p236 = por %p234, %p235
    %s237 = ssub.s32 %s23, %s42
    %s238 = ssub.s32 %s24, %s38
    %s239 = sor.u32 %s237, %s238
    %s240 = ssub.s32 %s25, %s34
    %s241 = sor.u32 %s239, %s240
    %p242 = scmp.eq.s32.totalorder %s241, 0
    %s244 = sadd.s32 %s243, 1
    %s245 = scalar_select %p242, %s243, %s244
    %p248 = pneg %p242
    %p249 = scmp.eq.s32.totalorder %s16, 3
    %p250 = por %p248, %p249
    %p251 = scmp.ne.s32.totalorder %s243, %s246
    %p252 = scmp.eq.s32.totalorder %s16, 0
    %p253 = por %p251, %p252
    %p254 = scmp.ne.s32.totalorder %s243, %s246
    %p255 = scmp.eq.s32.totalorder %s21, 3
    %p256 = por %p254, %p255
    %p257 = scmp.ne.s32.totalorder %s246, %s247
    %p258 = scmp.eq.s32.totalorder %s21, 0
    %p259 = por %p257, %p258
    %p260 = scmp.ne.s32.totalorder %s246, %s247
    %p261 = scmp.eq.s32.totalorder %s22, 3
    %p262 = por %p260, %p261
    %p264 = scmp.ne.s32.totalorder %s247, %s263
    %p265 = scmp.eq.s32.totalorder %s22, 0
    %p266 = por %p264, %p265
    %s267 = smul.u32 %s23, 2
    %s268 = sadd.s32 %s267, %s24
    %s269 = smul.u32 %s42, 2
    %s270 = sadd.s32 %s269, %s38
    %s271 = ssub.s32 %s268, %s270
    %s272 = ssub.s32 %s25, %s34
    %s273 = sor.u32 %s271, %s272
    %p274 = scmp.eq.s32.totalorder %s273, 0
    %s276 = sadd.s32 %s275, 1
    %s277 = scalar_select %p274, %s275, %s276
    %p280 = pneg %p274
    %p281 = scmp.eq.s32.totalorder %s16, 3
    %p282 = por %p280, %p281
    %p283 = scmp.ne.s32.totalorder %s275, %s278
    %p284 = scmp.eq.s32.totalorder %s16, 0
    %p285 = por %p283, %p284
    %p286 = scmp.ne.s32.totalorder %s275, %s278
    %p287 = scmp.eq.s32.totalorder %s21, 3
    %p288 = por %p286, %p287
    %p289 = scmp.ne.s32.totalorder %s278, %s279
    %p290 = scmp.eq.s32.totalorder %s21, 0
    %p291 = por %p289, %p290
    %p292 = scmp.ne.s32.totalorder %s278, %s279
    %p293 = scmp.eq.s32.totalorder %s22, 3
    %p294 = por %p292, %p293
    %p296 = scmp.ne.s32.totalorder %s279, %s295
    %p297 = scmp.eq.s32.totalorder %s22, 0
    %p298 = por %p296, %p297
    %s299 = smul.u32 %s23, 2
    %s300 = sadd.s32 %s299, %s24
    %s301 = smul.u32 %s42, 2
    %s302 = sadd.s32 %s301, %s38
    %s303 = ssub.s32 %s300, %s302
    %s304 = ssub.s32 %s25, %s34
    %s305 = sor.u32 %s303, %s304
    %p306 = scmp.eq.s32.totalorder %s305, 0
    %s308 = sadd.s32 %s307, 1
    %s309 = scalar_select %p306, %s307, %s308
    %p312 = pneg %p306
    %p313 = scmp.eq.s32.totalorder %s16, 3
    %p314 = por %p312, %p313
    %p315 = scmp.ne.s32.totalorder %s307, %s310
    %p316 = scmp.eq.s32.totalorder %s16, 0
    %p317 = por %p315, %p316
    %p318 = scmp.ne.s32.totalorder %s307, %s310
    %p319 = scmp.eq.s32.totalorder %s21, 3
    %p320 = por %p318, %p319
    %p321 = scmp.ne.s32.totalorder %s310, %s311
    %p322 = scmp.eq.s32.totalorder %s21, 0
    %p323 = por %p321, %p322
    %p324 = scmp.ne.s32.totalorder %s310, %s311
    %p325 = scmp.eq.s32.totalorder %s22, 3
    %p326 = por %p324, %p325
    %p328 = scmp.ne.s32.totalorder %s311, %s327
    %p329 = scmp.eq.s32.totalorder %s22, 0
    %p330 = por %p328, %p329
    %p331 = scmp.le.s32.totalorder 1, %s16
    %p332 = scmp.lt.s32.totalorder %s16, 5
    %p333 = pnand %p331, %p332
    %p334 = pneg %p333
    // Predicated region
    $region9: #{conv_block.4} parent=5 // pred_check
      _
    $region10: #{conv_block.4} parent=5 // pred_check_branch
      %336 = sbr.rel (%p333) target = $region12
    $region11: #{conv_block.4} parent=5 // pred_region
      %s337 = ssub.s32 %s16, 1
      // Predicated region
      $region13: #{conv_block.4} parent=11 // pred_check
        %p338 = pneg %p156
      $region14: #{conv_block.4} parent=11 // pred_check_branch
        %340 = sbr.rel (%p338) target = $region16
      $region15: #{conv_block.4} parent=11 // pred_region
        _
      $region16: #{conv_block.4} parent=11 // pred_fallthru
        _
      // Predicated region
      $region17: #{conv_block.4} parent=11 // pred_check
        %p341 = pneg %p177
      $region18: #{conv_block.4} parent=11 // pred_check_branch
        %343 = sbr.rel (%p341) target = $region20
      $region19: #{conv_block.4} parent=11 // pred_region
        _
      $region20: #{conv_block.4} parent=11 // pred_fallthru
        _
      // Predicated region
      $region21: #{conv_block.4} parent=11 // pred_check
        %p344 = pneg %p203
      $region22: #{conv_block.4} parent=11 // pred_check_branch
        %346 = sbr.rel (%p344) target = $region24
      $region23: #{conv_block.4} parent=11 // pred_region
        %p347 = scmp.lt.s32.totalorder %s28, 0
        %s348 = scalar_select %p347, %s28, 0
        %s349 = smul.addr %s348, 4
        %s350 = scalar_lea.vmem %s5, %s349
      $region24: #{conv_block.4} parent=11 // pred_fallthru
        _
      // Predicated region
      $region25: #{conv_block.4} parent=11 // pred_check
        %p351 = pneg %p229
      $region26: #{conv_block.4} parent=11 // pred_check_branch
        %353 = sbr.rel (%p351) target = $region28
      $region27: #{conv_block.4} parent=11 // pred_region
        %p354 = scmp.lt.s32.totalorder %s28, 0
        %s355 = scalar_select %p354, %s28, 0
        %s356 = scalar_lea.vmem %s6, %s355
      $region28: #{conv_block.4} parent=11 // pred_fallthru
        _
    $region12: #{conv_block.4} parent=5 // pred_fallthru
      _
    %p357 = scmp.lt.s32.totalorder %s16, 4
    // Predicated region
    $region29: #{conv_block.4} parent=5 // pred_check
      %p358 = pneg %p357
    $region30: #{conv_block.4} parent=5 // pred_check_branch
      %360 = sbr.rel (%p358) target = $region32
    $region31: #{conv_block.4} parent=5 // pred_region
      // Predicated region
      $region33: #{conv_block.4} parent=31 // pred_check
        %p361 = pneg %p57
      $region34: #{conv_block.4} parent=31 // pred_check_branch
        %363 = sbr.rel (%p361) target = $region36
      $region35: #{conv_block.4} parent=31 // pred_region
        %s364 = smul.u32 8, %s24
        %p365 = scmp.lt.s32.totalorder %s23, 1
        %s366 = scalar_select %p365, %s23, 1
        %p367 = scmp.lt.s32.totalorder %s364, 15
        %s368 = scalar_select %p367, %s364, 15
        %s369 = smul.addr %s368, 2
        %s370 = smul.addr %s366, 32
        %s371 = sadd.s32 %s369, %s370
        %s372 = smul.addr %s371, 4
        %s373 = scalar_lea.vmem %s0, %s372
        %s374 = smul.u32 8, %s24
      $region36: #{conv_block.4} parent=31 // pred_fallthru
        _
      // Predicated region
      $region37: #{conv_block.4} parent=31 // pred_check
        %p375 = pneg %p93
      $region38: #{conv_block.4} parent=31 // pred_check_branch
        %377 = sbr.rel (%p375) target = $region40
      $region39: #{conv_block.4} parent=31 // pred_region
        %s378 = smul.u32 %s24, 8
        %s379 = ssub.s32 %s378, 1
        %p380 = scmp.gt.s32.totalorder %s379, 0
        %s381 = scalar_select %p380, %s379, 0
        %p382 = scmp.lt.s32.totalorder %s23, 1
        %s383 = scalar_select %p382, %s23, 1
        %p384 = scmp.lt.s32.totalorder %s381, 15
        %s385 = scalar_select %p384, %s381, 15
        %s386 = smul.addr %s385, 2
        %s387 = smul.addr %s383, 32
        %s388 = sadd.s32 %s386, %s387
        %s389 = smul.addr %s388, 4
        %s390 = scalar_lea.vmem %s1, %s389
        %s391 = smul.u32 %s24, 8
        %s392 = ssub.s32 %s391, 1
        %p393 = scmp.gt.s32.totalorder %s392, 0
        %s394 = scalar_select %p393, %s392, 0
      $region40: #{conv_block.4} parent=31 // pred_fallthru
        _
      // Predicated region
      $region41: #{conv_block.4} parent=31 // pred_check
        %p395 = pneg %p129
      $region42: #{conv_block.4} parent=31 // pred_check_branch
        %397 = sbr.rel (%p395) target = $region44
      $region43: #{conv_block.4} parent=31 // pred_region
        %s398 = smul.u32 %s24, 8
        %s399 = sadd.s32 %s398, 8
        %p400 = scmp.lt.s32.totalorder %s399, 15
        %s401 = scalar_select %p400, %s399, 15
        %p402 = scmp.lt.s32.totalorder %s23, 1
        %s403 = scalar_select %p402, %s23, 1
        %p404 = scmp.lt.s32.totalorder %s401, 15
        %s405 = scalar_select %p404, %s401, 15
        %s406 = smul.addr %s405, 2
        %s407 = smul.addr %s403, 32
        %s408 = sadd.s32 %s406, %s407
        %s409 = smul.addr %s408, 4
        %s410 = scalar_lea.vmem %s2, %s409
        %s411 = smul.u32 %s24, 8
        %s412 = sadd.s32 %s411, 8
        %p413 = scmp.lt.s32.totalorder %s412, 15
        %s414 = scalar_select %p413, %s412, 15
      $region44: #{conv_block.4} parent=31 // pred_fallthru
        _
    $region32: #{conv_block.4} parent=5 // pred_fallthru
      _
    %p415 = scmp.le.s32.totalorder 1, %s16
    %p416 = scmp.lt.s32.totalorder %s16, 5
    %p417 = pnand %p415, %p416
    %p418 = pneg %p417
    // Predicated region
    $region45: #{conv_block.4} parent=5 // pred_check
      _
    $region46: #{conv_block.4} parent=5 // pred_check_branch
      %420 = sbr.rel (%p417) target = $region48
    $region47: #{conv_block.4} parent=5 // pred_region
      %s421 = ssub.s32 %s16, 1
      %s422 = smul.u32 8, %s27
      %p423 = scmp.lt.s32.totalorder %s26, 1
      %s424 = scalar_select %p423, %s26, 1
      %p425 = scmp.lt.s32.totalorder %s422, 15
      %s426 = scalar_select %p425, %s422, 15
      %s427 = smul.addr %s426, 2
      %s428 = smul.addr %s424, 32
      %s429 = sadd.s32 %s427, %s428
      %s430 = smul.addr %s429, 4
      %s431 = scalar_lea.vmem %s0, %s430
      %p432 = pneg %p63
      %p433 = pneg %p60
      %s434 = smul.u32 %s27, 8
      %s435 = ssub.s32 %s434, 1
      %p436 = scmp.gt.s32.totalorder %s435, 0
      %s437 = scalar_select %p436, %s435, 0
      %p438 = scmp.lt.s32.totalorder %s26, 1
      %s439 = scalar_select %p438, %s26, 1
      %p440 = scmp.lt.s32.totalorder %s437, 15
      %s441 = scalar_select %p440, %s437, 15
      %s442 = smul.addr %s441, 2
      %s443 = smul.addr %s439, 32
      %s444 = sadd.s32 %s442, %s443
      %s445 = smul.addr %s444, 4
      %s446 = scalar_lea.vmem %s1, %s445
      %p447 = pneg %p99
      %p448 = pneg %p96
      %s449 = smul.u32 %s27, 8
      %s450 = sadd.s32 %s449, 8
      %p451 = scmp.lt.s32.totalorder %s450, 15
      %s452 = scalar_select %p451, %s450, 15
      %p453 = scmp.lt.s32.totalorder %s26, 1
      %s454 = scalar_select %p453, %s26, 1
      %p455 = scmp.lt.s32.totalorder %s452, 15
      %s456 = scalar_select %p455, %s452, 15
      %s457 = smul.addr %s456, 2
      %s458 = smul.addr %s454, 32
      %s459 = sadd.s32 %s457, %s458
      %s460 = smul.addr %s459, 4
      %s461 = scalar_lea.vmem %s2, %s460
      %p462 = pneg %p135
      %p463 = pneg %p132
      %p464 = pneg %p156
      %p465 = pneg %p153
      %p466 = pneg %p177
      %p467 = pneg %p174
      %p468 = scmp.lt.s32.totalorder %s28, 0
      %s469 = scalar_select %p468, %s28, 0
      %s470 = smul.addr %s469, 4
      %s471 = scalar_lea.vmem %s5, %s470
      %p472 = pneg %p203
      %p473 = pneg %p200
      %p474 = scmp.lt.s32.totalorder %s28, 0
      %s475 = scalar_select %p474, %s28, 0
      %s476 = scalar_lea.vmem %s6, %s475
      %p477 = pneg %p229
      %p478 = pneg %p226
      %p479 = pneg %p259
      %p480 = pneg %p256
      %s481 = smul.u32 8, %s27
      %p482 = scmp.lt.s32.totalorder %s26, 1
      %s483 = scalar_select %p482, %s26, 1
      %p484 = scmp.lt.s32.totalorder %s481, 15
      %s485 = scalar_select %p484, %s481, 15
      %p486 = scmp.lt.s32.totalorder %s28, 0
      %s487 = scalar_select %p486, %s28, 0
      %s488 = smul.addr %s485, 2
      %s489 = sadd.s32 %s487, %s488
      %s490 = smul.addr %s483, 32
      %s491 = sadd.s32 %s489, %s490
      %s492 = smul.addr %s491, 4
      %s493 = scalar_lea.vmem %s7, %s492
      %p494 = pneg %p291
      %p495 = pneg %p288
      %s496 = smul.u32 %s26, 2
      %s497 = sadd.s32 %s496, %s27
      %p498 = scmp.lt.s32.totalorder %s497, 3
      %s499 = scalar_select %p498, %s497, 3
      %p500 = scmp.lt.s32.totalorder %s28, 0
      %s501 = scalar_select %p500, %s28, 0
      %s502 = sadd.s32 %s501, %s499
      %s503 = scalar_lea.vmem %s8, %s502
      %p504 = pneg %p323
      %p505 = pneg %p320
      %s506 = smul.u32 %s26, 2
      %s507 = sadd.s32 %s506, %s27
      %p508 = scmp.lt.s32.totalorder %s507, 3
      %s509 = scalar_select %p508, %s507, 3
      %p510 = scmp.lt.s32.totalorder %s28, 0
      %s511 = scalar_select %p510, %s28, 0
      %s512 = sadd.s32 %s511, %s509
      %s513 = scalar_lea.vmem %s9, %s512
      %s514 = smul.u32 8, %s27
      %p515 = scmp.lt.s32.totalorder %s26, 1
      %s516 = scalar_select %p515, %s26, 1
      %p517 = scmp.lt.s32.totalorder %s514, 15
      %s518 = scalar_select %p517, %s514, 15
      %s519 = smul.addr %s518, 2
      %s520 = smul.addr %s516, 32
      %s521 = sadd.s32 %s519, %s520
      %s522 = smul.addr %s521, 4
      %s523 = scalar_lea.vmem %s0, %s522
      %s524 = smul.u32 8, %s27
      %s525 = smul.u32 %s27, 8
      %s526 = ssub.s32 %s525, 1
      %p527 = scmp.gt.s32.totalorder %s526, 0
      %s528 = scalar_select %p527, %s526, 0
      %p529 = scmp.lt.s32.totalorder %s26, 1
      %s530 = scalar_select %p529, %s26, 1
      %p531 = scmp.lt.s32.totalorder %s528, 15
      %s532 = scalar_select %p531, %s528, 15
      %s533 = smul.addr %s532, 2
      %s534 = smul.addr %s530, 32
      %s535 = sadd.s32 %s533, %s534
      %s536 = smul.addr %s535, 4
      %s537 = scalar_lea.vmem %s1, %s536
      %s538 = smul.u32 %s27, 8
      %s539 = ssub.s32 %s538, 1
      %p540 = scmp.gt.s32.totalorder %s539, 0
      %s541 = scalar_select %p540, %s539, 0
      %s542 = smul.u32 %s27, 8
      %s543 = sadd.s32 %s542, 8
      %p544 = scmp.lt.s32.totalorder %s543, 15
      %s545 = scalar_select %p544, %s543, 15
      %p546 = scmp.lt.s32.totalorder %s26, 1
      %s547 = scalar_select %p546, %s26, 1
      %p548 = scmp.lt.s32.totalorder %s545, 15
      %s549 = scalar_select %p548, %s545, 15
      %s550 = smul.addr %s549, 2
      %s551 = smul.addr %s547, 32
      %s552 = sadd.s32 %s550, %s551
      %s553 = smul.addr %s552, 4
      %s554 = scalar_lea.vmem %s2, %s553
      %s555 = smul.u32 %s27, 8
      %s556 = sadd.s32 %s555, 8
      %p557 = scmp.lt.s32.totalorder %s556, 15
      %s558 = scalar_select %p557, %s556, 15
      %p559 = scmp.lt.s32.totalorder %s28, 0
      %s560 = scalar_select %p559, %s28, 0
      %s561 = smul.addr %s560, 4
      %s562 = scalar_lea.vmem %s5, %s561
      %p563 = scmp.lt.s32.totalorder %s28, 0
      %s564 = scalar_select %p563, %s28, 0
      %s565 = scalar_lea.vmem %s6, %s564
      %s566 = smul.u32 8, %s27
      %p567 = scmp.lt.s32.totalorder %s26, 1
      %s568 = scalar_select %p567, %s26, 1
      %p569 = scmp.lt.s32.totalorder %s566, 15
      %s570 = scalar_select %p569, %s566, 15
      %p571 = scmp.lt.s32.totalorder %s28, 0
      %s572 = scalar_select %p571, %s28, 0
      %s573 = smul.addr %s570, 2
      %s574 = sadd.s32 %s572, %s573
      %s575 = smul.addr %s568, 32
      %s576 = sadd.s32 %s574, %s575
      %s577 = smul.addr %s576, 4
      %s578 = scalar_lea.vmem %s7, %s577
      %s579 = smul.u32 8, %s27
      %s580 = smul.u32 %s26, 2
      %s581 = sadd.s32 %s580, %s27
      %p582 = scmp.lt.s32.totalorder %s581, 3
      %s583 = scalar_select %p582, %s581, 3
      %p584 = scmp.lt.s32.totalorder %s28, 0
      %s585 = scalar_select %p584, %s28, 0
      %s586 = sadd.s32 %s585, %s583
      %s587 = scalar_lea.vmem %s8, %s586
      %s588 = smul.u32 %s26, 2
      %s589 = sadd.s32 %s588, %s27
      %s590 = smul.u32 %s26, 2
      %s591 = sadd.s32 %s590, %s27
      %p592 = scmp.lt.s32.totalorder %s591, 3
      %s593 = scalar_select %p592, %s591, 3
      %p594 = scmp.lt.s32.totalorder %s28, 0
      %s595 = scalar_select %p594, %s28, 0
      %s596 = sadd.s32 %s595, %s593
      %s597 = scalar_lea.vmem %s9, %s596
      %s598 = smul.u32 %s26, 2
      %s599 = sadd.s32 %s598, %s27
      %601 = vst [vmem:[#allocation2] sm:$0xf] 0
      %602 = vst [vmem:[#allocation2 + $0x4] sm:$0xf] 0
      %603 = vst [vmem:[#allocation2 + $0x8] sm:$0x1] 0
      %604 = vst [vmem:[#allocation2 + $0xc] sm:$0xf] 0
      %605 = vst [vmem:[#allocation2 + $0x10] sm:$0xf] 0
      %606 = vst [vmem:[#allocation2 + $0x14] sm:$0x1] 0
      %607 = vst [vmem:[#allocation2 + $0x18] sm:$0xf] 0
      %608 = vst [vmem:[#allocation2 + $0x1c] sm:$0xf] 0
      %609 = vst [vmem:[#allocation2 + $0x20] sm:$0x1] 0
      %610 = vst [vmem:[#allocation2 + $0x24] sm:$0xf] 0
      %611 = vst [vmem:[#allocation2 + $0x28] sm:$0xf] 0
      %612 = vst [vmem:[#allocation2 + $0x2c] sm:$0x1] 0
      %613 = vst [vmem:[#allocation2 + $0x30] sm:$0xf] 0
      %614 = vst [vmem:[#allocation2 + $0x34] sm:$0xf] 0
      %615 = vst [vmem:[#allocation2 + $0x38] sm:$0x1] 0
      %616 = vst [vmem:[#allocation2 + $0x3c] sm:$0xf] 0
      %617 = vst [vmem:[#allocation2 + $0x40] sm:$0xf] 0
      %618 = vst [vmem:[#allocation2 + $0x44] sm:$0x1] 0
      %619 = vst [vmem:[#allocation2 + $0x48] sm:$0xf] 0
      %620 = vst [vmem:[#allocation2 + $0x4c] sm:$0xf] 0
      %621 = vst [vmem:[#allocation2 + $0x50] sm:$0x1] 0
      %622 = vst [vmem:[#allocation2 + $0x54] sm:$0xf] 0
      %623 = vst [vmem:[#allocation2 + $0x58] sm:$0xf] 0
      %624 = vst [vmem:[#allocation2 + $0x5c] sm:$0x1] 0
      %625 = vst [vmem:[#allocation2 + $0x60] sm:$0xf] 0
      %626 = vst [vmem:[#allocation2 + $0x64] sm:$0xf] 0
      %627 = vst [vmem:[#allocation2 + $0x68] sm:$0x1] 0
      %628 = vst [vmem:[#allocation2 + $0x6c] sm:$0xf] 0
      %629 = vst [vmem:[#allocation2 + $0x70] sm:$0xf] 0
      %630 = vst [vmem:[#allocation2 + $0x74] sm:$0x1] 0
      %v631 = vld [vmem:[%s523] sm:$0xf]
      %v632 = vld [vmem:[%s523 + $0x4] sm:$0xf]
      %v633 = vld [vmem:[%s523 + $0x8] sm:$0xf]
      %v634 = vld [vmem:[%s523 + $0xc] sm:$0xf]
      %v635 = vld [vmem:[%s523 + $0x10] sm:$0xf]
      %v636 = vld [vmem:[%s523 + $0x14] sm:$0xf]
      %v637 = vld [vmem:[%s523 + $0x18] sm:$0xf]
      %v638 = vld [vmem:[%s523 + $0x1c] sm:$0xf]
      %v639 = vld [vmem:[%s523 + $0x20] sm:$0xf]
      %v640 = vld [vmem:[%s523 + $0x24] sm:$0xf]
      %v641 = vld [vmem:[%s523 + $0x28] sm:$0xf]
      %v642 = vld [vmem:[%s523 + $0x2c] sm:$0xf]
      %v643 = vld [vmem:[%s523 + $0x30] sm:$0xf]
      %v644 = vld [vmem:[%s523 + $0x34] sm:$0xf]
      %v645 = vld [vmem:[%s523 + $0x38] sm:$0xf]
      %v646 = vld [vmem:[%s523 + $0x3c] sm:$0xf]
      %v647 = vunpack.c.l.bf16 %v631
      %v648 = vunpack.c.l.bf16 %v632
      %v649 = vunpack.c.l.bf16 %v633
      %v650 = vunpack.c.l.bf16 %v634
      %v651 = vunpack.c.l.bf16 %v635
      %v652 = vunpack.c.l.bf16 %v636
      %v653 = vunpack.c.l.bf16 %v637
      %v654 = vunpack.c.l.bf16 %v638
      %v655 = vunpack.c.l.bf16 %v639
      %v656 = vunpack.c.l.bf16 %v640
      %v657 = vunpack.c.l.bf16 %v641
      %v658 = vunpack.c.l.bf16 %v642
      %v659 = vunpack.c.l.bf16 %v643
      %v660 = vunpack.c.l.bf16 %v644
      %v661 = vunpack.c.l.bf16 %v645
      %v662 = vunpack.c.l.bf16 %v646
      %v663 = vld [vmem:[%s3] sm:$0x1]
      %v665 = vperm.slane %v663, 0
      %v667 = vmul.f32 %v647, %v665
      %v668 = vmul.f32 %v648, %v665
      %v669 = vmul.f32 %v649, %v665
      %v670 = vmul.f32 %v650, %v665
      %v671 = vmul.f32 %v651, %v665
      %v672 = vmul.f32 %v652, %v665
      %v673 = vmul.f32 %v653, %v665
      %v674 = vmul.f32 %v654, %v665
      %v675 = vmul.f32 %v655, %v665
      %v676 = vmul.f32 %v656, %v665
      %v677 = vmul.f32 %v657, %v665
      %v678 = vmul.f32 %v658, %v665
      %v679 = vmul.f32 %v659, %v665
      %v680 = vmul.f32 %v660, %v665
      %v681 = vmul.f32 %v661, %v665
      %v682 = vmul.f32 %v662, %v665
      %v683 = vld [vmem:[%s4] sm:$0x1]
      %v685 = vperm.slane %v683, 0
      %v687 = vadd.f32 %v667, %v685
      %v688 = vadd.f32 %v668, %v685
      %v689 = vadd.f32 %v669, %v685
      %v690 = vadd.f32 %v670, %v685
      %v691 = vadd.f32 %v671, %v685
      %v692 = vadd.f32 %v672, %v685
      %v693 = vadd.f32 %v673, %v685
      %v694 = vadd.f32 %v674, %v685
      %v695 = vadd.f32 %v675, %v685
      %v696 = vadd.f32 %v676, %v685
      %v697 = vadd.f32 %v677, %v685
      %v698 = vadd.f32 %v678, %v685
      %v699 = vadd.f32 %v679, %v685
      %v700 = vadd.f32 %v680, %v685
      %v701 = vadd.f32 %v681, %v685
      %v702 = vadd.f32 %v682, %v685
      %v703 = vmax.f32 %v687, 0.0
      %v704 = vmax.f32 %v688, 0.0
      %v705 = vmax.f32 %v689, 0.0
      %v706 = vmax.f32 %v690, 0.0
      %v707 = vmax.f32 %v691, 0.0
      %v708 = vmax.f32 %v692, 0.0
      %v709 = vmax.f32 %v693, 0.0
      %v710 = vmax.f32 %v694, 0.0
      %v711 = vmax.f32 %v695, 0.0
      %v712 = vmax.f32 %v696, 0.0
      %v713 = vmax.f32 %v697, 0.0
      %v714 = vmax.f32 %v698, 0.0
      %v715 = vmax.f32 %v699, 0.0
      %v716 = vmax.f32 %v700, 0.0
      %v717 = vmax.f32 %v701, 0.0
      %v718 = vmax.f32 %v702, 0.0
      %v719 = vpack.c.bf16 %v703, %v703
      %v720 = vpack.c.bf16 %v704, %v704
      %v721 = vpack.c.bf16 %v705, %v705
      %v722 = vpack.c.bf16 %v706, %v706
      %v723 = vpack.c.bf16 %v707, %v707
      %v724 = vpack.c.bf16 %v708, %v708
      %v725 = vpack.c.bf16 %v709, %v709
      %v726 = vpack.c.bf16 %v710, %v710
      %v727 = vpack.c.bf16 %v711, %v711
      %v728 = vpack.c.bf16 %v712, %v712
      %v729 = vpack.c.bf16 %v713, %v713
      %v730 = vpack.c.bf16 %v714, %v714
      %v731 = vpack.c.bf16 %v715, %v715
      %v732 = vpack.c.bf16 %v716, %v716
      %v733 = vpack.c.bf16 %v717, %v717
      %v734 = vpack.c.bf16 %v718, %v718
      %vm735 = vsmask.f32 256
      %vm736 = vsmask.f32 4368
      %vm737 = vmor %vm735, %vm736
      %v739 = vshrl.u32 %v719, 16
      %v741 = vrot.slane %v739, 7
      %v742 = vshll.u32 %v719, 16
      %v744 = vor.u32 %v741, %v742
      %v745 = vrot.slane %v741, 4
      %v747 = vshrl.u32 %v720, 16
      %v749 = vrot.slane %v747, 7
      %v750 = vshll.u32 %v720, 16
      %v752 = vor.u32 %v749, %v750
      %v753 = vsel %vm737, %v745, %v752
      %v754 = vrot.slane %v749, 4
      %v756 = vshrl.u32 %v721, 16
      %v758 = vrot.slane %v756, 7
      %v759 = vshll.u32 %v721, 16
      %v761 = vor.u32 %v758, %v759
      %v762 = vrot.slane %v758, 4
      %v764 = vshrl.u32 %v722, 16
      %v766 = vrot.slane %v764, 7
      %v767 = vshll.u32 %v722, 16
      %v769 = vor.u32 %v766, %v767
      %v770 = vsel %vm737, %v762, %v769
      %v771 = vrot.slane %v766, 4
      %v773 = vshrl.u32 %v723, 16
      %v775 = vrot.slane %v773, 7
      %v776 = vshll.u32 %v723, 16
      %v778 = vor.u32 %v775, %v776
      %v779 = vrot.slane %v775, 4
      %v781 = vshrl.u32 %v724, 16
      %v783 = vrot.slane %v781, 7
      %v784 = vshll.u32 %v724, 16
      %v786 = vor.u32 %v783, %v784
      %v787 = vsel %vm737, %v779, %v786
      %v788 = vrot.slane %v783, 4
      %v790 = vshrl.u32 %v725, 16
      %v792 = vrot.slane %v790, 7
      %v793 = vshll.u32 %v725, 16
      %v795 = vor.u32 %v792, %v793
      %v796 = vrot.slane %v792, 4
      %v798 = vshrl.u32 %v726, 16
      %v800 = vrot.slane %v798, 7
      %v801 = vshll.u32 %v726, 16
      %v803 = vor.u32 %v800, %v801
      %v804 = vsel %vm737, %v796, %v803
      %v805 = vrot.slane %v800, 4
      %v807 = vshrl.u32 %v727, 16
      %v809 = vrot.slane %v807, 7
      %v810 = vshll.u32 %v727, 16
      %v812 = vor.u32 %v809, %v810
      %v813 = vrot.slane %v809, 4
      %v815 = vshrl.u32 %v728, 16
      %v817 = vrot.slane %v815, 7
      %v818 = vshll.u32 %v728, 16
      %v820 = vor.u32 %v817, %v818
      %v821 = vsel %vm737, %v813, %v820
      %v822 = vrot.slane %v817, 4
      %v824 = vshrl.u32 %v729, 16
      %v826 = vrot.slane %v824, 7
      %v827 = vshll.u32 %v729, 16
      %v829 = vor.u32 %v826, %v827
      %v830 = vrot.slane %v826, 4
      %v832 = vshrl.u32 %v730, 16
      %v834 = vrot.slane %v832, 7
      %v835 = vshll.u32 %v730, 16
      %v837 = vor.u32 %v834, %v835
      %v838 = vsel %vm737, %v830, %v837
      %v839 = vrot.slane %v834, 4
      %v841 = vshrl.u32 %v731, 16
      %v843 = vrot.slane %v841, 7
      %v844 = vshll.u32 %v731, 16
      %v846 = vor.u32 %v843, %v844
      %v847 = vrot.slane %v843, 4
      %v849 = vshrl.u32 %v732, 16
      %v851 = vrot.slane %v849, 7
      %v852 = vshll.u32 %v732, 16
      %v854 = vor.u32 %v851, %v852
      %v855 = vsel %vm737, %v847, %v854
      %v856 = vrot.slane %v851, 4
      %v858 = vshrl.u32 %v733, 16
      %v860 = vrot.slane %v858, 7
      %v861 = vshll.u32 %v733, 16
      %v863 = vor.u32 %v860, %v861
      %v864 = vrot.slane %v860, 4
      %v866 = vshrl.u32 %v734, 16
      %v868 = vrot.slane %v866, 7
      %v869 = vshll.u32 %v734, 16
      %v871 = vor.u32 %v868, %v869
      %v872 = vsel %vm737, %v864, %v871
      %v873 = vrot.slane %v868, 4
      %s898 = scalar_lea.vmem [#allocation2], 12
      %vm899 = vcmask 1043456
      %vm900 = vsmask.f32 7938
      %vm901 = vmand %vm899, %vm900
      %v902 = vld [vmem:[%s898] sm:$0xf]
      %v903 = vsel %vm901, %v744, %v902
      %904 = vst [vmem:[%s898] sm:$0xf] %v903
      %905 = vst [vmem:[%s898 + $0x4] sm:$0xf] %v753
      %vm906 = vcmask 1040384
      %vm907 = vmand %vm906, %vm735
      %v908 = vld [vmem:[%s898 + $0x8] sm:$0x1]
      %v909 = vsel %vm907, %v754, %v908
      %910 = vst [vmem:[%s898 + $0x8] sm:$0x1] %v909
      %v911 = vld [vmem:[%s898 + $0xc] sm:$0xf]
      %v912 = vsel %vm901, %v761, %v911
      %913 = vst [vmem:[%s898 + $0xc] sm:$0xf] %v912
      %914 = vst [vmem:[%s898 + $0x10] sm:$0xf] %v770
      %v915 = vld [vmem:[%s898 + $0x14] sm:$0x1]
      %v916 = vsel %vm907, %v771, %v915
      %917 = vst [vmem:[%s898 + $0x14] sm:$0x1] %v916
      %v918 = vld [vmem:[%s898 + $0x18] sm:$0xf]
      %v919 = vsel %vm901, %v778, %v918
      %920 = vst [vmem:[%s898 + $0x18] sm:$0xf] %v919
      %921 = vst [vmem:[%s898 + $0x1c] sm:$0xf] %v787
      %v922 = vld [vmem:[%s898 + $0x20] sm:$0x1]
      %v923 = vsel %vm907, %v788, %v922
      %924 = vst [vmem:[%s898 + $0x20] sm:$0x1] %v923
      %v925 = vld [vmem:[%s898 + $0x24] sm:$0xf]
      %v926 = vsel %vm901, %v795, %v925
      %927 = vst [vmem:[%s898 + $0x24] sm:$0xf] %v926
      %928 = vst [vmem:[%s898 + $0x28] sm:$0xf] %v804
      %v929 = vld [vmem:[%s898 + $0x2c] sm:$0x1]
      %v930 = vsel %vm907, %v805, %v929
      %931 = vst [vmem:[%s898 + $0x2c] sm:$0x1] %v930
      %v932 = vld [vmem:[%s898 + $0x30] sm:$0xf]
      %v933 = vsel %vm901, %v812, %v932
      %934 = vst [vmem:[%s898 + $0x30] sm:$0xf] %v933
      %935 = vst [vmem:[%s898 + $0x34] sm:$0xf] %v821
      %v936 = vld [vmem:[%s898 + $0x38] sm:$0x1]
      %v937 = vsel %vm907, %v822, %v936
      %938 = vst [vmem:[%s898 + $0x38] sm:$0x1] %v937
      %v939 = vld [vmem:[%s898 + $0x3c] sm:$0xf]
      %v940 = vsel %vm901, %v829, %v939
      %941 = vst [vmem:[%s898 + $0x3c] sm:$0xf] %v940
      %942 = vst [vmem:[%s898 + $0x40] sm:$0xf] %v838
      %v943 = vld [vmem:[%s898 + $0x44] sm:$0x1]
      %v944 = vsel %vm907, %v839, %v943
      %945 = vst [vmem:[%s898 + $0x44] sm:$0x1] %v944
      %v946 = vld [vmem:[%s898 + $0x48] sm:$0xf]
      %v947 = vsel %vm901, %v846, %v946
      %948 = vst [vmem:[%s898 + $0x48] sm:$0xf] %v947
      %949 = vst [vmem:[%s898 + $0x4c] sm:$0xf] %v855
      %v950 = vld [vmem:[%s898 + $0x50] sm:$0x1]
      %v951 = vsel %vm907, %v856, %v950
      %952 = vst [vmem:[%s898 + $0x50] sm:$0x1] %v951
      %v953 = vld [vmem:[%s898 + $0x54] sm:$0xf]
      %v954 = vsel %vm901, %v863, %v953
      %955 = vst [vmem:[%s898 + $0x54] sm:$0xf] %v954
      %956 = vst [vmem:[%s898 + $0x58] sm:$0xf] %v872
      %v957 = vld [vmem:[%s898 + $0x5c] sm:$0x1]
      %v958 = vsel %vm907, %v873, %v957
      %959 = vst [vmem:[%s898 + $0x5c] sm:$0x1] %v958
      %p960 = scmp.gt.s32.totalorder %s27, 0
      // Predicated region
      $region49: #{conv_block.4} parent=47 // pred_check
        %p961 = pneg %p960
      $region50: #{conv_block.4} parent=47 // pred_check_branch
        %963 = sbr.rel (%p961) target = $region52
      $region51: #{conv_block.4} parent=47 // pred_region
        %v964 = vld [vmem:[%s537] sm:$0xf]
        %v965 = vld [vmem:[%s537 + $0x4] sm:$0xf]
        %v966 = vunpack.c.l.bf16 %v964
        %v967 = vunpack.c.l.bf16 %v965
        %v968 = vld [vmem:[%s3] sm:$0x1]
        %v970 = vperm.slane %v968, 0
        %v972 = vmul.f32 %v966, %v970
        %v973 = vmul.f32 %v967, %v970
        %v974 = vld [vmem:[%s4] sm:$0x1]
        %v976 = vperm.slane %v974, 0
        %v978 = vadd.f32 %v972, %v976
        %v979 = vadd.f32 %v973, %v976
        %v980 = vmax.f32 %v978, 0.0
        %v981 = vmax.f32 %v979, 0.0
        %v982 = vpack.c.bf16 %v980, %v980
        %v983 = vpack.c.bf16 %v981, %v981
        %v985 = vshrl.u32 %v982, 16
        %v987 = vrot.slane %v985, 7
        %v988 = vshll.u32 %v982, 16
        %v990 = vor.u32 %v987, %v988
        %v991 = vrot.slane %v987, 4
        %v993 = vshrl.u32 %v983, 16
        %v995 = vrot.slane %v993, 7
        %v996 = vshll.u32 %v983, 16
        %v998 = vor.u32 %v995, %v996
        %v999 = vsel %vm737, %v991, %v998
        %v1000 = vrot.slane %v995, 4
        %v1004 = vld [vmem:[#allocation2] sm:$0xf]
        %v1005 = vsel %vm901, %v990, %v1004
        %1006 = vst [vmem:[#allocation2] sm:$0xf] %v1005
        %1007 = vst [vmem:[#allocation2 + $0x4] sm:$0xf] %v999
        %v1008 = vld [vmem:[#allocation2 + $0x8] sm:$0x1]
        %v1009 = vsel %vm907, %v1000, %v1008
        %1010 = vst [vmem:[#allocation2 + $0x8] sm:$0x1] %v1009
      $region52: #{conv_block.4} parent=47 // pred_fallthru
        _
      %p1011 = scmp.lt.s32.totalorder %s27, 1
      // Predicated region
      $region53: #{conv_block.4} parent=47 // pred_check
        %p1012 = pneg %p1011
      $region54: #{conv_block.4} parent=47 // pred_check_branch
        %1014 = sbr.rel (%p1012) target = $region56
      $region55: #{conv_block.4} parent=47 // pred_region
        %v1015 = vld [vmem:[%s554] sm:$0xf]
        %v1016 = vld [vmem:[%s554 + $0x4] sm:$0xf]
        %v1017 = vunpack.c.l.bf16 %v1015
        %v1018 = vunpack.c.l.bf16 %v1016
        %v1019 = vld [vmem:[%s3] sm:$0x1]
        %v1021 = vperm.slane %v1019, 0
        %v1023 = vmul.f32 %v1017, %v1021
        %v1024 = vmul.f32 %v1018, %v1021
        %v1025 = vld [vmem:[%s4] sm:$0x1]
        %v1027 = vperm.slane %v1025, 0
        %v1029 = vadd.f32 %v1023, %v1027
        %v1030 = vadd.f32 %v1024, %v1027
        %v1031 = vmax.f32 %v1029, 0.0
        %v1032 = vmax.f32 %v1030, 0.0
        %v1033 = vpack.c.bf16 %v1031, %v1031
        %v1034 = vpack.c.bf16 %v1032, %v1032
        %v1036 = vshrl.u32 %v1033, 16
        %v1038 = vrot.slane %v1036, 7
        %v1039 = vshll.u32 %v1033, 16
        %v1041 = vor.u32 %v1038, %v1039
        %v1042 = vrot.slane %v1038, 4
        %v1044 = vshrl.u32 %v1034, 16
        %v1046 = vrot.slane %v1044, 7
        %v1047 = vshll.u32 %v1034, 16
        %v1049 = vor.u32 %v1046, %v1047
        %v1050 = vsel %vm737, %v1042, %v1049
        %v1051 = vrot.slane %v1046, 4
        %s1055 = scalar_lea.vmem [#allocation2], 108
        %v1056 = vld [vmem:[%s1055] sm:$0xf]
        %v1057 = vsel %vm901, %v1041, %v1056
        %1058 = vst [vmem:[%s1055] sm:$0xf] %v1057
        %1059 = vst [vmem:[%s1055 + $0x4] sm:$0xf] %v1050
        %v1060 = vld [vmem:[%s1055 + $0x8] sm:$0x1]
        %v1061 = vsel %vm907, %v1051, %v1060
        %1062 = vst [vmem:[%s1055 + $0x8] sm:$0x1] %v1061
      $region56: #{conv_block.4} parent=47 // pred_fallthru
        _
      %v1063 = vld [vmem:[#allocation2] sm:$0xf]
      %v1064 = vld [vmem:[#allocation2 + $0x4] sm:$0xf]
      %v1065 = vld [vmem:[#allocation2 + $0xc] sm:$0xf]
      %v1066 = vld [vmem:[#allocation2 + $0x10] sm:$0xf]
      %v1067 = vld [vmem:[#allocation2 + $0x18] sm:$0xf]
      %v1068 = vld [vmem:[#allocation2 + $0x1c] sm:$0xf]
      %v1069 = vld [vmem:[#allocation2 + $0x24] sm:$0xf]
      %v1070 = vld [vmem:[#allocation2 + $0x28] sm:$0xf]
      %v1071 = vld [vmem:[#allocation2 + $0x30] sm:$0xf]
      %v1072 = vld [vmem:[#allocation2 + $0x34] sm:$0xf]
      %v1073 = vld [vmem:[#allocation2 + $0x3c] sm:$0xf]
      %v1074 = vld [vmem:[#allocation2 + $0x40] sm:$0xf]
      %v1075 = vld [vmem:[#allocation2 + $0x48] sm:$0xf]
      %v1076 = vld [vmem:[#allocation2 + $0x4c] sm:$0xf]
      %v1077 = vld [vmem:[#allocation2 + $0x54] sm:$0xf]
      %v1078 = vld [vmem:[#allocation2 + $0x58] sm:$0xf]
      %v1079 = vld [vmem:[#allocation2 + $0x8] sm:$0x1]
      %v1080 = vld [vmem:[#allocation2 + $0x14] sm:$0x1]
      %v1081 = vld [vmem:[#allocation2 + $0x20] sm:$0x1]
      %v1082 = vld [vmem:[#allocation2 + $0x2c] sm:$0x1]
      %v1083 = vld [vmem:[#allocation2 + $0x38] sm:$0x1]
      %v1084 = vld [vmem:[#allocation2 + $0x44] sm:$0x1]
      %v1085 = vld [vmem:[#allocation2 + $0x50] sm:$0x1]
      %v1086 = vld [vmem:[#allocation2 + $0x5c] sm:$0x1]
      %v1087 = vld [vmem:[#allocation2] sm:$0xe]
      %v1088 = vld [vmem:[#allocation2 + $0xc] sm:$0xe]
      %v1089 = vld [vmem:[#allocation2 + $0x18] sm:$0xe]
      %v1090 = vld [vmem:[#allocation2 + $0x24] sm:$0xe]
      %v1091 = vld [vmem:[#allocation2 + $0x30] sm:$0xe]
      %v1092 = vld [vmem:[#allocation2 + $0x3c] sm:$0xe]
      %v1093 = vld [vmem:[#allocation2 + $0x48] sm:$0xe]
      %v1094 = vld [vmem:[#allocation2 + $0x54] sm:$0xe]
      %v1095 = vld [vmem:[%s898] sm:$0xf]
      %v1096 = vld [vmem:[%s898 + $0x4] sm:$0xf]
      %v1097 = vld [vmem:[%s898 + $0xc] sm:$0xf]
      %v1098 = vld [vmem:[%s898 + $0x10] sm:$0xf]
      %v1099 = vld [vmem:[%s898 + $0x18] sm:$0xf]
      %v1100 = vld [vmem:[%s898 + $0x1c] sm:$0xf]
      %v1101 = vld [vmem:[%s898 + $0x24] sm:$0xf]
      %v1102 = vld [vmem:[%s898 + $0x28] sm:$0xf]
      %v1103 = vld [vmem:[%s898 + $0x30] sm:$0xf]
      %v1104 = vld [vmem:[%s898 + $0x34] sm:$0xf]
      %v1105 = vld [vmem:[%s898 + $0x3c] sm:$0xf]
      %v1106 = vld [vmem:[%s898 + $0x40] sm:$0xf]
      %v1107 = vld [vmem:[%s898 + $0x48] sm:$0xf]
      %v1108 = vld [vmem:[%s898 + $0x4c] sm:$0xf]
      %v1109 = vld [vmem:[%s898 + $0x54] sm:$0xf]
      %v1110 = vld [vmem:[%s898 + $0x58] sm:$0xf]
      %v1111 = vld [vmem:[%s898 + $0x8] sm:$0x1]
      %v1112 = vld [vmem:[%s898 + $0x14] sm:$0x1]
      %v1113 = vld [vmem:[%s898 + $0x20] sm:$0x1]
      %v1114 = vld [vmem:[%s898 + $0x2c] sm:$0x1]
      %v1115 = vld [vmem:[%s898 + $0x38] sm:$0x1]
      %v1116 = vld [vmem:[%s898 + $0x44] sm:$0x1]
      %v1117 = vld [vmem:[%s898 + $0x50] sm:$0x1]
      %v1118 = vld [vmem:[%s898 + $0x5c] sm:$0x1]
      %v1119 = vld [vmem:[%s898] sm:$0xe]
      %v1120 = vld [vmem:[%s898 + $0xc] sm:$0xe]
      %v1121 = vld [vmem:[%s898 + $0x18] sm:$0xe]
      %v1122 = vld [vmem:[%s898 + $0x24] sm:$0xe]
      %v1123 = vld [vmem:[%s898 + $0x30] sm:$0xe]
      %v1124 = vld [vmem:[%s898 + $0x3c] sm:$0xe]
      %v1125 = vld [vmem:[%s898 + $0x48] sm:$0xe]
      %v1126 = vld [vmem:[%s898 + $0x54] sm:$0xe]
      %s1127 = scalar_lea.vmem [#allocation2], 24
      %v1128 = vld [vmem:[%s1127] sm:$0xf]
      %v1129 = vld [vmem:[%s1127 + $0x4] sm:$0xf]
      %v1130 = vld [vmem:[%s1127 + $0xc] sm:$0xf]
      %v1131 = vld [vmem:[%s1127 + $0x10] sm:$0xf]
      %v1132 = vld [vmem:[%s1127 + $0x18] sm:$0xf]
      %v1133 = vld [vmem:[%s1127 + $0x1c] sm:$0xf]
      %v1134 = vld [vmem:[%s1127 + $0x24] sm:$0xf]
      %v1135 = vld [vmem:[%s1127 + $0x28] sm:$0xf]
      %v1136 = vld [vmem:[%s1127 + $0x30] sm:$0xf]
      %v1137 = vld [vmem:[%s1127 + $0x34] sm:$0xf]
      %v1138 = vld [vmem:[%s1127 + $0x3c] sm:$0xf]
      %v1139 = vld [vmem:[%s1127 + $0x40] sm:$0xf]
      %v1140 = vld [vmem:[%s1127 + $0x48] sm:$0xf]
      %v1141 = vld [vmem:[%s1127 + $0x4c] sm:$0xf]
      %v1142 = vld [vmem:[%s1127 + $0x54] sm:$0xf]
      %v1143 = vld [vmem:[%s1127 + $0x58] sm:$0xf]
      %v1144 = vld [vmem:[%s1127 + $0x8] sm:$0x1]
      %v1145 = vld [vmem:[%s1127 + $0x14] sm:$0x1]
      %v1146 = vld [vmem:[%s1127 + $0x20] sm:$0x1]
      %v1147 = vld [vmem:[%s1127 + $0x2c] sm:$0x1]
      %v1148 = vld [vmem:[%s1127 + $0x38] sm:$0x1]
      %v1149 = vld [vmem:[%s1127 + $0x44] sm:$0x1]
      %v1150 = vld [vmem:[%s1127 + $0x50] sm:$0x1]
      %v1151 = vld [vmem:[%s1127 + $0x5c] sm:$0x1]
      %v1152 = vld [vmem:[%s1127] sm:$0xe]
      %v1153 = vld [vmem:[%s1127 + $0xc] sm:$0xe]
      %v1154 = vld [vmem:[%s1127 + $0x18] sm:$0xe]
      %v1155 = vld [vmem:[%s1127 + $0x24] sm:$0xe]
      %v1156 = vld [vmem:[%s1127 + $0x30] sm:$0xe]
      %v1157 = vld [vmem:[%s1127 + $0x3c] sm:$0xe]
      %v1158 = vld [vmem:[%s1127 + $0x48] sm:$0xe]
      %v1159 = vld [vmem:[%s1127 + $0x54] sm:$0xe]
      %v1176 = vunpack.c.l.b16 %v1063
      %v1177 = vunpack.c.l.b16 %v1064
      %v1178 = vunpack.c.l.b16 %v1065
      %v1179 = vunpack.c.l.b16 %v1066
      %v1180 = vunpack.c.l.b16 %v1067
      %v1181 = vunpack.c.l.b16 %v1068
      %v1182 = vunpack.c.l.b16 %v1069
      %v1183 = vunpack.c.l.b16 %v1070
      %v1184 = vunpack.c.l.b16 %v1071
      %v1185 = vunpack.c.l.b16 %v1072
      %v1186 = vunpack.c.l.b16 %v1073
      %v1187 = vunpack.c.l.b16 %v1074
      %v1188 = vunpack.c.l.b16 %v1075
      %v1189 = vunpack.c.l.b16 %v1076
      %v1190 = vunpack.c.l.b16 %v1077
      %v1191 = vunpack.c.l.b16 %v1078
      %v1192 = vpack.c.b16 %v1177, %v1176
      %v1193 = vpack.c.b16 %v1179, %v1178
      %v1194 = vpack.c.b16 %v1181, %v1180
      %v1195 = vpack.c.b16 %v1183, %v1182
      %v1196 = vpack.c.b16 %v1185, %v1184
      %v1197 = vpack.c.b16 %v1187, %v1186
      %v1198 = vpack.c.b16 %v1189, %v1188
      %v1199 = vpack.c.b16 %v1191, %v1190
      %v1216 = vunpack.c.l.b16 %v1079
      %v1217 = vunpack.c.l.b16 %v1080
      %v1218 = vunpack.c.l.b16 %v1081
      %v1219 = vunpack.c.l.b16 %v1082
      %v1220 = vunpack.c.l.b16 %v1083
      %v1221 = vunpack.c.l.b16 %v1084
      %v1222 = vunpack.c.l.b16 %v1085
      %v1223 = vunpack.c.l.b16 %v1086
      %v1224 = vpack.c.b16 %v1216, %v1216
      %v1225 = vpack.c.b16 %v1217, %v1217
      %v1226 = vpack.c.b16 %v1218, %v1218
      %v1227 = vpack.c.b16 %v1219, %v1219
      %v1228 = vpack.c.b16 %v1220, %v1220
      %v1229 = vpack.c.b16 %v1221, %v1221
      %v1230 = vpack.c.b16 %v1222, %v1222
      %v1231 = vpack.c.b16 %v1223, %v1223
      %vm1232 = vsmask.f32 7424
      %v1234 = vshrl.u32 %v1192, 16
      %v1236 = vshll.u32 %v1192, 16
      %v1238 = vrot.slane %v1236, 1
      %v1239 = vor.u32 %v1234, %v1238
      %v1241 = vshll.u32 %v1224, 16
      %v1243 = vrot.slane %v1241, 1
      %v1244 = vsel %vm1232, %v1239, %v1243
      %v1246 = vshrl.u32 %v1193, 16
      %v1248 = vshll.u32 %v1193, 16
      %v1250 = vrot.slane %v1248, 1
      %v1251 = vor.u32 %v1246, %v1250
      %v1253 = vshll.u32 %v1225, 16
      %v1255 = vrot.slane %v1253, 1
      %v1256 = vsel %vm1232, %v1251, %v1255
      %v1258 = vshrl.u32 %v1194, 16
      %v1260 = vshll.u32 %v1194, 16
      %v1262 = vrot.slane %v1260, 1
      %v1263 = vor.u32 %v1258, %v1262
      %v1265 = vshll.u32 %v1226, 16
      %v1267 = vrot.slane %v1265, 1
      %v1268 = vsel %vm1232, %v1263, %v1267
      %v1270 = vshrl.u32 %v1195, 16
      %v1272 = vshll.u32 %v1195, 16
      %v1274 = vrot.slane %v1272, 1
      %v1275 = vor.u32 %v1270, %v1274
      %v1277 = vshll.u32 %v1227, 16
      %v1279 = vrot.slane %v1277, 1
      %v1280 = vsel %vm1232, %v1275, %v1279
      %v1282 = vshrl.u32 %v1196, 16
      %v1284 = vshll.u32 %v1196, 16
      %v1286 = vrot.slane %v1284, 1
      %v1287 = vor.u32 %v1282, %v1286
      %v1289 = vshll.u32 %v1228, 16
      %v1291 = vrot.slane %v1289, 1
      %v1292 = vsel %vm1232, %v1287, %v1291
      %v1294 = vshrl.u32 %v1197, 16
      %v1296 = vshll.u32 %v1197, 16
      %v1298 = vrot.slane %v1296, 1
      %v1299 = vor.u32 %v1294, %v1298
      %v1301 = vshll.u32 %v1229, 16
      %v1303 = vrot.slane %v1301, 1
      %v1304 = vsel %vm1232, %v1299, %v1303
      %v1306 = vshrl.u32 %v1198, 16
      %v1308 = vshll.u32 %v1198, 16
      %v1310 = vrot.slane %v1308, 1
      %v1311 = vor.u32 %v1306, %v1310
      %v1313 = vshll.u32 %v1230, 16
      %v1315 = vrot.slane %v1313, 1
      %v1316 = vsel %vm1232, %v1311, %v1315
      %v1318 = vshrl.u32 %v1199, 16
      %v1320 = vshll.u32 %v1199, 16
      %v1322 = vrot.slane %v1320, 1
      %v1323 = vor.u32 %v1318, %v1322
      %v1325 = vshll.u32 %v1231, 16
      %v1327 = vrot.slane %v1325, 1
      %v1328 = vsel %vm1232, %v1323, %v1327
      %v1345 = vunpack.c.l.b16 %v1087
      %v1346 = vunpack.c.l.b16 %v1088
      %v1347 = vunpack.c.l.b16 %v1089
      %v1348 = vunpack.c.l.b16 %v1090
      %v1349 = vunpack.c.l.b16 %v1091
      %v1350 = vunpack.c.l.b16 %v1092
      %v1351 = vunpack.c.l.b16 %v1093
      %v1352 = vunpack.c.l.b16 %v1094
      %v1353 = vpack.c.b16 %v1177, %v1345
      %v1354 = vpack.c.b16 %v1179, %v1346
      %v1355 = vpack.c.b16 %v1181, %v1347
      %v1356 = vpack.c.b16 %v1183, %v1348
      %v1357 = vpack.c.b16 %v1185, %v1349
      %v1358 = vpack.c.b16 %v1187, %v1350
      %v1359 = vpack.c.b16 %v1189, %v1351
      %v1360 = vpack.c.b16 %v1191, %v1352
      %vm1361 = vcmask 1046528
      %v1362 = vrot.slane %v1353, 1
      %v1363 = vrot.slane %v1224, 1
      %v1364 = vsel %vm1361, %v1362, %v1363
      %v1365 = vrot.slane %v1354, 1
      %v1366 = vrot.slane %v1225, 1
      %v1367 = vsel %vm1361, %v1365, %v1366
      %v1368 = vrot.slane %v1355, 1
      %v1369 = vrot.slane %v1226, 1
      %v1370 = vsel %vm1361, %v1368, %v1369
      %v1371 = vrot.slane %v1356, 1
      %v1372 = vrot.slane %v1227, 1
      %v1373 = vsel %vm1361, %v1371, %v1372
      %v1374 = vrot.slane %v1357, 1
      %v1375 = vrot.slane %v1228, 1
      %v1376 = vsel %vm1361, %v1374, %v1375
      %v1377 = vrot.slane %v1358, 1
      %v1378 = vrot.slane %v1229, 1
      %v1379 = vsel %vm1361, %v1377, %v1378
      %v1380 = vrot.slane %v1359, 1
      %v1381 = vrot.slane %v1230, 1
      %v1382 = vsel %vm1361, %v1380, %v1381
      %v1383 = vrot.slane %v1360, 1
      %v1384 = vrot.slane %v1231, 1
      %v1385 = vsel %vm1361, %v1383, %v1384
      %v1410 = vunpack.c.l.b16 %v1095
      %v1411 = vunpack.c.l.b16 %v1096
      %v1412 = vunpack.c.l.b16 %v1097
      %v1413 = vunpack.c.l.b16 %v1098
      %v1414 = vunpack.c.l.b16 %v1099
      %v1415 = vunpack.c.l.b16 %v1100
      %v1416 = vunpack.c.l.b16 %v1101
      %v1417 = vunpack.c.l.b16 %v1102
      %v1418 = vunpack.c.l.b16 %v1103
      %v1419 = vunpack.c.l.b16 %v1104
      %v1420 = vunpack.c.l.b16 %v1105
      %v1421 = vunpack.c.l.b16 %v1106
      %v1422 = vunpack.c.l.b16 %v1107
      %v1423 = vunpack.c.l.b16 %v1108
      %v1424 = vunpack.c.l.b16 %v1109
      %v1425 = vunpack.c.l.b16 %v1110
      %v1426 = vpack.c.b16 %v1411, %v1410
      %v1427 = vpack.c.b16 %v1413, %v1412
      %v1428 = vpack.c.b16 %v1415, %v1414
      %v1429 = vpack.c.b16 %v1417, %v1416
      %v1430 = vpack.c.b16 %v1419, %v1418
      %v1431 = vpack.c.b16 %v1421, %v1420
      %v1432 = vpack.c.b16 %v1423, %v1422
      %v1433 = vpack.c.b16 %v1425, %v1424
      %v1450 = vunpack.c.l.b16 %v1111
      %v1451 = vunpack.c.l.b16 %v1112
      %v1452 = vunpack.c.l.b16 %v1113
      %v1453 = vunpack.c.l.b16 %v1114
      %v1454 = vunpack.c.l.b16 %v1115
      %v1455 = vunpack.c.l.b16 %v1116
      %v1456 = vunpack.c.l.b16 %v1117
      %v1457 = vunpack.c.l.b16 %v1118
      %v1458 = vpack.c.b16 %v1450, %v1450
      %v1459 = vpack.c.b16 %v1451, %v1451
      %v1460 = vpack.c.b16 %v1452, %v1452
      %v1461 = vpack.c.b16 %v1453, %v1453
      %v1462 = vpack.c.b16 %v1454, %v1454
      %v1463 = vpack.c.b16 %v1455, %v1455
      %v1464 = vpack.c.b16 %v1456, %v1456
      %v1465 = vpack.c.b16 %v1457, %v1457
      %v1467 = vshrl.u32 %v1426, 16
      %v1469 = vshll.u32 %v1426, 16
      %v1471 = vrot.slane %v1469, 1
      %v1472 = vor.u32 %v1467, %v1471
      %v1474 = vshll.u32 %v1458, 16
      %v1476 = vrot.slane %v1474, 1
      %v1477 = vsel %vm1232, %v1472, %v1476
      %v1479 = vshrl.u32 %v1427, 16
      %v1481 = vshll.u32 %v1427, 16
      %v1483 = vrot.slane %v1481, 1
      %v1484 = vor.u32 %v1479, %v1483
      %v1486 = vshll.u32 %v1459, 16
      %v1488 = vrot.slane %v1486, 1
      %v1489 = vsel %vm1232, %v1484, %v1488
      %v1491 = vshrl.u32 %v1428, 16
      %v1493 = vshll.u32 %v1428, 16
      %v1495 = vrot.slane %v1493, 1
      %v1496 = vor.u32 %v1491, %v1495
      %v1498 = vshll.u32 %v1460, 16
      %v1500 = vrot.slane %v1498, 1
      %v1501 = vsel %vm1232, %v1496, %v1500
      %v1503 = vshrl.u32 %v1429, 16
      %v1505 = vshll.u32 %v1429, 16
      %v1507 = vrot.slane %v1505, 1
      %v1508 = vor.u32 %v1503, %v1507
      %v1510 = vshll.u32 %v1461, 16
      %v1512 = vrot.slane %v1510, 1
      %v1513 = vsel %vm1232, %v1508, %v1512
      %v1515 = vshrl.u32 %v1430, 16
      %v1517 = vshll.u32 %v1430, 16
      %v1519 = vrot.slane %v1517, 1
      %v1520 = vor.u32 %v1515, %v1519
      %v1522 = vshll.u32 %v1462, 16
      %v1524 = vrot.slane %v1522, 1
      %v1525 = vsel %vm1232, %v1520, %v1524
      %v1527 = vshrl.u32 %v1431, 16
      %v1529 = vshll.u32 %v1431, 16
      %v1531 = vrot.slane %v1529, 1
      %v1532 = vor.u32 %v1527, %v1531
      %v1534 = vshll.u32 %v1463, 16
      %v1536 = vrot.slane %v1534, 1
      %v1537 = vsel %vm1232, %v1532, %v1536
      %v1539 = vshrl.u32 %v1432, 16
      %v1541 = vshll.u32 %v1432, 16
      %v1543 = vrot.slane %v1541, 1
      %v1544 = vor.u32 %v1539, %v1543
      %v1546 = vshll.u32 %v1464, 16
      %v1548 = vrot.slane %v1546, 1
      %v1549 = vsel %vm1232, %v1544, %v1548
      %v1551 = vshrl.u32 %v1433, 16
      %v1553 = vshll.u32 %v1433, 16
      %v1555 = vrot.slane %v1553, 1
      %v1556 = vor.u32 %v1551, %v1555
      %v1558 = vshll.u32 %v1465, 16
      %v1560 = vrot.slane %v1558, 1
      %v1561 = vsel %vm1232, %v1556, %v1560
      %v1578 = vunpack.c.l.b16 %v1119
      %v1579 = vunpack.c.l.b16 %v1120
      %v1580 = vunpack.c.l.b16 %v1121
      %v1581 = vunpack.c.l.b16 %v1122
      %v1582 = vunpack.c.l.b16 %v1123
      %v1583 = vunpack.c.l.b16 %v1124
      %v1584 = vunpack.c.l.b16 %v1125
      %v1585 = vunpack.c.l.b16 %v1126
      %v1586 = vpack.c.b16 %v1411, %v1578
      %v1587 = vpack.c.b16 %v1413, %v1579
      %v1588 = vpack.c.b16 %v1415, %v1580
      %v1589 = vpack.c.b16 %v1417, %v1581
      %v1590 = vpack.c.b16 %v1419, %v1582
      %v1591 = vpack.c.b16 %v1421, %v1583
      %v1592 = vpack.c.b16 %v1423, %v1584
      %v1593 = vpack.c.b16 %v1425, %v1585
      %v1594 = vrot.slane %v1586, 1
      %v1595 = vrot.slane %v1458, 1
      %v1596 = vsel %vm1361, %v1594, %v1595
      %v1597 = vrot.slane %v1587, 1
      %v1598 = vrot.slane %v1459, 1
      %v1599 = vsel %vm1361, %v1597, %v1598
      %v1600 = vrot.slane %v1588, 1
      %v1601 = vrot.slane %v1460, 1
      %v1602 = vsel %vm1361, %v1600, %v1601
      %v1603 = vrot.slane %v1589, 1
      %v1604 = vrot.slane %v1461, 1
      %v1605 = vsel %vm1361, %v1603, %v1604
      %v1606 = vrot.slane %v1590, 1
      %v1607 = vrot.slane %v1462, 1
      %v1608 = vsel %vm1361, %v1606, %v1607
      %v1609 = vrot.slane %v1591, 1
      %v1610 = vrot.slane %v1463, 1
      %v1611 = vsel %vm1361, %v1609, %v1610
      %v1612 = vrot.slane %v1592, 1
      %v1613 = vrot.slane %v1464, 1
      %v1614 = vsel %vm1361, %v1612, %v1613
      %v1615 = vrot.slane %v1593, 1
      %v1616 = vrot.slane %v1465, 1
      %v1617 = vsel %vm1361, %v1615, %v1616
      %v1642 = vunpack.c.l.b16 %v1128
      %v1643 = vunpack.c.l.b16 %v1129
      %v1644 = vunpack.c.l.b16 %v1130
      %v1645 = vunpack.c.l.b16 %v1131
      %v1646 = vunpack.c.l.b16 %v1132
      %v1647 = vunpack.c.l.b16 %v1133
      %v1648 = vunpack.c.l.b16 %v1134
      %v1649 = vunpack.c.l.b16 %v1135
      %v1650 = vunpack.c.l.b16 %v1136
      %v1651 = vunpack.c.l.b16 %v1137
      %v1652 = vunpack.c.l.b16 %v1138
      %v1653 = vunpack.c.l.b16 %v1139
      %v1654 = vunpack.c.l.b16 %v1140
      %v1655 = vunpack.c.l.b16 %v1141
      %v1656 = vunpack.c.l.b16 %v1142
      %v1657 = vunpack.c.l.b16 %v1143
      %v1658 = vpack.c.b16 %v1643, %v1642
      %v1659 = vpack.c.b16 %v1645, %v1644
      %v1660 = vpack.c.b16 %v1647, %v1646
      %v1661 = vpack.c.b16 %v1649, %v1648
      %v1662 = vpack.c.b16 %v1651, %v1650
      %v1663 = vpack.c.b16 %v1653, %v1652
      %v1664 = vpack.c.b16 %v1655, %v1654
      %v1665 = vpack.c.b16 %v1657, %v1656
      %v1682 = vunpack.c.l.b16 %v1144
      %v1683 = vunpack.c.l.b16 %v1145
      %v1684 = vunpack.c.l.b16 %v1146
      %v1685 = vunpack.c.l.b16 %v1147
      %v1686 = vunpack.c.l.b16 %v1148
      %v1687 = vunpack.c.l.b16 %v1149
      %v1688 = vunpack.c.l.b16 %v1150
      %v1689 = vunpack.c.l.b16 %v1151
      %v1690 = vpack.c.b16 %v1682, %v1682
      %v1691 = vpack.c.b16 %v1683, %v1683
      %v1692 = vpack.c.b16 %v1684, %v1684
      %v1693 = vpack.c.b16 %v1685, %v1685
      %v1694 = vpack.c.b16 %v1686, %v1686
      %v1695 = vpack.c.b16 %v1687, %v1687
      %v1696 = vpack.c.b16 %v1688, %v1688
      %v1697 = vpack.c.b16 %v1689, %v1689
      %v1699 = vshrl.u32 %v1658, 16
      %v1701 = vshll.u32 %v1658, 16
      %v1703 = vrot.slane %v1701, 1
      %v1704 = vor.u32 %v1699, %v1703
      %v1706 = vshll.u32 %v1690, 16
      %v1708 = vrot.slane %v1706, 1
      %v1709 = vsel %vm1232, %v1704, %v1708
      %v1711 = vshrl.u32 %v1659, 16
      %v1713 = vshll.u32 %v1659, 16
      %v1715 = vrot.slane %v1713, 1
      %v1716 = vor.u32 %v1711, %v1715
      %v1718 = vshll.u32 %v1691, 16
      %v1720 = vrot.slane %v1718, 1
      %v1721 = vsel %vm1232, %v1716, %v1720
      %v1723 = vshrl.u32 %v1660, 16
      %v1725 = vshll.u32 %v1660, 16
      %v1727 = vrot.slane %v1725, 1
      %v1728 = vor.u32 %v1723, %v1727
      %v1730 = vshll.u32 %v1692, 16
      %v1732 = vrot.slane %v1730, 1
      %v1733 = vsel %vm1232, %v1728, %v1732
      %v1735 = vshrl.u32 %v1661, 16
      %v1737 = vshll.u32 %v1661, 16
      %v1739 = vrot.slane %v1737, 1
      %v1740 = vor.u32 %v1735, %v1739
      %v1742 = vshll.u32 %v1693, 16
      %v1744 = vrot.slane %v1742, 1
      %v1745 = vsel %vm1232, %v1740, %v1744
      %v1747 = vshrl.u32 %v1662, 16
      %v1749 = vshll.u32 %v1662, 16
      %v1751 = vrot.slane %v1749, 1
      %v1752 = vor.u32 %v1747, %v1751
      %v1754 = vshll.u32 %v1694, 16
      %v1756 = vrot.slane %v1754, 1
      %v1757 = vsel %vm1232, %v1752, %v1756
      %v1759 = vshrl.u32 %v1663, 16
      %v1761 = vshll.u32 %v1663, 16
      %v1763 = vrot.slane %v1761, 1
      %v1764 = vor.u32 %v1759, %v1763
      %v1766 = vshll.u32 %v1695, 16
      %v1768 = vrot.slane %v1766, 1
      %v1769 = vsel %vm1232, %v1764, %v1768
      %v1771 = vshrl.u32 %v1664, 16
      %v1773 = vshll.u32 %v1664, 16
      %v1775 = vrot.slane %v1773, 1
      %v1776 = vor.u32 %v1771, %v1775
      %v1778 = vshll.u32 %v1696, 16
      %v1780 = vrot.slane %v1778, 1
      %v1781 = vsel %vm1232, %v1776, %v1780
      %v1783 = vshrl.u32 %v1665, 16
      %v1785 = vshll.u32 %v1665, 16
      %v1787 = vrot.slane %v1785, 1
      %v1788 = vor.u32 %v1783, %v1787
      %v1790 = vshll.u32 %v1697, 16
      %v1792 = vrot.slane %v1790, 1
      %v1793 = vsel %vm1232, %v1788, %v1792
      %v1810 = vunpack.c.l.b16 %v1152
      %v1811 = vunpack.c.l.b16 %v1153
      %v1812 = vunpack.c.l.b16 %v1154
      %v1813 = vunpack.c.l.b16 %v1155
      %v1814 = vunpack.c.l.b16 %v1156
      %v1815 = vunpack.c.l.b16 %v1157
      %v1816 = vunpack.c.l.b16 %v1158
      %v1817 = vunpack.c.l.b16 %v1159
      %v1818 = vpack.c.b16 %v1643, %v1810
      %v1819 = vpack.c.b16 %v1645, %v1811
      %v1820 = vpack.c.b16 %v1647, %v1812
      %v1821 = vpack.c.b16 %v1649, %v1813
      %v1822 = vpack.c.b16 %v1651, %v1814
      %v1823 = vpack.c.b16 %v1653, %v1815
      %v1824 = vpack.c.b16 %v1655, %v1816
      %v1825 = vpack.c.b16 %v1657, %v1817
      %v1826 = vrot.slane %v1818, 1
      %v1827 = vrot.slane %v1690, 1
      %v1828 = vsel %vm1361, %v1826, %v1827
      %v1829 = vrot.slane %v1819, 1
      %v1830 = vrot.slane %v1691, 1
      %v1831 = vsel %vm1361, %v1829, %v1830
      %v1832 = vrot.slane %v1820, 1
      %v1833 = vrot.slane %v1692, 1
      %v1834 = vsel %vm1361, %v1832, %v1833
      %v1835 = vrot.slane %v1821, 1
      %v1836 = vrot.slane %v1693, 1
      %v1837 = vsel %vm1361, %v1835, %v1836
      %v1838 = vrot.slane %v1822, 1
      %v1839 = vrot.slane %v1694, 1
      %v1840 = vsel %vm1361, %v1838, %v1839
      %v1841 = vrot.slane %v1823, 1
      %v1842 = vrot.slane %v1695, 1
      %v1843 = vsel %vm1361, %v1841, %v1842
      %v1844 = vrot.slane %v1824, 1
      %v1845 = vrot.slane %v1696, 1
      %v1846 = vsel %vm1361, %v1844, %v1845
      %v1847 = vrot.slane %v1825, 1
      %v1848 = vrot.slane %v1697, 1
      %v1849 = vsel %vm1361, %v1847, %v1848
      %v1858 = vld [vmem:[%s562] sm:$0xf]
      %v1859 = vld [vmem:[%s562 + $0x4] sm:$0xf]
      %v1860 = vld [vmem:[%s562 + $0x8] sm:$0xf]
      %v1861 = vld [vmem:[%s562 + $0xc] sm:$0xf]
      %v1862 = vld [vmem:[%s562 + $0x10] sm:$0xf]
      %v1863 = vld [vmem:[%s562 + $0x14] sm:$0xf]
      %v1864 = vld [vmem:[%s562 + $0x18] sm:$0xf]
      %v1865 = vld [vmem:[%s562 + $0x1c] sm:$0xf]
      %v1866 = vld [vmem:[%s562 + $0x20] sm:$0xf]
      %v1867 = vld [vmem:[%s562 + $0x24] sm:$0xf]
      %v1868 = vld [vmem:[%s562 + $0x28] sm:$0xf]
      %v1869 = vld [vmem:[%s562 + $0x2c] sm:$0xf]
      %v1870 = vld [vmem:[%s562 + $0x30] sm:$0xf]
      %v1871 = vld [vmem:[%s562 + $0x34] sm:$0xf]
      %v1872 = vld [vmem:[%s562 + $0x38] sm:$0xf]
      %v1873 = vld [vmem:[%s562 + $0x3c] sm:$0xf]
      %v1874 = vld [vmem:[%s562 + $0x40] sm:$0xf]
      %v1875 = vld [vmem:[%s562 + $0x44] sm:$0xf]
      %v1876 = vld [vmem:[%s562 + $0x48] sm:$0xf]
      %v1877 = vld [vmem:[%s562 + $0x4c] sm:$0xf]
      %v1878 = vld [vmem:[%s562 + $0x50] sm:$0xf]
      %v1879 = vld [vmem:[%s562 + $0x54] sm:$0xf]
      %v1880 = vld [vmem:[%s562 + $0x58] sm:$0xf]
      %v1881 = vld [vmem:[%s562 + $0x5c] sm:$0xf]
      %v1882 = vld [vmem:[%s562 + $0x60] sm:$0xf]
      %v1883 = vld [vmem:[%s562 + $0x64] sm:$0xf]
      %v1884 = vld [vmem:[%s562 + $0x68] sm:$0xf]
      %v1885 = vld [vmem:[%s562 + $0x6c] sm:$0xf]
      %v1886 = vld [vmem:[%s562 + $0x70] sm:$0xf]
      %v1887 = vld [vmem:[%s562 + $0x74] sm:$0xf]
      %v1888 = vld [vmem:[%s562 + $0x78] sm:$0xf]
      %v1889 = vld [vmem:[%s562 + $0x7c] sm:$0xf]
      %v1890 = vld [vmem:[%s562 + $0x80] sm:$0xf]
      %v1891 = vld [vmem:[%s562 + $0x84] sm:$0xf]
      %v1892 = vld [vmem:[%s562 + $0x88] sm:$0xf]
      %v1893 = vld [vmem:[%s562 + $0x8c] sm:$0xf]
      %v1894 = vld [vmem:[%s562 + $0x90] sm:$0xf]
      %v1895 = vld [vmem:[%s562 + $0x94] sm:$0xf]
      %v1896 = vld [vmem:[%s562 + $0x98] sm:$0xf]
      %v1897 = vld [vmem:[%s562 + $0x9c] sm:$0xf]
      %v1898 = vld [vmem:[%s562 + $0xa0] sm:$0xf]
      %v1899 = vld [vmem:[%s562 + $0xa4] sm:$0xf]
      %v1900 = vld [vmem:[%s562 + $0xa8] sm:$0xf]
      %v1901 = vld [vmem:[%s562 + $0xac] sm:$0xf]
      %v1902 = vld [vmem:[%s562 + $0xb0] sm:$0xf]
      %v1903 = vld [vmem:[%s562 + $0xb4] sm:$0xf]
      %v1904 = vld [vmem:[%s562 + $0xb8] sm:$0xf]
      %v1905 = vld [vmem:[%s562 + $0xbc] sm:$0xf]
      %v1906 = vld [vmem:[%s562 + $0xc0] sm:$0xf]
      %v1907 = vld [vmem:[%s562 + $0xc4] sm:$0xf]
      %v1908 = vld [vmem:[%s562 + $0xc8] sm:$0xf]
      %v1909 = vld [vmem:[%s562 + $0xcc] sm:$0xf]
      %v1910 = vld [vmem:[%s562 + $0xd0] sm:$0xf]
      %v1911 = vld [vmem:[%s562 + $0xd4] sm:$0xf]
      %v1912 = vld [vmem:[%s562 + $0xd8] sm:$0xf]
      %v1913 = vld [vmem:[%s562 + $0xdc] sm:$0xf]
      %v1914 = vld [vmem:[%s562 + $0xe0] sm:$0xf]
      %v1915 = vld [vmem:[%s562 + $0xe4] sm:$0xf]
      %v1916 = vld [vmem:[%s562 + $0xe8] sm:$0xf]
      %v1917 = vld [vmem:[%s562 + $0xec] sm:$0xf]
      %v1918 = vld [vmem:[%s562 + $0xf0] sm:$0xf]
      %v1919 = vld [vmem:[%s562 + $0xf4] sm:$0xf]
      %v1920 = vld [vmem:[%s562 + $0xf8] sm:$0xf]
      %v1921 = vld [vmem:[%s562 + $0xfc] sm:$0xf]
      %v1922 = vld [vmem:[%s562 + $0x100] sm:$0xf]
      %v1923 = vld [vmem:[%s562 + $0x104] sm:$0xf]
      %v1924 = vld [vmem:[%s562 + $0x108] sm:$0xf]
      %v1925 = vld [vmem:[%s562 + $0x10c] sm:$0xf]
      %v1926 = vld [vmem:[%s562 + $0x110] sm:$0xf]
      %v1927 = vld [vmem:[%s562 + $0x114] sm:$0xf]
      %v1928 = vld [vmem:[%s562 + $0x118] sm:$0xf]
      %v1929 = vld [vmem:[%s562 + $0x11c] sm:$0xf]
      %v1930 = vld [vmem:[%s562 + $0x120] sm:$0xf]
      %v1931 = vld [vmem:[%s562 + $0x124] sm:$0xf]
      %v1932 = vld [vmem:[%s562 + $0x128] sm:$0xf]
      %v1933 = vld [vmem:[%s562 + $0x12c] sm:$0xf]
      %v1934 = vld [vmem:[%s562 + $0x130] sm:$0xf]
      %v1935 = vld [vmem:[%s562 + $0x134] sm:$0xf]
      %v1936 = vld [vmem:[%s562 + $0x138] sm:$0xf]
      %v1937 = vld [vmem:[%s562 + $0x13c] sm:$0xf]
      %v1938 = vld [vmem:[%s562 + $0x140] sm:$0xf]
      %v1939 = vld [vmem:[%s562 + $0x144] sm:$0xf]
      %v1940 = vld [vmem:[%s562 + $0x148] sm:$0xf]
      %v1941 = vld [vmem:[%s562 + $0x14c] sm:$0xf]
      %v1942 = vld [vmem:[%s562 + $0x150] sm:$0xf]
      %v1943 = vld [vmem:[%s562 + $0x154] sm:$0xf]
      %v1944 = vld [vmem:[%s562 + $0x158] sm:$0xf]
      %v1945 = vld [vmem:[%s562 + $0x15c] sm:$0xf]
      %v1946 = vld [vmem:[%s562 + $0x160] sm:$0xf]
      %v1947 = vld [vmem:[%s562 + $0x164] sm:$0xf]
      %v1948 = vld [vmem:[%s562 + $0x168] sm:$0xf]
      %v1949 = vld [vmem:[%s562 + $0x16c] sm:$0xf]
      %v1950 = vld [vmem:[%s562 + $0x170] sm:$0xf]
      %v1951 = vld [vmem:[%s562 + $0x174] sm:$0xf]
      %v1952 = vld [vmem:[%s562 + $0x178] sm:$0xf]
      %v1953 = vld [vmem:[%s562 + $0x17c] sm:$0xf]
      %v1954 = vld [vmem:[%s562 + $0x180] sm:$0xf]
      %v1955 = vld [vmem:[%s562 + $0x184] sm:$0xf]
      %v1956 = vld [vmem:[%s562 + $0x188] sm:$0xf]
      %v1957 = vld [vmem:[%s562 + $0x18c] sm:$0xf]
      %v1958 = vld [vmem:[%s562 + $0x190] sm:$0xf]
      %v1959 = vld [vmem:[%s562 + $0x194] sm:$0xf]
      %v1960 = vld [vmem:[%s562 + $0x198] sm:$0xf]
      %v1961 = vld [vmem:[%s562 + $0x19c] sm:$0xf]
      %v1962 = vld [vmem:[%s562 + $0x1a0] sm:$0xf]
      %v1963 = vld [vmem:[%s562 + $0x1a4] sm:$0xf]
      %v1964 = vld [vmem:[%s562 + $0x1a8] sm:$0xf]
      %v1965 = vld [vmem:[%s562 + $0x1ac] sm:$0xf]
      %v1966 = vld [vmem:[%s562 + $0x1b0] sm:$0xf]
      %v1967 = vld [vmem:[%s562 + $0x1b4] sm:$0xf]
      %v1968 = vld [vmem:[%s562 + $0x1b8] sm:$0xf]
      %v1969 = vld [vmem:[%s562 + $0x1bc] sm:$0xf]
      %v1970 = vld [vmem:[%s562 + $0x1c0] sm:$0xf]
      %v1971 = vld [vmem:[%s562 + $0x1c4] sm:$0xf]
      %v1972 = vld [vmem:[%s562 + $0x1c8] sm:$0xf]
      %v1973 = vld [vmem:[%s562 + $0x1cc] sm:$0xf]
      %v1974 = vld [vmem:[%s562 + $0x1d0] sm:$0xf]
      %v1975 = vld [vmem:[%s562 + $0x1d4] sm:$0xf]
      %v1976 = vld [vmem:[%s562 + $0x1d8] sm:$0xf]
      %v1977 = vld [vmem:[%s562 + $0x1dc] sm:$0xf]
      %v1978 = vld [vmem:[%s562 + $0x1e0] sm:$0xf]
      %v1979 = vld [vmem:[%s562 + $0x1e4] sm:$0xf]
      %v1980 = vld [vmem:[%s562 + $0x1e8] sm:$0xf]
      %v1981 = vld [vmem:[%s562 + $0x1ec] sm:$0xf]
      %v1982 = vld [vmem:[%s562 + $0x1f0] sm:$0xf]
      %v1983 = vld [vmem:[%s562 + $0x1f4] sm:$0xf]
      %v1984 = vld [vmem:[%s562 + $0x1f8] sm:$0xf]
      %v1985 = vld [vmem:[%s562 + $0x1fc] sm:$0xf]
      %v1986 = vld [vmem:[%s562 + $0x200] sm:$0xf]
      %v1987 = vld [vmem:[%s562 + $0x204] sm:$0xf]
      %v1988 = vld [vmem:[%s562 + $0x208] sm:$0xf]
      %v1989 = vld [vmem:[%s562 + $0x20c] sm:$0xf]
      %v1990 = vld [vmem:[%s562 + $0x210] sm:$0xf]
      %v1991 = vld [vmem:[%s562 + $0x214] sm:$0xf]
      %v1992 = vld [vmem:[%s562 + $0x218] sm:$0xf]
      %v1993 = vld [vmem:[%s562 + $0x21c] sm:$0xf]
      %v1994 = vld [vmem:[%s562 + $0x220] sm:$0xf]
      %v1995 = vld [vmem:[%s562 + $0x224] sm:$0xf]
      %v1996 = vld [vmem:[%s562 + $0x228] sm:$0xf]
      %v1997 = vld [vmem:[%s562 + $0x22c] sm:$0xf]
      %v1998 = vld [vmem:[%s562 + $0x230] sm:$0xf]
      %v1999 = vld [vmem:[%s562 + $0x234] sm:$0xf]
      %v2000 = vld [vmem:[%s562 + $0x238] sm:$0xf]
      %v2001 = vld [vmem:[%s562 + $0x23c] sm:$0xf]
      %v2002 = vld [vmem:[%s565] sm:$0x1]
      %v2004 = vperm.slane %v2002, 0
      %v2150 = vunpack.c.l.b16 %v1858
      %v2151 = vunpack.c.l.b16 %v1859
      %v2152 = vunpack.c.l.b16 %v1860
      %v2153 = vunpack.c.l.b16 %v1861
      %v2154 = vunpack.c.l.b16 %v1862
      %v2155 = vunpack.c.l.b16 %v1863
      %v2156 = vunpack.c.l.b16 %v1864
      %v2157 = vunpack.c.l.b16 %v1865
      %v2158 = vunpack.c.l.b16 %v1866
      %v2159 = vunpack.c.l.b16 %v1867
      %v2160 = vunpack.c.l.b16 %v1868
      %v2161 = vunpack.c.l.b16 %v1869
      %v2162 = vunpack.c.l.b16 %v1870
      %v2163 = vunpack.c.l.b16 %v1871
      %v2164 = vunpack.c.l.b16 %v1872
      %v2165 = vunpack.c.l.b16 %v1873
      %v2166 = vunpack.c.l.b16 %v1874
      %v2167 = vunpack.c.l.b16 %v1875
      %v2168 = vunpack.c.l.b16 %v1876
      %v2169 = vunpack.c.l.b16 %v1877
      %v2170 = vunpack.c.l.b16 %v1878
      %v2171 = vunpack.c.l.b16 %v1879
      %v2172 = vunpack.c.l.b16 %v1880
      %v2173 = vunpack.c.l.b16 %v1881
      %v2174 = vunpack.c.l.b16 %v1882
      %v2175 = vunpack.c.l.b16 %v1883
      %v2176 = vunpack.c.l.b16 %v1884
      %v2177 = vunpack.c.l.b16 %v1885
      %v2178 = vunpack.c.l.b16 %v1886
      %v2179 = vunpack.c.l.b16 %v1887
      %v2180 = vunpack.c.l.b16 %v1888
      %v2181 = vunpack.c.l.b16 %v1889
      %v2182 = vunpack.c.l.b16 %v1890
      %v2183 = vunpack.c.l.b16 %v1891
      %v2184 = vunpack.c.l.b16 %v1892
      %v2185 = vunpack.c.l.b16 %v1893
      %v2186 = vunpack.c.l.b16 %v1894
      %v2187 = vunpack.c.l.b16 %v1895
      %v2188 = vunpack.c.l.b16 %v1896
      %v2189 = vunpack.c.l.b16 %v1897
      %v2190 = vunpack.c.l.b16 %v1898
      %v2191 = vunpack.c.l.b16 %v1899
      %v2192 = vunpack.c.l.b16 %v1900
      %v2193 = vunpack.c.l.b16 %v1901
      %v2194 = vunpack.c.l.b16 %v1902
      %v2195 = vunpack.c.l.b16 %v1903
      %v2196 = vunpack.c.l.b16 %v1904
      %v2197 = vunpack.c.l.b16 %v1905
      %v2198 = vunpack.c.l.b16 %v1906
      %v2199 = vunpack.c.l.b16 %v1907
      %v2200 = vunpack.c.l.b16 %v1908
      %v2201 = vunpack.c.l.b16 %v1909
      %v2202 = vunpack.c.l.b16 %v1910
      %v2203 = vunpack.c.l.b16 %v1911
      %v2204 = vunpack.c.l.b16 %v1912
      %v2205 = vunpack.c.l.b16 %v1913
      %v2206 = vunpack.c.l.b16 %v1914
      %v2207 = vunpack.c.l.b16 %v1915
      %v2208 = vunpack.c.l.b16 %v1916
      %v2209 = vunpack.c.l.b16 %v1917
      %v2210 = vunpack.c.l.b16 %v1918
      %v2211 = vunpack.c.l.b16 %v1919
      %v2212 = vunpack.c.l.b16 %v1920
      %v2213 = vunpack.c.l.b16 %v1921
      %v2214 = vunpack.c.l.b16 %v1922
      %v2215 = vunpack.c.l.b16 %v1923
      %v2216 = vunpack.c.l.b16 %v1924
      %v2217 = vunpack.c.l.b16 %v1925
      %v2218 = vunpack.c.l.b16 %v1926
      %v2219 = vunpack.c.l.b16 %v1927
      %v2220 = vunpack.c.l.b16 %v1928
      %v2221 = vunpack.c.l.b16 %v1929
      %v2222 = vunpack.c.l.b16 %v1930
      %v2223 = vunpack.c.l.b16 %v1931
      %v2224 = vunpack.c.l.b16 %v1932
      %v2225 = vunpack.c.l.b16 %v1933
      %v2226 = vunpack.c.l.b16 %v1934
      %v2227 = vunpack.c.l.b16 %v1935
      %v2228 = vunpack.c.l.b16 %v1936
      %v2229 = vunpack.c.l.b16 %v1937
      %v2230 = vunpack.c.l.b16 %v1938
      %v2231 = vunpack.c.l.b16 %v1939
      %v2232 = vunpack.c.l.b16 %v1940
      %v2233 = vunpack.c.l.b16 %v1941
      %v2234 = vunpack.c.l.b16 %v1942
      %v2235 = vunpack.c.l.b16 %v1943
      %v2236 = vunpack.c.l.b16 %v1944
      %v2237 = vunpack.c.l.b16 %v1945
      %v2238 = vunpack.c.l.b16 %v1946
      %v2239 = vunpack.c.l.b16 %v1947
      %v2240 = vunpack.c.l.b16 %v1948
      %v2241 = vunpack.c.l.b16 %v1949
      %v2242 = vunpack.c.l.b16 %v1950
      %v2243 = vunpack.c.l.b16 %v1951
      %v2244 = vunpack.c.l.b16 %v1952
      %v2245 = vunpack.c.l.b16 %v1953
      %v2246 = vunpack.c.l.b16 %v1954
      %v2247 = vunpack.c.l.b16 %v1955
      %v2248 = vunpack.c.l.b16 %v1956
      %v2249 = vunpack.c.l.b16 %v1957
      %v2250 = vunpack.c.l.b16 %v1958
      %v2251 = vunpack.c.l.b16 %v1959
      %v2252 = vunpack.c.l.b16 %v1960
      %v2253 = vunpack.c.l.b16 %v1961
      %v2254 = vunpack.c.l.b16 %v1962
      %v2255 = vunpack.c.l.b16 %v1963
      %v2256 = vunpack.c.l.b16 %v1964
      %v2257 = vunpack.c.l.b16 %v1965
      %v2258 = vunpack.c.l.b16 %v1966
      %v2259 = vunpack.c.l.b16 %v1967
      %v2260 = vunpack.c.l.b16 %v1968
      %v2261 = vunpack.c.l.b16 %v1969
      %v2262 = vunpack.c.l.b16 %v1970
      %v2263 = vunpack.c.l.b16 %v1971
      %v2264 = vunpack.c.l.b16 %v1972
      %v2265 = vunpack.c.l.b16 %v1973
      %v2266 = vunpack.c.l.b16 %v1974
      %v2267 = vunpack.c.l.b16 %v1975
      %v2268 = vunpack.c.l.b16 %v1976
      %v2269 = vunpack.c.l.b16 %v1977
      %v2270 = vunpack.c.l.b16 %v1978
      %v2271 = vunpack.c.l.b16 %v1979
      %v2272 = vunpack.c.l.b16 %v1980
      %v2273 = vunpack.c.l.b16 %v1981
      %v2274 = vunpack.c.l.b16 %v1982
      %v2275 = vunpack.c.l.b16 %v1983
      %v2276 = vunpack.c.l.b16 %v1984
      %v2277 = vunpack.c.l.b16 %v1985
      %v2278 = vunpack.c.l.b16 %v1986
      %v2279 = vunpack.c.l.b16 %v1987
      %v2280 = vunpack.c.l.b16 %v1988
      %v2281 = vunpack.c.l.b16 %v1989
      %v2282 = vunpack.c.l.b16 %v1990
      %v2283 = vunpack.c.l.b16 %v1991
      %v2284 = vunpack.c.l.b16 %v1992
      %v2285 = vunpack.c.l.b16 %v1993
      %v2286 = vunpack.c.l.b16 %v1994
      %v2287 = vunpack.c.l.b16 %v1995
      %v2288 = vunpack.c.l.b16 %v1996
      %v2289 = vunpack.c.l.b16 %v1997
      %v2290 = vunpack.c.l.b16 %v1998
      %v2291 = vunpack.c.l.b16 %v1999
      %v2292 = vunpack.c.l.b16 %v2000
      %v2293 = vunpack.c.l.b16 %v2001
      %v2294 = vpack.c.b16 %v2151, %v2150
      %v2295 = vpack.c.b16 %v2153, %v2152
      %v2296 = vpack.c.b16 %v2155, %v2154
      %v2297 = vpack.c.b16 %v2157, %v2156
      %v2298 = vpack.c.b16 %v2159, %v2158
      %v2299 = vpack.c.b16 %v2161, %v2160
      %v2300 = vpack.c.b16 %v2163, %v2162
      %v2301 = vpack.c.b16 %v2165, %v2164
      %v2302 = vpack.c.b16 %v2167, %v2166
      %v2303 = vpack.c.b16 %v2169, %v2168
      %v2304 = vpack.c.b16 %v2171, %v2170
      %v2305 = vpack.c.b16 %v2173, %v2172
      %v2306 = vpack.c.b16 %v2175, %v2174
      %v2307 = vpack.c.b16 %v2177, %v2176
      %v2308 = vpack.c.b16 %v2179, %v2178
      %v2309 = vpack.c.b16 %v2181, %v2180
      %v2310 = vpack.c.b16 %v2183, %v2182
      %v2311 = vpack.c.b16 %v2185, %v2184
      %v2312 = vpack.c.b16 %v2187, %v2186
      %v2313 = vpack.c.b16 %v2189, %v2188
      %v2314 = vpack.c.b16 %v2191, %v2190
      %v2315 = vpack.c.b16 %v2193, %v2192
      %v2316 = vpack.c.b16 %v2195, %v2194
      %v2317 = vpack.c.b16 %v2197, %v2196
      %v2318 = vpack.c.b16 %v2199, %v2198
      %v2319 = vpack.c.b16 %v2201, %v2200
      %v2320 = vpack.c.b16 %v2203, %v2202
      %v2321 = vpack.c.b16 %v2205, %v2204
      %v2322 = vpack.c.b16 %v2207, %v2206
      %v2323 = vpack.c.b16 %v2209, %v2208
      %v2324 = vpack.c.b16 %v2211, %v2210
      %v2325 = vpack.c.b16 %v2213, %v2212
      %v2326 = vpack.c.b16 %v2215, %v2214
      %v2327 = vpack.c.b16 %v2217, %v2216
      %v2328 = vpack.c.b16 %v2219, %v2218
      %v2329 = vpack.c.b16 %v2221, %v2220
      %v2330 = vpack.c.b16 %v2223, %v2222
      %v2331 = vpack.c.b16 %v2225, %v2224
      %v2332 = vpack.c.b16 %v2227, %v2226
      %v2333 = vpack.c.b16 %v2229, %v2228
      %v2334 = vpack.c.b16 %v2231, %v2230
      %v2335 = vpack.c.b16 %v2233, %v2232
      %v2336 = vpack.c.b16 %v2235, %v2234
      %v2337 = vpack.c.b16 %v2237, %v2236
      %v2338 = vpack.c.b16 %v2239, %v2238
      %v2339 = vpack.c.b16 %v2241, %v2240
      %v2340 = vpack.c.b16 %v2243, %v2242
      %v2341 = vpack.c.b16 %v2245, %v2244
      %v2342 = vpack.c.b16 %v2247, %v2246
      %v2343 = vpack.c.b16 %v2249, %v2248
      %v2344 = vpack.c.b16 %v2251, %v2250
      %v2345 = vpack.c.b16 %v2253, %v2252
      %v2346 = vpack.c.b16 %v2255, %v2254
      %v2347 = vpack.c.b16 %v2257, %v2256
      %v2348 = vpack.c.b16 %v2259, %v2258
      %v2349 = vpack.c.b16 %v2261, %v2260
      %v2350 = vpack.c.b16 %v2263, %v2262
      %v2351 = vpack.c.b16 %v2265, %v2264
      %v2352 = vpack.c.b16 %v2267, %v2266
      %v2353 = vpack.c.b16 %v2269, %v2268
      %v2354 = vpack.c.b16 %v2271, %v2270
      %v2355 = vpack.c.b16 %v2273, %v2272
      %v2356 = vpack.c.b16 %v2275, %v2274
      %v2357 = vpack.c.b16 %v2277, %v2276
      %v2358 = vpack.c.b16 %v2279, %v2278
      %v2359 = vpack.c.b16 %v2281, %v2280
      %v2360 = vpack.c.b16 %v2283, %v2282
      %v2361 = vpack.c.b16 %v2285, %v2284
      %v2362 = vpack.c.b16 %v2287, %v2286
      %v2363 = vpack.c.b16 %v2289, %v2288
      %v2364 = vpack.c.b16 %v2291, %v2290
      %v2365 = vpack.c.b16 %v2293, %v2292
      %2438 = vmatpush.bf16.msra.mxu0 %v2301
      %2439 = vmatpush.bf16.msra.mxu0 %v2300
      %2440 = vmatpush.bf16.msra.mxu0 %v2299
      %2441 = vmatpush.bf16.msra.mxu0 %v2298
      %2442 = vmatpush.bf16.msra.mxu0 %v2297
      %2443 = vmatpush.bf16.msra.mxu0 %v2296
      %2444 = vmatpush.bf16.msra.mxu0 %v2295
      %2445 = vmatpush.bf16.msra.mxu0 %v2294
      %2446 = vmatmul.bf16.gmra.mxu0 %v1192
      %v2447 = vpop.f32.mrf.mxu0
      %v2448 = vadd.f32 %v2004, %v2447
      %v2449 = vpop.f32.mrf.mxu0
      %v2450 = vadd.f32 %v2004, %v2449
      %2451 = vmatmul.bf16.gmra.mxu0 %v1193
      %v2452 = vpop.f32.mrf.mxu0
      %v2453 = vadd.f32 %v2004, %v2452
      %v2454 = vpop.f32.mrf.mxu0
      %v2455 = vadd.f32 %v2004, %v2454
      %2456 = vmatmul.bf16.gmra.mxu0 %v1194
      %v2457 = vpop.f32.mrf.mxu0
      %v2458 = vadd.f32 %v2004, %v2457
      %v2459 = vpop.f32.mrf.mxu0
      %v2460 = vadd.f32 %v2004, %v2459
      %2461 = vmatmul.bf16.gmra.mxu0 %v1195
      %v2462 = vpop.f32.mrf.mxu0
      %v2463 = vadd.f32 %v2004, %v2462
      %v2464 = vpop.f32.mrf.mxu0
      %v2465 = vadd.f32 %v2004, %v2464
      %2466 = vmatmul.bf16.gmra.mxu0 %v1196
      %v2467 = vpop.f32.mrf.mxu0
      %v2468 = vadd.f32 %v2004, %v2467
      %v2469 = vpop.f32.mrf.mxu0
      %v2470 = vadd.f32 %v2004, %v2469
      %2471 = vmatmul.bf16.gmra.mxu0 %v1197
      %v2472 = vpop.f32.mrf.mxu0
      %v2473 = vadd.f32 %v2004, %v2472
      %v2474 = vpop.f32.mrf.mxu0
      %v2475 = vadd.f32 %v2004, %v2474
      %2476 = vmatmul.bf16.gmra.mxu0 %v1198
      %v2477 = vpop.f32.mrf.mxu0
      %v2478 = vadd.f32 %v2004, %v2477
      %v2479 = vpop.f32.mrf.mxu0
      %v2480 = vadd.f32 %v2004, %v2479
      %2481 = vmatmul.bf16.gmra.mxu0 %v1199
      %v2482 = vpop.f32.mrf.mxu0
      %v2483 = vadd.f32 %v2004, %v2482
      %v2484 = vpop.f32.mrf.mxu0
      %v2485 = vadd.f32 %v2004, %v2484
      %2486 = vdwg.mxu0
      %2487 = vmatpush.bf16.msra.mxu0 %v2309
      %2488 = vmatpush.bf16.msra.mxu0 %v2308
      %2489 = vmatpush.bf16.msra.mxu0 %v2307
      %2490 = vmatpush.bf16.msra.mxu0 %v2306
      %2491 = vmatpush.bf16.msra.mxu0 %v2305
      %2492 = vmatpush.bf16.msra.mxu0 %v2304
      %2493 = vmatpush.bf16.msra.mxu0 %v2303
      %2494 = vmatpush.bf16.msra.mxu0 %v2302
      %2495 = vmatmul.bf16.gmra.mxu0 %v1244
      %v2496 = vpop.f32.mrf.mxu0
      %v2497 = vadd.f32 %v2448, %v2496
      %v2498 = vpop.f32.mrf.mxu0
      %v2499 = vadd.f32 %v2450, %v2498
      %2500 = vmatmul.bf16.gmra.mxu0 %v1256
      %v2501 = vpop.f32.mrf.mxu0
      %v2502 = vadd.f32 %v2453, %v2501
      %v2503 = vpop.f32.mrf.mxu0
      %v2504 = vadd.f32 %v2455, %v2503
      %2505 = vmatmul.bf16.gmra.mxu0 %v1268
      %v2506 = vpop.f32.mrf.mxu0
      %v2507 = vadd.f32 %v2458, %v2506
      %v2508 = vpop.f32.mrf.mxu0
      %v2509 = vadd.f32 %v2460, %v2508
      %2510 = vmatmul.bf16.gmra.mxu0 %v1280
      %v2511 = vpop.f32.mrf.mxu0
      %v2512 = vadd.f32 %v2463, %v2511
      %v2513 = vpop.f32.mrf.mxu0
      %v2514 = vadd.f32 %v2465, %v2513
      %2515 = vmatmul.bf16.gmra.mxu0 %v1292
      %v2516 = vpop.f32.mrf.mxu0
      %v2517 = vadd.f32 %v2468, %v2516
      %v2518 = vpop.f32.mrf.mxu0
      %v2519 = vadd.f32 %v2470, %v2518
      %2520 = vmatmul.bf16.gmra.mxu0 %v1304
      %v2521 = vpop.f32.mrf.mxu0
      %v2522 = vadd.f32 %v2473, %v2521
      %v2523 = vpop.f32.mrf.mxu0
      %v2524 = vadd.f32 %v2475, %v2523
      %2525 = vmatmul.bf16.gmra.mxu0 %v1316
      %v2526 = vpop.f32.mrf.mxu0
      %v2527 = vadd.f32 %v2478, %v2526
      %v2528 = vpop.f32.mrf.mxu0
      %v2529 = vadd.f32 %v2480, %v2528
      %2530 = vmatmul.bf16.gmra.mxu0 %v1328
      %v2531 = vpop.f32.mrf.mxu0
      %v2532 = vadd.f32 %v2483, %v2531
      %v2533 = vpop.f32.mrf.mxu0
      %v2534 = vadd.f32 %v2485, %v2533
      %2535 = vdwg.mxu0
      %2536 = vmatpush.bf16.msra.mxu0 %v2317
      %2537 = vmatpush.bf16.msra.mxu0 %v2316
      %2538 = vmatpush.bf16.msra.mxu0 %v2315
      %2539 = vmatpush.bf16.msra.mxu0 %v2314
      %2540 = vmatpush.bf16.msra.mxu0 %v2313
      %2541 = vmatpush.bf16.msra.mxu0 %v2312
      %2542 = vmatpush.bf16.msra.mxu0 %v2311
      %2543 = vmatpush.bf16.msra.mxu0 %v2310
      %2544 = vmatmul.bf16.gmra.mxu0 %v1364
      %v2545 = vpop.f32.mrf.mxu0
      %v2546 = vadd.f32 %v2497, %v2545
      %v2547 = vpop.f32.mrf.mxu0
      %v2548 = vadd.f32 %v2499, %v2547
      %2549 = vmatmul.bf16.gmra.mxu0 %v1367
      %v2550 = vpop.f32.mrf.mxu0
      %v2551 = vadd.f32 %v2502, %v2550
      %v2552 = vpop.f32.mrf.mxu0
      %v2553 = vadd.f32 %v2504, %v2552
      %2554 = vmatmul.bf16.gmra.mxu0 %v1370
      %v2555 = vpop.f32.mrf.mxu0
      %v2556 = vadd.f32 %v2507, %v2555
      %v2557 = vpop.f32.mrf.mxu0
      %v2558 = vadd.f32 %v2509, %v2557
      %2559 = vmatmul.bf16.gmra.mxu0 %v1373
      %v2560 = vpop.f32.mrf.mxu0
      %v2561 = vadd.f32 %v2512, %v2560
      %v2562 = vpop.f32.mrf.mxu0
      %v2563 = vadd.f32 %v2514, %v2562
      %2564 = vmatmul.bf16.gmra.mxu0 %v1376
      %v2565 = vpop.f32.mrf.mxu0
      %v2566 = vadd.f32 %v2517, %v2565
      %v2567 = vpop.f32.mrf.mxu0
      %v2568 = vadd.f32 %v2519, %v2567
      %2569 = vmatmul.bf16.gmra.mxu0 %v1379
      %v2570 = vpop.f32.mrf.mxu0
      %v2571 = vadd.f32 %v2522, %v2570
      %v2572 = vpop.f32.mrf.mxu0
      %v2573 = vadd.f32 %v2524, %v2572
      %2574 = vmatmul.bf16.gmra.mxu0 %v1382
      %v2575 = vpop.f32.mrf.mxu0
      %v2576 = vadd.f32 %v2527, %v2575
      %v2577 = vpop.f32.mrf.mxu0
      %v2578 = vadd.f32 %v2529, %v2577
      %2579 = vmatmul.bf16.gmra.mxu0 %v1385
      %v2580 = vpop.f32.mrf.mxu0
      %v2581 = vadd.f32 %v2532, %v2580
      %v2582 = vpop.f32.mrf.mxu0
      %v2583 = vadd.f32 %v2534, %v2582
      %2584 = vdwg.mxu0
      %2585 = vmatpush.bf16.msra.mxu0 %v2325
      %2586 = vmatpush.bf16.msra.mxu0 %v2324
      %2587 = vmatpush.bf16.msra.mxu0 %v2323
      %2588 = vmatpush.bf16.msra.mxu0 %v2322
      %2589 = vmatpush.bf16.msra.mxu0 %v2321
      %2590 = vmatpush.bf16.msra.mxu0 %v2320
      %2591 = vmatpush.bf16.msra.mxu0 %v2319
      %2592 = vmatpush.bf16.msra.mxu0 %v2318
      %2593 = vmatmul.bf16.gmra.mxu0 %v1426
      %v2594 = vpop.f32.mrf.mxu0
      %v2595 = vadd.f32 %v2546, %v2594
      %v2596 = vpop.f32.mrf.mxu0
      %v2597 = vadd.f32 %v2548, %v2596
      %2598 = vmatmul.bf16.gmra.mxu0 %v1427
      %v2599 = vpop.f32.mrf.mxu0
      %v2600 = vadd.f32 %v2551, %v2599
      %v2601 = vpop.f32.mrf.mxu0
      %v2602 = vadd.f32 %v2553, %v2601
      %2603 = vmatmul.bf16.gmra.mxu0 %v1428
      %v2604 = vpop.f32.mrf.mxu0
      %v2605 = vadd.f32 %v2556, %v2604
      %v2606 = vpop.f32.mrf.mxu0
      %v2607 = vadd.f32 %v2558, %v2606
      %2608 = vmatmul.bf16.gmra.mxu0 %v1429
      %v2609 = vpop.f32.mrf.mxu0
      %v2610 = vadd.f32 %v2561, %v2609
      %v2611 = vpop.f32.mrf.mxu0
      %v2612 = vadd.f32 %v2563, %v2611
      %2613 = vmatmul.bf16.gmra.mxu0 %v1430
      %v2614 = vpop.f32.mrf.mxu0
      %v2615 = vadd.f32 %v2566, %v2614
      %v2616 = vpop.f32.mrf.mxu0
      %v2617 = vadd.f32 %v2568, %v2616
      %2618 = vmatmul.bf16.gmra.mxu0 %v1431
      %v2619 = vpop.f32.mrf.mxu0
      %v2620 = vadd.f32 %v2571, %v2619
      %v2621 = vpop.f32.mrf.mxu0
      %v2622 = vadd.f32 %v2573, %v2621
      %2623 = vmatmul.bf16.gmra.mxu0 %v1432
      %v2624 = vpop.f32.mrf.mxu0
      %v2625 = vadd.f32 %v2576, %v2624
      %v2626 = vpop.f32.mrf.mxu0
      %v2627 = vadd.f32 %v2578, %v2626
      %2628 = vmatmul.bf16.gmra.mxu0 %v1433
      %v2629 = vpop.f32.mrf.mxu0
      %v2630 = vadd.f32 %v2581, %v2629
      %v2631 = vpop.f32.mrf.mxu0
      %v2632 = vadd.f32 %v2583, %v2631
      %2633 = vdwg.mxu0
      %2634 = vmatpush.bf16.msra.mxu0 %v2333
      %2635 = vmatpush.bf16.msra.mxu0 %v2332
      %2636 = vmatpush.bf16.msra.mxu0 %v2331
      %2637 = vmatpush.bf16.msra.mxu0 %v2330
      %2638 = vmatpush.bf16.msra.mxu0 %v2329
      %2639 = vmatpush.bf16.msra.mxu0 %v2328
      %2640 = vmatpush.bf16.msra.mxu0 %v2327
      %2641 = vmatpush.bf16.msra.mxu0 %v2326
      %2642 = vmatmul.bf16.gmra.mxu0 %v1477
      %v2643 = vpop.f32.mrf.mxu0
      %v2644 = vadd.f32 %v2595, %v2643
      %v2645 = vpop.f32.mrf.mxu0
      %v2646 = vadd.f32 %v2597, %v2645
      %2647 = vmatmul.bf16.gmra.mxu0 %v1489
      %v2648 = vpop.f32.mrf.mxu0
      %v2649 = vadd.f32 %v2600, %v2648
      %v2650 = vpop.f32.mrf.mxu0
      %v2651 = vadd.f32 %v2602, %v2650
      %2652 = vmatmul.bf16.gmra.mxu0 %v1501
      %v2653 = vpop.f32.mrf.mxu0
      %v2654 = vadd.f32 %v2605, %v2653
      %v2655 = vpop.f32.mrf.mxu0
      %v2656 = vadd.f32 %v2607, %v2655
      %2657 = vmatmul.bf16.gmra.mxu0 %v1513
      %v2658 = vpop.f32.mrf.mxu0
      %v2659 = vadd.f32 %v2610, %v2658
      %v2660 = vpop.f32.mrf.mxu0
      %v2661 = vadd.f32 %v2612, %v2660
      %2662 = vmatmul.bf16.gmra.mxu0 %v1525
      %v2663 = vpop.f32.mrf.mxu0
      %v2664 = vadd.f32 %v2615, %v2663
      %v2665 = vpop.f32.mrf.mxu0
      %v2666 = vadd.f32 %v2617, %v2665
      %2667 = vmatmul.bf16.gmra.mxu0 %v1537
      %v2668 = vpop.f32.mrf.mxu0
      %v2669 = vadd.f32 %v2620, %v2668
      %v2670 = vpop.f32.mrf.mxu0
      %v2671 = vadd.f32 %v2622, %v2670
      %2672 = vmatmul.bf16.gmra.mxu0 %v1549
      %v2673 = vpop.f32.mrf.mxu0
      %v2674 = vadd.f32 %v2625, %v2673
      %v2675 = vpop.f32.mrf.mxu0
      %v2676 = vadd.f32 %v2627, %v2675
      %2677 = vmatmul.bf16.gmra.mxu0 %v1561
      %v2678 = vpop.f32.mrf.mxu0
      %v2679 = vadd.f32 %v2630, %v2678
      %v2680 = vpop.f32.mrf.mxu0
      %v2681 = vadd.f32 %v2632, %v2680
      %2682 = vdwg.mxu0
      %2683 = vmatpush.bf16.msra.mxu0 %v2341
      %2684 = vmatpush.bf16.msra.mxu0 %v2340
      %2685 = vmatpush.bf16.msra.mxu0 %v2339
      %2686 = vmatpush.bf16.msra.mxu0 %v2338
      %2687 = vmatpush.bf16.msra.mxu0 %v2337
      %2688 = vmatpush.bf16.msra.mxu0 %v2336
      %2689 = vmatpush.bf16.msra.mxu0 %v2335
      %2690 = vmatpush.bf16.msra.mxu0 %v2334
      %2691 = vmatmul.bf16.gmra.mxu0 %v1596
      %v2692 = vpop.f32.mrf.mxu0
      %v2693 = vadd.f32 %v2644, %v2692
      %v2694 = vpop.f32.mrf.mxu0
      %v2695 = vadd.f32 %v2646, %v2694
      %2696 = vmatmul.bf16.gmra.mxu0 %v1599
      %v2697 = vpop.f32.mrf.mxu0
      %v2698 = vadd.f32 %v2649, %v2697
      %v2699 = vpop.f32.mrf.mxu0
      %v2700 = vadd.f32 %v2651, %v2699
      %2701 = vmatmul.bf16.gmra.mxu0 %v1602
      %v2702 = vpop.f32.mrf.mxu0
      %v2703 = vadd.f32 %v2654, %v2702
      %v2704 = vpop.f32.mrf.mxu0
      %v2705 = vadd.f32 %v2656, %v2704
      %2706 = vmatmul.bf16.gmra.mxu0 %v1605
      %v2707 = vpop.f32.mrf.mxu0
      %v2708 = vadd.f32 %v2659, %v2707
      %v2709 = vpop.f32.mrf.mxu0
      %v2710 = vadd.f32 %v2661, %v2709
      %2711 = vmatmul.bf16.gmra.mxu0 %v1608
      %v2712 = vpop.f32.mrf.mxu0
      %v2713 = vadd.f32 %v2664, %v2712
      %v2714 = vpop.f32.mrf.mxu0
      %v2715 = vadd.f32 %v2666, %v2714
      %2716 = vmatmul.bf16.gmra.mxu0 %v1611
      %v2717 = vpop.f32.mrf.mxu0
      %v2718 = vadd.f32 %v2669, %v2717
      %v2719 = vpop.f32.mrf.mxu0
      %v2720 = vadd.f32 %v2671, %v2719
      %2721 = vmatmul.bf16.gmra.mxu0 %v1614
      %v2722 = vpop.f32.mrf.mxu0
      %v2723 = vadd.f32 %v2674, %v2722
      %v2724 = vpop.f32.mrf.mxu0
      %v2725 = vadd.f32 %v2676, %v2724
      %2726 = vmatmul.bf16.gmra.mxu0 %v1617
      %v2727 = vpop.f32.mrf.mxu0
      %v2728 = vadd.f32 %v2679, %v2727
      %v2729 = vpop.f32.mrf.mxu0
      %v2730 = vadd.f32 %v2681, %v2729
      %2731 = vdwg.mxu0
      %2732 = vmatpush.bf16.msra.mxu0 %v2349
      %2733 = vmatpush.bf16.msra.mxu0 %v2348
      %2734 = vmatpush.bf16.msra.mxu0 %v2347
      %2735 = vmatpush.bf16.msra.mxu0 %v2346
      %2736 = vmatpush.bf16.msra.mxu0 %v2345
      %2737 = vmatpush.bf16.msra.mxu0 %v2344
      %2738 = vmatpush.bf16.msra.mxu0 %v2343
      %2739 = vmatpush.bf16.msra.mxu0 %v2342
      %2740 = vmatmul.bf16.gmra.mxu0 %v1658
      %v2741 = vpop.f32.mrf.mxu0
      %v2742 = vadd.f32 %v2693, %v2741
      %v2743 = vpop.f32.mrf.mxu0
      %v2744 = vadd.f32 %v2695, %v2743
      %2745 = vmatmul.bf16.gmra.mxu0 %v1659
      %v2746 = vpop.f32.mrf.mxu0
      %v2747 = vadd.f32 %v2698, %v2746
      %v2748 = vpop.f32.mrf.mxu0
      %v2749 = vadd.f32 %v2700, %v2748
      %2750 = vmatmul.bf16.gmra.mxu0 %v1660
      %v2751 = vpop.f32.mrf.mxu0
      %v2752 = vadd.f32 %v2703, %v2751
      %v2753 = vpop.f32.mrf.mxu0
      %v2754 = vadd.f32 %v2705, %v2753
      %2755 = vmatmul.bf16.gmra.mxu0 %v1661
      %v2756 = vpop.f32.mrf.mxu0
      %v2757 = vadd.f32 %v2708, %v2756
      %v2758 = vpop.f32.mrf.mxu0
      %v2759 = vadd.f32 %v2710, %v2758
      %2760 = vmatmul.bf16.gmra.mxu0 %v1662
      %v2761 = vpop.f32.mrf.mxu0
      %v2762 = vadd.f32 %v2713, %v2761
      %v2763 = vpop.f32.mrf.mxu0
      %v2764 = vadd.f32 %v2715, %v2763
      %2765 = vmatmul.bf16.gmra.mxu0 %v1663
      %v2766 = vpop.f32.mrf.mxu0
      %v2767 = vadd.f32 %v2718, %v2766
      %v2768 = vpop.f32.mrf.mxu0
      %v2769 = vadd.f32 %v2720, %v2768
      %2770 = vmatmul.bf16.gmra.mxu0 %v1664
      %v2771 = vpop.f32.mrf.mxu0
      %v2772 = vadd.f32 %v2723, %v2771
      %v2773 = vpop.f32.mrf.mxu0
      %v2774 = vadd.f32 %v2725, %v2773
      %2775 = vmatmul.bf16.gmra.mxu0 %v1665
      %v2776 = vpop.f32.mrf.mxu0
      %v2777 = vadd.f32 %v2728, %v2776
      %v2778 = vpop.f32.mrf.mxu0
      %v2779 = vadd.f32 %v2730, %v2778
      %2780 = vdwg.mxu0
      %2781 = vmatpush.bf16.msra.mxu0 %v2357
      %2782 = vmatpush.bf16.msra.mxu0 %v2356
      %2783 = vmatpush.bf16.msra.mxu0 %v2355
      %2784 = vmatpush.bf16.msra.mxu0 %v2354
      %2785 = vmatpush.bf16.msra.mxu0 %v2353
      %2786 = vmatpush.bf16.msra.mxu0 %v2352
      %2787 = vmatpush.bf16.msra.mxu0 %v2351
      %2788 = vmatpush.bf16.msra.mxu0 %v2350
      %2789 = vmatmul.bf16.gmra.mxu0 %v1709
      %v2790 = vpop.f32.mrf.mxu0
      %v2791 = vadd.f32 %v2742, %v2790
      %v2792 = vpop.f32.mrf.mxu0
      %v2793 = vadd.f32 %v2744, %v2792
      %2794 = vmatmul.bf16.gmra.mxu0 %v1721
      %v2795 = vpop.f32.mrf.mxu0
      %v2796 = vadd.f32 %v2747, %v2795
      %v2797 = vpop.f32.mrf.mxu0
      %v2798 = vadd.f32 %v2749, %v2797
      %2799 = vmatmul.bf16.gmra.mxu0 %v1733
      %v2800 = vpop.f32.mrf.mxu0
      %v2801 = vadd.f32 %v2752, %v2800
      %v2802 = vpop.f32.mrf.mxu0
      %v2803 = vadd.f32 %v2754, %v2802
      %2804 = vmatmul.bf16.gmra.mxu0 %v1745
      %v2805 = vpop.f32.mrf.mxu0
      %v2806 = vadd.f32 %v2757, %v2805
      %v2807 = vpop.f32.mrf.mxu0
      %v2808 = vadd.f32 %v2759, %v2807
      %2809 = vmatmul.bf16.gmra.mxu0 %v1757
      %v2810 = vpop.f32.mrf.mxu0
      %v2811 = vadd.f32 %v2762, %v2810
      %v2812 = vpop.f32.mrf.mxu0
      %v2813 = vadd.f32 %v2764, %v2812
      %2814 = vmatmul.bf16.gmra.mxu0 %v1769
      %v2815 = vpop.f32.mrf.mxu0
      %v2816 = vadd.f32 %v2767, %v2815
      %v2817 = vpop.f32.mrf.mxu0
      %v2818 = vadd.f32 %v2769, %v2817
      %2819 = vmatmul.bf16.gmra.mxu0 %v1781
      %v2820 = vpop.f32.mrf.mxu0
      %v2821 = vadd.f32 %v2772, %v2820
      %v2822 = vpop.f32.mrf.mxu0
      %v2823 = vadd.f32 %v2774, %v2822
      %2824 = vmatmul.bf16.gmra.mxu0 %v1793
      %v2825 = vpop.f32.mrf.mxu0
      %v2826 = vadd.f32 %v2777, %v2825
      %v2827 = vpop.f32.mrf.mxu0
      %v2828 = vadd.f32 %v2779, %v2827
      %2829 = vdwg.mxu0
      %2830 = vmatpush.bf16.msra.mxu0 %v2365
      %2831 = vmatpush.bf16.msra.mxu0 %v2364
      %2832 = vmatpush.bf16.msra.mxu0 %v2363
      %2833 = vmatpush.bf16.msra.mxu0 %v2362
      %2834 = vmatpush.bf16.msra.mxu0 %v2361
      %2835 = vmatpush.bf16.msra.mxu0 %v2360
      %2836 = vmatpush.bf16.msra.mxu0 %v2359
      %2837 = vmatpush.bf16.msra.mxu0 %v2358
      %2838 = vmatmul.bf16.gmra.mxu0 %v1828
      %v2839 = vpop.f32.mrf.mxu0
      %v2840 = vadd.f32 %v2791, %v2839
      %v2841 = vpop.f32.mrf.mxu0
      %v2842 = vadd.f32 %v2793, %v2841
      %2843 = vmatmul.bf16.gmra.mxu0 %v1831
      %v2844 = vpop.f32.mrf.mxu0
      %v2845 = vadd.f32 %v2796, %v2844
      %v2846 = vpop.f32.mrf.mxu0
      %v2847 = vadd.f32 %v2798, %v2846
      %2848 = vmatmul.bf16.gmra.mxu0 %v1834
      %v2849 = vpop.f32.mrf.mxu0
      %v2850 = vadd.f32 %v2801, %v2849
      %v2851 = vpop.f32.mrf.mxu0
      %v2852 = vadd.f32 %v2803, %v2851
      %2853 = vmatmul.bf16.gmra.mxu0 %v1837
      %v2854 = vpop.f32.mrf.mxu0
      %v2855 = vadd.f32 %v2806, %v2854
      %v2856 = vpop.f32.mrf.mxu0
      %v2857 = vadd.f32 %v2808, %v2856
      %2858 = vmatmul.bf16.gmra.mxu0 %v1840
      %v2859 = vpop.f32.mrf.mxu0
      %v2860 = vadd.f32 %v2811, %v2859
      %v2861 = vpop.f32.mrf.mxu0
      %v2862 = vadd.f32 %v2813, %v2861
      %2863 = vmatmul.bf16.gmra.mxu0 %v1843
      %v2864 = vpop.f32.mrf.mxu0
      %v2865 = vadd.f32 %v2816, %v2864
      %v2866 = vpop.f32.mrf.mxu0
      %v2867 = vadd.f32 %v2818, %v2866
      %2868 = vmatmul.bf16.gmra.mxu0 %v1846
      %v2869 = vpop.f32.mrf.mxu0
      %v2870 = vadd.f32 %v2821, %v2869
      %v2871 = vpop.f32.mrf.mxu0
      %v2872 = vadd.f32 %v2823, %v2871
      %2873 = vmatmul.bf16.gmra.mxu0 %v1849
      %v2874 = vpop.f32.mrf.mxu0
      %v2875 = vadd.f32 %v2826, %v2874
      %v2876 = vpop.f32.mrf.mxu0
      %v2877 = vadd.f32 %v2828, %v2876
      %2878 = vdwg.mxu0
      %v2879 = vpack.c.bf16 %v2840, %v2840
      %v2880 = vpack.c.bf16 %v2842, %v2842
      %v2881 = vpack.c.bf16 %v2845, %v2845
      %v2882 = vpack.c.bf16 %v2847, %v2847
      %v2883 = vpack.c.bf16 %v2850, %v2850
      %v2884 = vpack.c.bf16 %v2852, %v2852
      %v2885 = vpack.c.bf16 %v2855, %v2855
      %v2886 = vpack.c.bf16 %v2857, %v2857
      %v2887 = vpack.c.bf16 %v2860, %v2860
      %v2888 = vpack.c.bf16 %v2862, %v2862
      %v2889 = vpack.c.bf16 %v2865, %v2865
      %v2890 = vpack.c.bf16 %v2867, %v2867
      %v2891 = vpack.c.bf16 %v2870, %v2870
      %v2892 = vpack.c.bf16 %v2872, %v2872
      %v2893 = vpack.c.bf16 %v2875, %v2875
      %v2894 = vpack.c.bf16 %v2877, %v2877
      %2895 = vst [vmem:[%s578] sm:$0xf] %v2879
      %2896 = vst [vmem:[%s578 + $0x4] sm:$0xf] %v2880
      %2897 = vst [vmem:[%s578 + $0x8] sm:$0xf] %v2881
      %2898 = vst [vmem:[%s578 + $0xc] sm:$0xf] %v2882
      %2899 = vst [vmem:[%s578 + $0x10] sm:$0xf] %v2883
      %2900 = vst [vmem:[%s578 + $0x14] sm:$0xf] %v2884
      %2901 = vst [vmem:[%s578 + $0x18] sm:$0xf] %v2885
      %2902 = vst [vmem:[%s578 + $0x1c] sm:$0xf] %v2886
      %2903 = vst [vmem:[%s578 + $0x20] sm:$0xf] %v2887
      %2904 = vst [vmem:[%s578 + $0x24] sm:$0xf] %v2888
      %2905 = vst [vmem:[%s578 + $0x28] sm:$0xf] %v2889
      %2906 = vst [vmem:[%s578 + $0x2c] sm:$0xf] %v2890
      %2907 = vst [vmem:[%s578 + $0x30] sm:$0xf] %v2891
      %2908 = vst [vmem:[%s578 + $0x34] sm:$0xf] %v2892
      %2909 = vst [vmem:[%s578 + $0x38] sm:$0xf] %v2893
      %2910 = vst [vmem:[%s578 + $0x3c] sm:$0xf] %v2894
      %v2911 = vadd.f32 %v2840, %v2842
      %v2912 = vadd.f32 %v2911, %v2845
      %v2913 = vadd.f32 %v2912, %v2847
      %v2914 = vadd.f32 %v2913, %v2850
      %v2915 = vadd.f32 %v2914, %v2852
      %v2916 = vadd.f32 %v2915, %v2855
      %v2917 = vadd.f32 %v2916, %v2857
      %v2918 = vadd.f32 %v2917, %v2860
      %v2919 = vadd.f32 %v2918, %v2862
      %v2920 = vadd.f32 %v2919, %v2865
      %v2921 = vadd.f32 %v2920, %v2867
      %v2922 = vadd.f32 %v2921, %v2870
      %v2923 = vadd.f32 %v2922, %v2872
      %v2924 = vadd.f32 %v2923, %v2875
      %v2925 = vadd.f32 %v2924, %v2877
      %v2926 = vrot.slane %v2925, 4
      %v2927 = vadd.f32 %v2925, %v2926
      %v2928 = vrot.slane %v2927, 2
      %v2929 = vadd.f32 %v2927, %v2928
      %v2930 = vrot.slane %v2929, 1
      %v2931 = vadd.f32 %v2929, %v2930
      %2932 = vst [vmem:[%s587] sm:$0x1] %v2931
      %v2933 = vmul.f32 %v2840, %v2840
      %v2934 = vmul.f32 %v2842, %v2842
      %v2935 = vmul.f32 %v2845, %v2845
      %v2936 = vmul.f32 %v2847, %v2847
      %v2937 = vmul.f32 %v2850, %v2850
      %v2938 = vmul.f32 %v2852, %v2852
      %v2939 = vmul.f32 %v2855, %v2855
      %v2940 = vmul.f32 %v2857, %v2857
      %v2941 = vmul.f32 %v2860, %v2860
      %v2942 = vmul.f32 %v2862, %v2862
      %v2943 = vmul.f32 %v2865, %v2865
      %v2944 = vmul.f32 %v2867, %v2867
      %v2945 = vmul.f32 %v2870, %v2870
      %v2946 = vmul.f32 %v2872, %v2872
      %v2947 = vmul.f32 %v2875, %v2875
      %v2948 = vmul.f32 %v2877, %v2877
      %v2949 = vadd.f32 %v2933, %v2934
      %v2950 = vadd.f32 %v2949, %v2935
      %v2951 = vadd.f32 %v2950, %v2936
      %v2952 = vadd.f32 %v2951, %v2937
      %v2953 = vadd.f32 %v2952, %v2938
      %v2954 = vadd.f32 %v2953, %v2939
      %v2955 = vadd.f32 %v2954, %v2940
      %v2956 = vadd.f32 %v2955, %v2941
      %v2957 = vadd.f32 %v2956, %v2942
      %v2958 = vadd.f32 %v2957, %v2943
      %v2959 = vadd.f32 %v2958, %v2944
      %v2960 = vadd.f32 %v2959, %v2945
      %v2961 = vadd.f32 %v2960, %v2946
      %v2962 = vadd.f32 %v2961, %v2947
      %v2963 = vadd.f32 %v2962, %v2948
      %v2964 = vrot.slane %v2963, 4
      %v2965 = vadd.f32 %v2963, %v2964
      %v2966 = vrot.slane %v2965, 2
      %v2967 = vadd.f32 %v2965, %v2966
      %v2968 = vrot.slane %v2967, 1
      %v2969 = vadd.f32 %v2967, %v2968
      %2970 = vst [vmem:[%s597] sm:$0x1] %v2969
      %s2971 = smul.u32 8, %s27
      %p2972 = scmp.lt.s32.totalorder %s26, 1
      %s2973 = scalar_select %p2972, %s26, 1
      %p2974 = scmp.lt.s32.totalorder %s2971, 15
      %s2975 = scalar_select %p2974, %s2971, 15
      %p2976 = scmp.lt.s32.totalorder %s28, 0
      %s2977 = scalar_select %p2976, %s28, 0
      %s2978 = smul.addr %s2975, 2
      %s2979 = sadd.s32 %s2977, %s2978
      %s2980 = smul.addr %s2973, 32
      %s2981 = sadd.s32 %s2979, %s2980
      %s2982 = smul.addr %s2981, 4
      %s2983 = scalar_lea.vmem %s7, %s2982
      %s2984 = smul.u32 %s26, 2
      %s2985 = sadd.s32 %s2984, %s27
      %p2986 = scmp.lt.s32.totalorder %s2985, 3
      %s2987 = scalar_select %p2986, %s2985, 3
      %p2988 = scmp.lt.s32.totalorder %s28, 0
      %s2989 = scalar_select %p2988, %s28, 0
      %s2990 = sadd.s32 %s2989, %s2987
      %s2991 = scalar_lea.vmem %s8, %s2990
      %s2992 = smul.u32 %s26, 2
      %s2993 = sadd.s32 %s2992, %s27
      %p2994 = scmp.lt.s32.totalorder %s2993, 3
      %s2995 = scalar_select %p2994, %s2993, 3
      %p2996 = scmp.lt.s32.totalorder %s28, 0
      %s2997 = scalar_select %p2996, %s28, 0
      %s2998 = sadd.s32 %s2997, %s2995
      %s2999 = scalar_lea.vmem %s9, %s2998
      // Predicated region
      $region57: #{conv_block.4} parent=47 // pred_check
        %p3000 = pneg %p256
      $region58: #{conv_block.4} parent=47 // pred_check_branch
        %3002 = sbr.rel (%p3000) target = $region60
      $region59: #{conv_block.4} parent=47 // pred_region
        %s3003 = smul.u32 8, %s27
      $region60: #{conv_block.4} parent=47 // pred_fallthru
        _
      // Predicated region
      $region61: #{conv_block.4} parent=47 // pred_check
        %p3004 = pneg %p288
      $region62: #{conv_block.4} parent=47 // pred_check_branch
        %3006 = sbr.rel (%p3004) target = $region64
      $region63: #{conv_block.4} parent=47 // pred_region
        %s3007 = smul.u32 %s26, 2
        %s3008 = sadd.s32 %s3007, %s27
      $region64: #{conv_block.4} parent=47 // pred_fallthru
        _
      // Predicated region
      $region65: #{conv_block.4} parent=47 // pred_check
        %p3009 = pneg %p320
      $region66: #{conv_block.4} parent=47 // pred_check_branch
        %3011 = sbr.rel (%p3009) target = $region68
      $region67: #{conv_block.4} parent=47 // pred_region
        %s3012 = smul.u32 %s26, 2
        %s3013 = sadd.s32 %s3012, %s27
      $region68: #{conv_block.4} parent=47 // pred_fallthru
        _
    $region48: #{conv_block.4} parent=5 // pred_fallthru
      _
    %p3014 = scmp.le.s32.totalorder 2, %s16
    // Predicated region
    $region69: #{conv_block.4} parent=5 // pred_check
      %p3015 = pneg %p3014
    $region70: #{conv_block.4} parent=5 // pred_check_branch
      %3017 = sbr.rel (%p3015) target = $region72
    $region71: #{conv_block.4} parent=5 // pred_region
      %s3018 = ssub.s32 %s16, 2
      // Predicated region
      $region73: #{conv_block.4} parent=71 // pred_check
        %p3019 = pneg %p262
      $region74: #{conv_block.4} parent=71 // pred_check_branch
        %3021 = sbr.rel (%p3019) target = $region76
      $region75: #{conv_block.4} parent=71 // pred_region
        %s3022 = smul.u32 8, %s30
        %p3023 = scmp.lt.s32.totalorder %s29, 1
        %s3024 = scalar_select %p3023, %s29, 1
        %p3025 = scmp.lt.s32.totalorder %s3022, 15
        %s3026 = scalar_select %p3025, %s3022, 15
        %p3027 = scmp.lt.s32.totalorder %s31, 0
        %s3028 = scalar_select %p3027, %s31, 0
        %s3029 = smul.addr %s3026, 2
        %s3030 = sadd.s32 %s3028, %s3029
        %s3031 = smul.addr %s3024, 32
        %s3032 = sadd.s32 %s3030, %s3031
        %s3033 = smul.addr %s3032, 4
        %s3034 = scalar_lea.vmem %s7, %s3033
      $region76: #{conv_block.4} parent=71 // pred_fallthru
        _
      // Predicated region
      $region77: #{conv_block.4} parent=71 // pred_check
        %p3035 = pneg %p294
      $region78: #{conv_block.4} parent=71 // pred_check_branch
        %3037 = sbr.rel (%p3035) target = $region80
      $region79: #{conv_block.4} parent=71 // pred_region
        %s3038 = smul.u32 %s29, 2
        %s3039 = sadd.s32 %s3038, %s30
        %p3040 = scmp.lt.s32.totalorder %s3039, 3
        %s3041 = scalar_select %p3040, %s3039, 3
        %p3042 = scmp.lt.s32.totalorder %s31, 0
        %s3043 = scalar_select %p3042, %s31, 0
        %s3044 = sadd.s32 %s3043, %s3041
        %s3045 = scalar_lea.vmem %s8, %s3044
      $region80: #{conv_block.4} parent=71 // pred_fallthru
        _
      // Predicated region
      $region81: #{conv_block.4} parent=71 // pred_check
        %p3046 = pneg %p326
      $region82: #{conv_block.4} parent=71 // pred_check_branch
        %3048 = sbr.rel (%p3046) target = $region84
      $region83: #{conv_block.4} parent=71 // pred_region
        %s3049 = smul.u32 %s29, 2
        %s3050 = sadd.s32 %s3049, %s30
        %p3051 = scmp.lt.s32.totalorder %s3050, 3
        %s3052 = scalar_select %p3051, %s3050, 3
        %p3053 = scmp.lt.s32.totalorder %s31, 0
        %s3054 = scalar_select %p3053, %s31, 0
        %s3055 = sadd.s32 %s3054, %s3052
        %s3056 = scalar_lea.vmem %s9, %s3055
      $region84: #{conv_block.4} parent=71 // pred_fallthru
        _
    $region72: #{conv_block.4} parent=5 // pred_fallthru
      _
  $region6: #{conv_block.4} parent=0 // loop_footer
    %s20 = sadd.s32 1, %s16
  $region7: #{conv_block.4} parent=0 // loop_footer_branch
    %15 = sbr.rel target = $region3
  $region8: #{conv_block.4} parent=0 // loop_exit
    _

</llo_original>
